<compile_context>
chip_gen: v6e
topology: v6e:2x2x1
jax: 0.10.0
libtpu: 0.0.40
codegen_flags: <defaults>
</compile_context>

<pallas_src>
import jax
import jax.numpy as jnp
from jax.experimental import pallas as pl
from jax.experimental.pallas import tpu as pltpu

B = 8        # graphs per batch (grid axis)
N = 32       # nodes per graph
F_IN = 32    # in_features
F_OUT = 32   # out_features (residual h + x requires F_OUT == F_IN)


def _sigmoid(z):
    # Plain logistic; used identically in kernel and reference.
    return 1.0 / (1.0 + jnp.exp(-z))


def gatedgcn_kernel(x_ref, adj_ref, w_ref, b_ref, out_ref):
    x = x_ref[0]            # [N, F_IN]
    adj = adj_ref[0]        # [N, N]   adj[i, j] = 1.0 iff edge j -> i
    w = w_ref[...]          # [F_IN, 4*F_OUT] = [Wk | Wq | Wv | Wskip]
    b = b_ref[...]          # [1, 4*F_OUT]    = [bk | bq | bv | b_out]

    # One fused, lane-dense (last dim = 128) MXU matmul for all four projections,
    # with all linear biases folded in.
    xp = jnp.dot(x, w, preferred_element_type=jnp.float32) + b   # [N, 4*F_OUT]
    k    = xp[:, 0 * F_OUT:1 * F_OUT]   # gate term of destination node i
    q    = xp[:, 1 * F_OUT:2 * F_OUT]   # gate term of source node j
    v    = xp[:, 2 * F_OUT:3 * F_OUT]   # message value of source node j
    skip = xp[:, 3 * F_OUT:4 * F_OUT]   # root/skip term (already contains b_out)

    # Gated aggregation over source nodes j (statically unrolled; all ops are
    # 2-D [N, F] tiles — broadcast patterns known to lower cleanly on Mosaic):
    #   acc[i, :] += adj[i, j] * sigmoid(k[i, :] + q[j, :]) * v[j, :]
    acc = skip
    for j in range(N):
        gate = _sigmoid(k + q[j:j + 1, :])                     # [N, F_OUT]
        acc = acc + adj[:, j:j + 1] * (gate * v[j:j + 1, :])   # mask + message

    h = jnp.maximum(acc, 0.0)   # activation = ReLU (batchnorm = Identity, batch_norm=False)
    h = h + x                   # residual
    # TODO(synk): dropout is identity in eval mode (p treated as 0.0).
    out_ref[0] = h


def gatedgcn_layer(x, adj, w_cat, b_cat):
    return pl.pallas_call(
        gatedgcn_kernel,
        out_shape=jax.ShapeDtypeStruct((B, N, F_OUT), jnp.float32),
        grid=(B,),
        in_specs=[
            pl.BlockSpec((1, N, F_IN), lambda g: (g, 0, 0)),          # per-graph features
            pl.BlockSpec((1, N, N), lambda g: (g, 0, 0)),             # per-graph adjacency
            pl.BlockSpec((F_IN, 4 * F_OUT), lambda g: (0, 0)),        # fused weights (resident)
            pl.BlockSpec((1, 4 * F_OUT), lambda g: (0, 0)),           # fused biases  (resident)
        ],
        out_specs=pl.BlockSpec((1, N, F_OUT), lambda g: (g, 0, 0)),
        compiler_params=pltpu.CompilerParams(dimension_semantics=("parallel",)),
    )(x, adj, w_cat, b_cat)


def reference(x, adj, Wk, Wq, Wv, Ws, bk, bq, bv, bo):
    """Pure-JAX ResGatedGraphConv + ReLU + residual, for verification."""
    k = x @ Wk + bk                 # [B, N, F]
    q = x @ Wq + bq
    v = x @ Wv + bv
    skip = x @ Ws
    gate = _sigmoid(k[:, :, None, :] + q[:, None, :, :])          # [B, Ni, Nj, F]
    agg = jnp.sum(adj[:, :, :, None] * gate * v[:, None, :, :], axis=2)
    h = agg + skip + bo
    h = jnp.maximum(h, 0.0)
    return h + x


if __name__ == "__main__":
    key = jax.random.PRNGKey(0)
    ks = jax.random.split(key, 11)

    # Node features for B independent graphs.
    x = jax.random.normal(ks[0], (B, N, F_IN), dtype=jnp.float32)

    # ResGatedGraphConv parameters (lin_key / lin_query / lin_value with bias,
    # lin_skip without bias, plus the conv output bias).
    Wk = jax.random.normal(ks[1], (F_IN, F_OUT), dtype=jnp.float32) * 0.1
    Wq = jax.random.normal(ks[2], (F_IN, F_OUT), dtype=jnp.float32) * 0.1
    Wv = jax.random.normal(ks[3], (F_IN, F_OUT), dtype=jnp.float32) * 0.1
    Ws = jax.random.normal(ks[4], (F_IN, F_OUT), dtype=jnp.float32) * 0.1
    bk = jax.random.normal(ks[5], (F_OUT,), dtype=jnp.float32) * 0.1
    bq = jax.random.normal(ks[6], (F_OUT,), dtype=jnp.float32) * 0.1
    bv = jax.random.normal(ks[7], (F_OUT,), dtype=jnp.float32) * 0.1
    bo = jax.random.normal(ks[8], (F_OUT,), dtype=jnp.float32) * 0.1

    # Random sparse graphs -> dense adjacency masks adj[b, dst, src].
    E = 96
    src = jax.random.randint(ks[9], (B, E), 0, N)
    dst = jax.random.randint(ks[10], (B, E), 0, N)
    adj = jnp.zeros((B, N, N), dtype=jnp.float32)
    bidx = jnp.repeat(jnp.arange(B), E)
    adj = adj.at[bidx, dst.reshape(-1), src.reshape(-1)].set(1.0)

    # Fused parameter layout for the lane-dense projection matmul.
    w_cat = jnp.concatenate([Wk, Wq, Wv, Ws], axis=1)                  # [32, 128]
    b_cat = jnp.concatenate([bk, bq, bv, bo]).reshape(1, 4 * F_OUT)    # [1, 128]

    out = gatedgcn_layer(x, adj, w_cat, b_cat)
    out = jax.block_until_ready(out)

    ref = reference(x, adj, Wk, Wq, Wv, Ws, bk, bq, bv, bo)
    assert out.shape == (B, N, F_OUT)
    assert jnp.allclose(out, ref, atol=1e-4, rtol=1e-4), float(jnp.max(jnp.abs(out - ref)))

    print("KERNEL_OK")
</pallas_src>

<mosaic_0001>
module attributes {stable_mosaic.version = 11 : i64} {
  func.func @gatedgcn_kernel(%arg0: i32, %arg1: memref<1x32x32xf32, #tpu.memory_space<vmem>>, %arg2: memref<1x32x32xf32, #tpu.memory_space<vmem>>, %arg3: memref<32x128xf32, #tpu.memory_space<vmem>>, %arg4: memref<1x128xf32, #tpu.memory_space<vmem>>, %arg5: memref<1x32x32xf32, #tpu.memory_space<vmem>>) attributes {dimension_semantics = [#tpu.dimension_semantics<parallel>], iteration_bounds = array<i64: 8>, scalar_prefetch = 0 : i64, scratch_operands = 0 : i64, tpu.core_type = #tpu.core_type<tc>, window_params = [{transform_indices = @transform_0, window_bounds = array<i64: 1, 32, 32>}, {transform_indices = @transform_1, window_bounds = array<i64: 1, 32, 32>}, {pipeline_mode = #tpu.pipeline_mode<synchronous>, transform_indices = @transform_2, window_bounds = array<i64: 32, 128>}, {pipeline_mode = #tpu.pipeline_mode<synchronous>, transform_indices = @transform_3, window_bounds = array<i64: 1, 128>}, {transform_indices = @transform_4, window_bounds = array<i64: 1, 32, 32>}]} {
    %c0 = arith.constant 0 : index
    %c0_0 = arith.constant 0 : index
    %c0_1 = arith.constant 0 : index
    %0 = vector.load %arg1[%c0, %c0_0, %c0_1] : memref<1x32x32xf32, #tpu.memory_space<vmem>>, vector<1x32x32xf32>
    %1 = vector.shape_cast %0 : vector<1x32x32xf32> to vector<32x32xf32>
    %c0_2 = arith.constant 0 : index
    %c0_3 = arith.constant 0 : index
    %c0_4 = arith.constant 0 : index
    %2 = vector.load %arg2[%c0_2, %c0_3, %c0_4] : memref<1x32x32xf32, #tpu.memory_space<vmem>>, vector<1x32x32xf32>
    %3 = vector.shape_cast %2 : vector<1x32x32xf32> to vector<32x32xf32>
    %c0_5 = arith.constant 0 : index
    %c0_6 = arith.constant 0 : index
    %4 = vector.load %arg3[%c0_5, %c0_6] : memref<32x128xf32, #tpu.memory_space<vmem>>, vector<32x128xf32>
    %c0_7 = arith.constant 0 : index
    %c0_8 = arith.constant 0 : index
    %5 = vector.load %arg4[%c0_7, %c0_8] : memref<1x128xf32, #tpu.memory_space<vmem>>, vector<1x128xf32>
    %cst = arith.constant dense<0.000000e+00> : vector<32x128xf32>
    %6 = tpu.matmul %1, %4, %cst {dimension_numbers = #tpu.dot_dimension_numbers<[1], [0], [0], [1], [0, 0, 1, 1], [], []>} : vector<32x32xf32>, vector<32x128xf32>, vector<32x128xf32> -> vector<32x128xf32>
    %7 = vector.broadcast %5 : vector<1x128xf32> to vector<32x128xf32>
    %8 = arith.addf %6, %7 : vector<32x128xf32>
    %9 = vector.extract_strided_slice %8 {offsets = [0, 0], sizes = [32, 32], strides = [1, 1]} : vector<32x128xf32> to vector<32x32xf32>
    %10 = vector.extract_strided_slice %8 {offsets = [0, 32], sizes = [32, 32], strides = [1, 1]} : vector<32x128xf32> to vector<32x32xf32>
    %11 = vector.extract_strided_slice %8 {offsets = [0, 64], sizes = [32, 32], strides = [1, 1]} : vector<32x128xf32> to vector<32x32xf32>
    %12 = vector.extract_strided_slice %8 {offsets = [0, 96], sizes = [32, 32], strides = [1, 1]} : vector<32x128xf32> to vector<32x32xf32>
    %13 = vector.extract_strided_slice %10 {offsets = [0, 0], sizes = [1, 32], strides = [1, 1]} : vector<32x32xf32> to vector<1x32xf32>
    %14 = vector.broadcast %13 : vector<1x32xf32> to vector<32x32xf32>
    %15 = arith.addf %9, %14 : vector<32x32xf32>
    %cst_9 = arith.constant 0.000000e+00 : f32
    %16 = vector.broadcast %cst_9 : f32 to vector<32x32xf32>
    %17 = arith.subf %16, %15 : vector<32x32xf32>
    %18 = math.exp %17 : vector<32x32xf32>
    %cst_10 = arith.constant 1.000000e+00 : f32
    %19 = vector.broadcast %cst_10 : f32 to vector<32x32xf32>
    %20 = arith.addf %19, %18 : vector<32x32xf32>
    %cst_11 = arith.constant 1.000000e+00 : f32
    %21 = vector.broadcast %cst_11 : f32 to vector<32x32xf32>
    %22 = arith.divf %21, %20 : vector<32x32xf32>
    %23 = vector.extract_strided_slice %3 {offsets = [0, 0], sizes = [32, 1], strides = [1, 1]} : vector<32x32xf32> to vector<32x1xf32>
    %24 = vector.extract_strided_slice %11 {offsets = [0, 0], sizes = [1, 32], strides = [1, 1]} : vector<32x32xf32> to vector<1x32xf32>
    %25 = vector.broadcast %24 : vector<1x32xf32> to vector<32x32xf32>
    %26 = arith.mulf %22, %25 : vector<32x32xf32>
    %27 = vector.broadcast %23 : vector<32x1xf32> to vector<32x32xf32>
    %28 = arith.mulf %27, %26 : vector<32x32xf32>
    %29 = arith.addf %12, %28 : vector<32x32xf32>
    %30 = vector.extract_strided_slice %10 {offsets = [1, 0], sizes = [1, 32], strides = [1, 1]} : vector<32x32xf32> to vector<1x32xf32>
    %31 = vector.broadcast %30 : vector<1x32xf32> to vector<32x32xf32>
    %32 = arith.addf %9, %31 : vector<32x32xf32>
    %cst_12 = arith.constant 0.000000e+00 : f32
    %33 = vector.broadcast %cst_12 : f32 to vector<32x32xf32>
    %34 = arith.subf %33, %32 : vector<32x32xf32>
    %35 = math.exp %34 : vector<32x32xf32>
    %cst_13 = arith.constant 1.000000e+00 : f32
    %36 = vector.broadcast %cst_13 : f32 to vector<32x32xf32>
    %37 = arith.addf %36, %35 : vector<32x32xf32>
    %cst_14 = arith.constant 1.000000e+00 : f32
    %38 = vector.broadcast %cst_14 : f32 to vector<32x32xf32>
    %39 = arith.divf %38, %37 : vector<32x32xf32>
    %40 = vector.extract_strided_slice %3 {offsets = [0, 1], sizes = [32, 1], strides = [1, 1]} : vector<32x32xf32> to vector<32x1xf32>
    %41 = vector.extract_strided_slice %11 {offsets = [1, 0], sizes = [1, 32], strides = [1, 1]} : vector<32x32xf32> to vector<1x32xf32>
    %42 = vector.broadcast %41 : vector<1x32xf32> to vector<32x32xf32>
    %43 = arith.mulf %39, %42 : vector<32x32xf32>
    %44 = vector.broadcast %40 : vector<32x1xf32> to vector<32x32xf32>
    %45 = arith.mulf %44, %43 : vector<32x32xf32>
    %46 = arith.addf %29, %45 : vector<32x32xf32>
    %47 = vector.extract_strided_slice %10 {offsets = [2, 0], sizes = [1, 32], strides = [1, 1]} : vector<32x32xf32> to vector<1x32xf32>
    %48 = vector.broadcast %47 : vector<1x32xf32> to vector<32x32xf32>
    %49 = arith.addf %9, %48 : vector<32x32xf32>
    %cst_15 = arith.constant 0.000000e+00 : f32
    %50 = vector.broadcast %cst_15 : f32 to vector<32x32xf32>
    %51 = arith.subf %50, %49 : vector<32x32xf32>
    %52 = math.exp %51 : vector<32x32xf32>
    %cst_16 = arith.constant 1.000000e+00 : f32
    %53 = vector.broadcast %cst_16 : f32 to vector<32x32xf32>
    %54 = arith.addf %53, %52 : vector<32x32xf32>
    %cst_17 = arith.constant 1.000000e+00 : f32
    %55 = vector.broadcast %cst_17 : f32 to vector<32x32xf32>
    %56 = arith.divf %55, %54 : vector<32x32xf32>
    %57 = vector.extract_strided_slice %3 {offsets = [0, 2], sizes = [32, 1], strides = [1, 1]} : vector<32x32xf32> to vector<32x1xf32>
    %58 = vector.extract_strided_slice %11 {offsets = [2, 0], sizes = [1, 32], strides = [1, 1]} : vector<32x32xf32> to vector<1x32xf32>
    %59 = vector.broadcast %58 : vector<1x32xf32> to vector<32x32xf32>
    %60 = arith.mulf %56, %59 : vector<32x32xf32>
    %61 = vector.broadcast %57 : vector<32x1xf32> to vector<32x32xf32>
    %62 = arith.mulf %61, %60 : vector<32x32xf32>
    %63 = arith.addf %46, %62 : vector<32x32xf32>
    %64 = vector.extract_strided_slice %10 {offsets = [3, 0], sizes = [1, 32], strides = [1, 1]} : vector<32x32xf32> to vector<1x32xf32>
    %65 = vector.broadcast %64 : vector<1x32xf32> to vector<32x32xf32>
    %66 = arith.addf %9, %65 : vector<32x32xf32>
    %cst_18 = arith.constant 0.000000e+00 : f32
    %67 = vector.broadcast %cst_18 : f32 to vector<32x32xf32>
    %68 = arith.subf %67, %66 : vector<32x32xf32>
    %69 = math.exp %68 : vector<32x32xf32>
    %cst_19 = arith.constant 1.000000e+00 : f32
    %70 = vector.broadcast %cst_19 : f32 to vector<32x32xf32>
    %71 = arith.addf %70, %69 : vector<32x32xf32>
    %cst_20 = arith.constant 1.000000e+00 : f32
    %72 = vector.broadcast %cst_20 : f32 to vector<32x32xf32>
    %73 = arith.divf %72, %71 : vector<32x32xf32>
    %74 = vector.extract_strided_slice %3 {offsets = [0, 3], sizes = [32, 1], strides = [1, 1]} : vector<32x32xf32> to vector<32x1xf32>
    %75 = vector.extract_strided_slice %11 {offsets = [3, 0], sizes = [1, 32], strides = [1, 1]} : vector<32x32xf32> to vector<1x32xf32>
    %76 = vector.broadcast %75 : vector<1x32xf32> to vector<32x32xf32>
    %77 = arith.mulf %73, %76 : vector<32x32xf32>
    %78 = vector.broadcast %74 : vector<32x1xf32> to vector<32x32xf32>
    %79 = arith.mulf %78, %77 : vector<32x32xf32>
    %80 = arith.addf %63, %79 : vector<32x32xf32>
    %81 = vector.extract_strided_slice %10 {offsets = [4, 0], sizes = [1, 32], strides = [1, 1]} : vector<32x32xf32> to vector<1x32xf32>
    %82 = vector.broadcast %81 : vector<1x32xf32> to vector<32x32xf32>
    %83 = arith.addf %9, %82 : vector<32x32xf32>
    %cst_21 = arith.constant 0.000000e+00 : f32
    %84 = vector.broadcast %cst_21 : f32 to vector<32x32xf32>
    %85 = arith.subf %84, %83 : vector<32x32xf32>
    %86 = math.exp %85 : vector<32x32xf32>
    %cst_22 = arith.constant 1.000000e+00 : f32
    %87 = vector.broadcast %cst_22 : f32 to vector<32x32xf32>
    %88 = arith.addf %87, %86 : vector<32x32xf32>
    %cst_23 = arith.constant 1.000000e+00 : f32
    %89 = vector.broadcast %cst_23 : f32 to vector<32x32xf32>
    %90 = arith.divf %89, %88 : vector<32x32xf32>
    %91 = vector.extract_strided_slice %3 {offsets = [0, 4], sizes = [32, 1], strides = [1, 1]} : vector<32x32xf32> to vector<32x1xf32>
    %92 = vector.extract_strided_slice %11 {offsets = [4, 0], sizes = [1, 32], strides = [1, 1]} : vector<32x32xf32> to vector<1x32xf32>
    %93 = vector.broadcast %92 : vector<1x32xf32> to vector<32x32xf32>
    %94 = arith.mulf %90, %93 : vector<32x32xf32>
    %95 = vector.broadcast %91 : vector<32x1xf32> to vector<32x32xf32>
    %96 = arith.mulf %95, %94 : vector<32x32xf32>
    %97 = arith.addf %80, %96 : vector<32x32xf32>
    %98 = vector.extract_strided_slice %10 {offsets = [5, 0], sizes = [1, 32], strides = [1, 1]} : vector<32x32xf32> to vector<1x32xf32>
    %99 = vector.broadcast %98 : vector<1x32xf32> to vector<32x32xf32>
    %100 = arith.addf %9, %99 : vector<32x32xf32>
    %cst_24 = arith.constant 0.000000e+00 : f32
    %101 = vector.broadcast %cst_24 : f32 to vector<32x32xf32>
    %102 = arith.subf %101, %100 : vector<32x32xf32>
    %103 = math.exp %102 : vector<32x32xf32>
    %cst_25 = arith.constant 1.000000e+00 : f32
    %104 = vector.broadcast %cst_25 : f32 to vector<32x32xf32>
    %105 = arith.addf %104, %103 : vector<32x32xf32>
    %cst_26 = arith.constant 1.000000e+00 : f32
    %106 = vector.broadcast %cst_26 : f32 to vector<32x32xf32>
    %107 = arith.divf %106, %105 : vector<32x32xf32>
    %108 = vector.extract_strided_slice %3 {offsets = [0, 5], sizes = [32, 1], strides = [1, 1]} : vector<32x32xf32> to vector<32x1xf32>
    %109 = vector.extract_strided_slice %11 {offsets = [5, 0], sizes = [1, 32], strides = [1, 1]} : vector<32x32xf32> to vector<1x32xf32>
    %110 = vector.broadcast %109 : vector<1x32xf32> to vector<32x32xf32>
    %111 = arith.mulf %107, %110 : vector<32x32xf32>
    %112 = vector.broadcast %108 : vector<32x1xf32> to vector<32x32xf32>
    %113 = arith.mulf %112, %111 : vector<32x32xf32>
    %114 = arith.addf %97, %113 : vector<32x32xf32>
    %115 = vector.extract_strided_slice %10 {offsets = [6, 0], sizes = [1, 32], strides = [1, 1]} : vector<32x32xf32> to vector<1x32xf32>
    %116 = vector.broadcast %115 : vector<1x32xf32> to vector<32x32xf32>
    %117 = arith.addf %9, %116 : vector<32x32xf32>
    %cst_27 = arith.constant 0.000000e+00 : f32
    %118 = vector.broadcast %cst_27 : f32 to vector<32x32xf32>
    %119 = arith.subf %118, %117 : vector<32x32xf32>
    %120 = math.exp %119 : vector<32x32xf32>
    %cst_28 = arith.constant 1.000000e+00 : f32
    %121 = vector.broadcast %cst_28 : f32 to vector<32x32xf32>
    %122 = arith.addf %121, %120 : vector<32x32xf32>
    %cst_29 = arith.constant 1.000000e+00 : f32
    %123 = vector.broadcast %cst_29 : f32 to vector<32x32xf32>
    %124 = arith.divf %123, %122 : vector<32x32xf32>
    %125 = vector.extract_strided_slice %3 {offsets = [0, 6], sizes = [32, 1], strides = [1, 1]} : vector<32x32xf32> to vector<32x1xf32>
    %126 = vector.extract_strided_slice %11 {offsets = [6, 0], sizes = [1, 32], strides = [1, 1]} : vector<32x32xf32> to vector<1x32xf32>
    %127 = vector.broadcast %126 : vector<1x32xf32> to vector<32x32xf32>
    %128 = arith.mulf %124, %127 : vector<32x32xf32>
    %129 = vector.broadcast %125 : vector<32x1xf32> to vector<32x32xf32>
    %130 = arith.mulf %129, %128 : vector<32x32xf32>
    %131 = arith.addf %114, %130 : vector<32x32xf32>
    %132 = vector.extract_strided_slice %10 {offsets = [7, 0], sizes = [1, 32], strides = [1, 1]} : vector<32x32xf32> to vector<1x32xf32>
    %133 = vector.broadcast %132 : vector<1x32xf32> to vector<32x32xf32>
    %134 = arith.addf %9, %133 : vector<32x32xf32>
    %cst_30 = arith.constant 0.000000e+00 : f32
    %135 = vector.broadcast %cst_30 : f32 to vector<32x32xf32>
    %136 = arith.subf %135, %134 : vector<32x32xf32>
    %137 = math.exp %136 : vector<32x32xf32>
    %cst_31 = arith.constant 1.000000e+00 : f32
    %138 = vector.broadcast %cst_31 : f32 to vector<32x32xf32>
    %139 = arith.addf %138, %137 : vector<32x32xf32>
    %cst_32 = arith.constant 1.000000e+00 : f32
    %140 = vector.broadcast %cst_32 : f32 to vector<32x32xf32>
    %141 = arith.divf %140, %139 : vector<32x32xf32>
    %142 = vector.extract_strided_slice %3 {offsets = [0, 7], sizes = [32, 1], strides = [1, 1]} : vector<32x32xf32> to vector<32x1xf32>
    %143 = vector.extract_strided_slice %11 {offsets = [7, 0], sizes = [1, 32], strides = [1, 1]} : vector<32x32xf32> to vector<1x32xf32>
    %144 = vector.broadcast %143 : vector<1x32xf32> to vector<32x32xf32>
    %145 = arith.mulf %141, %144 : vector<32x32xf32>
    %146 = vector.broadcast %142 : vector<32x1xf32> to vector<32x32xf32>
    %147 = arith.mulf %146, %145 : vector<32x32xf32>
    %148 = arith.addf %131, %147 : vector<32x32xf32>
    %149 = vector.extract_strided_slice %10 {offsets = [8, 0], sizes = [1, 32], strides = [1, 1]} : vector<32x32xf32> to vector<1x32xf32>
    %150 = vector.broadcast %149 : vector<1x32xf32> to vector<32x32xf32>
    %151 = arith.addf %9, %150 : vector<32x32xf32>
    %cst_33 = arith.constant 0.000000e+00 : f32
    %152 = vector.broadcast %cst_33 : f32 to vector<32x32xf32>
    %153 = arith.subf %152, %151 : vector<32x32xf32>
    %154 = math.exp %153 : vector<32x32xf32>
    %cst_34 = arith.constant 1.000000e+00 : f32
    %155 = vector.broadcast %cst_34 : f32 to vector<32x32xf32>
    %156 = arith.addf %155, %154 : vector<32x32xf32>
    %cst_35 = arith.constant 1.000000e+00 : f32
    %157 = vector.broadcast %cst_35 : f32 to vector<32x32xf32>
    %158 = arith.divf %157, %156 : vector<32x32xf32>
    %159 = vector.extract_strided_slice %3 {offsets = [0, 8], sizes = [32, 1], strides = [1, 1]} : vector<32x32xf32> to vector<32x1xf32>
    %160 = vector.extract_strided_slice %11 {offsets = [8, 0], sizes = [1, 32], strides = [1, 1]} : vector<32x32xf32> to vector<1x32xf32>
    %161 = vector.broadcast %160 : vector<1x32xf32> to vector<32x32xf32>
    %162 = arith.mulf %158, %161 : vector<32x32xf32>
    %163 = vector.broadcast %159 : vector<32x1xf32> to vector<32x32xf32>
    %164 = arith.mulf %163, %162 : vector<32x32xf32>
    %165 = arith.addf %148, %164 : vector<32x32xf32>
    %166 = vector.extract_strided_slice %10 {offsets = [9, 0], sizes = [1, 32], strides = [1, 1]} : vector<32x32xf32> to vector<1x32xf32>
    %167 = vector.broadcast %166 : vector<1x32xf32> to vector<32x32xf32>
    %168 = arith.addf %9, %167 : vector<32x32xf32>
    %cst_36 = arith.constant 0.000000e+00 : f32
    %169 = vector.broadcast %cst_36 : f32 to vector<32x32xf32>
    %170 = arith.subf %169, %168 : vector<32x32xf32>
    %171 = math.exp %170 : vector<32x32xf32>
    %cst_37 = arith.constant 1.000000e+00 : f32
    %172 = vector.broadcast %cst_37 : f32 to vector<32x32xf32>
    %173 = arith.addf %172, %171 : vector<32x32xf32>
    %cst_38 = arith.constant 1.000000e+00 : f32
    %174 = vector.broadcast %cst_38 : f32 to vector<32x32xf32>
    %175 = arith.divf %174, %173 : vector<32x32xf32>
    %176 = vector.extract_strided_slice %3 {offsets = [0, 9], sizes = [32, 1], strides = [1, 1]} : vector<32x32xf32> to vector<32x1xf32>
    %177 = vector.extract_strided_slice %11 {offsets = [9, 0], sizes = [1, 32], strides = [1, 1]} : vector<32x32xf32> to vector<1x32xf32>
    %178 = vector.broadcast %177 : vector<1x32xf32> to vector<32x32xf32>
    %179 = arith.mulf %175, %178 : vector<32x32xf32>
    %180 = vector.broadcast %176 : vector<32x1xf32> to vector<32x32xf32>
    %181 = arith.mulf %180, %179 : vector<32x32xf32>
    %182 = arith.addf %165, %181 : vector<32x32xf32>
    %183 = vector.extract_strided_slice %10 {offsets = [10, 0], sizes = [1, 32], strides = [1, 1]} : vector<32x32xf32> to vector<1x32xf32>
    %184 = vector.broadcast %183 : vector<1x32xf32> to vector<32x32xf32>
    %185 = arith.addf %9, %184 : vector<32x32xf32>
    %cst_39 = arith.constant 0.000000e+00 : f32
    %186 = vector.broadcast %cst_39 : f32 to vector<32x32xf32>
    %187 = arith.subf %186, %185 : vector<32x32xf32>
    %188 = math.exp %187 : vector<32x32xf32>
    %cst_40 = arith.constant 1.000000e+00 : f32
    %189 = vector.broadcast %cst_40 : f32 to vector<32x32xf32>
    %190 = arith.addf %189, %188 : vector<32x32xf32>
    %cst_41 = arith.constant 1.000000e+00 : f32
    %191 = vector.broadcast %cst_41 : f32 to vector<32x32xf32>
    %192 = arith.divf %191, %190 : vector<32x32xf32>
    %193 = vector.extract_strided_slice %3 {offsets = [0, 10], sizes = [32, 1], strides = [1, 1]} : vector<32x32xf32> to vector<32x1xf32>
    %194 = vector.extract_strided_slice %11 {offsets = [10, 0], sizes = [1, 32], strides = [1, 1]} : vector<32x32xf32> to vector<1x32xf32>
    %195 = vector.broadcast %194 : vector<1x32xf32> to vector<32x32xf32>
    %196 = arith.mulf %192, %195 : vector<32x32xf32>
    %197 = vector.broadcast %193 : vector<32x1xf32> to vector<32x32xf32>
    %198 = arith.mulf %197, %196 : vector<32x32xf32>
    %199 = arith.addf %182, %198 : vector<32x32xf32>
    %200 = vector.extract_strided_slice %10 {offsets = [11, 0], sizes = [1, 32], strides = [1, 1]} : vector<32x32xf32> to vector<1x32xf32>
    %201 = vector.broadcast %200 : vector<1x32xf32> to vector<32x32xf32>
    %202 = arith.addf %9, %201 : vector<32x32xf32>
    %cst_42 = arith.constant 0.000000e+00 : f32
    %203 = vector.broadcast %cst_42 : f32 to vector<32x32xf32>
    %204 = arith.subf %203, %202 : vector<32x32xf32>
    %205 = math.exp %204 : vector<32x32xf32>
    %cst_43 = arith.constant 1.000000e+00 : f32
    %206 = vector.broadcast %cst_43 : f32 to vector<32x32xf32>
    %207 = arith.addf %206, %205 : vector<32x32xf32>
    %cst_44 = arith.constant 1.000000e+00 : f32
    %208 = vector.broadcast %cst_44 : f32 to vector<32x32xf32>
    %209 = arith.divf %208, %207 : vector<32x32xf32>
    %210 = vector.extract_strided_slice %3 {offsets = [0, 11], sizes = [32, 1], strides = [1, 1]} : vector<32x32xf32> to vector<32x1xf32>
    %211 = vector.extract_strided_slice %11 {offsets = [11, 0], sizes = [1, 32], strides = [1, 1]} : vector<32x32xf32> to vector<1x32xf32>
    %212 = vector.broadcast %211 : vector<1x32xf32> to vector<32x32xf32>
    %213 = arith.mulf %209, %212 : vector<32x32xf32>
    %214 = vector.broadcast %210 : vector<32x1xf32> to vector<32x32xf32>
    %215 = arith.mulf %214, %213 : vector<32x32xf32>
    %216 = arith.addf %199, %215 : vector<32x32xf32>
    %217 = vector.extract_strided_slice %10 {offsets = [12, 0], sizes = [1, 32], strides = [1, 1]} : vector<32x32xf32> to vector<1x32xf32>
    %218 = vector.broadcast %217 : vector<1x32xf32> to vector<32x32xf32>
    %219 = arith.addf %9, %218 : vector<32x32xf32>
    %cst_45 = arith.constant 0.000000e+00 : f32
    %220 = vector.broadcast %cst_45 : f32 to vector<32x32xf32>
    %221 = arith.subf %220, %219 : vector<32x32xf32>
    %222 = math.exp %221 : vector<32x32xf32>
    %cst_46 = arith.constant 1.000000e+00 : f32
    %223 = vector.broadcast %cst_46 : f32 to vector<32x32xf32>
    %224 = arith.addf %223, %222 : vector<32x32xf32>
    %cst_47 = arith.constant 1.000000e+00 : f32
    %225 = vector.broadcast %cst_47 : f32 to vector<32x32xf32>
    %226 = arith.divf %225, %224 : vector<32x32xf32>
    %227 = vector.extract_strided_slice %3 {offsets = [0, 12], sizes = [32, 1], strides = [1, 1]} : vector<32x32xf32> to vector<32x1xf32>
    %228 = vector.extract_strided_slice %11 {offsets = [12, 0], sizes = [1, 32], strides = [1, 1]} : vector<32x32xf32> to vector<1x32xf32>
    %229 = vector.broadcast %228 : vector<1x32xf32> to vector<32x32xf32>
    %230 = arith.mulf %226, %229 : vector<32x32xf32>
    %231 = vector.broadcast %227 : vector<32x1xf32> to vector<32x32xf32>
    %232 = arith.mulf %231, %230 : vector<32x32xf32>
    %233 = arith.addf %216, %232 : vector<32x32xf32>
    %234 = vector.extract_strided_slice %10 {offsets = [13, 0], sizes = [1, 32], strides = [1, 1]} : vector<32x32xf32> to vector<1x32xf32>
    %235 = vector.broadcast %234 : vector<1x32xf32> to vector<32x32xf32>
    %236 = arith.addf %9, %235 : vector<32x32xf32>
    %cst_48 = arith.constant 0.000000e+00 : f32
    %237 = vector.broadcast %cst_48 : f32 to vector<32x32xf32>
    %238 = arith.subf %237, %236 : vector<32x32xf32>
    %239 = math.exp %238 : vector<32x32xf32>
    %cst_49 = arith.constant 1.000000e+00 : f32
    %240 = vector.broadcast %cst_49 : f32 to vector<32x32xf32>
    %241 = arith.addf %240, %239 : vector<32x32xf32>
    %cst_50 = arith.constant 1.000000e+00 : f32
    %242 = vector.broadcast %cst_50 : f32 to vector<32x32xf32>
    %243 = arith.divf %242, %241 : vector<32x32xf32>
    %244 = vector.extract_strided_slice %3 {offsets = [0, 13], sizes = [32, 1], strides = [1, 1]} : vector<32x32xf32> to vector<32x1xf32>
    %245 = vector.extract_strided_slice %11 {offsets = [13, 0], sizes = [1, 32], strides = [1, 1]} : vector<32x32xf32> to vector<1x32xf32>
    %246 = vector.broadcast %245 : vector<1x32xf32> to vector<32x32xf32>
    %247 = arith.mulf %243, %246 : vector<32x32xf32>
    %248 = vector.broadcast %244 : vector<32x1xf32> to vector<32x32xf32>
    %249 = arith.mulf %248, %247 : vector<32x32xf32>
    %250 = arith.addf %233, %249 : vector<32x32xf32>
    %251 = vector.extract_strided_slice %10 {offsets = [14, 0], sizes = [1, 32], strides = [1, 1]} : vector<32x32xf32> to vector<1x32xf32>
    %252 = vector.broadcast %251 : vector<1x32xf32> to vector<32x32xf32>
    %253 = arith.addf %9, %252 : vector<32x32xf32>
    %cst_51 = arith.constant 0.000000e+00 : f32
    %254 = vector.broadcast %cst_51 : f32 to vector<32x32xf32>
    %255 = arith.subf %254, %253 : vector<32x32xf32>
    %256 = math.exp %255 : vector<32x32xf32>
    %cst_52 = arith.constant 1.000000e+00 : f32
    %257 = vector.broadcast %cst_52 : f32 to vector<32x32xf32>
    %258 = arith.addf %257, %256 : vector<32x32xf32>
    %cst_53 = arith.constant 1.000000e+00 : f32
    %259 = vector.broadcast %cst_53 : f32 to vector<32x32xf32>
    %260 = arith.divf %259, %258 : vector<32x32xf32>
    %261 = vector.extract_strided_slice %3 {offsets = [0, 14], sizes = [32, 1], strides = [1, 1]} : vector<32x32xf32> to vector<32x1xf32>
    %262 = vector.extract_strided_slice %11 {offsets = [14, 0], sizes = [1, 32], strides = [1, 1]} : vector<32x32xf32> to vector<1x32xf32>
    %263 = vector.broadcast %262 : vector<1x32xf32> to vector<32x32xf32>
    %264 = arith.mulf %260, %263 : vector<32x32xf32>
    %265 = vector.broadcast %261 : vector<32x1xf32> to vector<32x32xf32>
    %266 = arith.mulf %265, %264 : vector<32x32xf32>
    %267 = arith.addf %250, %266 : vector<32x32xf32>
    %268 = vector.extract_strided_slice %10 {offsets = [15, 0], sizes = [1, 32], strides = [1, 1]} : vector<32x32xf32> to vector<1x32xf32>
    %269 = vector.broadcast %268 : vector<1x32xf32> to vector<32x32xf32>
    %270 = arith.addf %9, %269 : vector<32x32xf32>
    %cst_54 = arith.constant 0.000000e+00 : f32
    %271 = vector.broadcast %cst_54 : f32 to vector<32x32xf32>
    %272 = arith.subf %271, %270 : vector<32x32xf32>
    %273 = math.exp %272 : vector<32x32xf32>
    %cst_55 = arith.constant 1.000000e+00 : f32
    %274 = vector.broadcast %cst_55 : f32 to vector<32x32xf32>
    %275 = arith.addf %274, %273 : vector<32x32xf32>
    %cst_56 = arith.constant 1.000000e+00 : f32
    %276 = vector.broadcast %cst_56 : f32 to vector<32x32xf32>
    %277 = arith.divf %276, %275 : vector<32x32xf32>
    %278 = vector.extract_strided_slice %3 {offsets = [0, 15], sizes = [32, 1], strides = [1, 1]} : vector<32x32xf32> to vector<32x1xf32>
    %279 = vector.extract_strided_slice %11 {offsets = [15, 0], sizes = [1, 32], strides = [1, 1]} : vector<32x32xf32> to vector<1x32xf32>
    %280 = vector.broadcast %279 : vector<1x32xf32> to vector<32x32xf32>
    %281 = arith.mulf %277, %280 : vector<32x32xf32>
    %282 = vector.broadcast %278 : vector<32x1xf32> to vector<32x32xf32>
    %283 = arith.mulf %282, %281 : vector<32x32xf32>
    %284 = arith.addf %267, %283 : vector<32x32xf32>
    %285 = vector.extract_strided_slice %10 {offsets = [16, 0], sizes = [1, 32], strides = [1, 1]} : vector<32x32xf32> to vector<1x32xf32>
    %286 = vector.broadcast %285 : vector<1x32xf32> to vector<32x32xf32>
    %287 = arith.addf %9, %286 : vector<32x32xf32>
    %cst_57 = arith.constant 0.000000e+00 : f32
    %288 = vector.broadcast %cst_57 : f32 to vector<32x32xf32>
    %289 = arith.subf %288, %287 : vector<32x32xf32>
    %290 = math.exp %289 : vector<32x32xf32>
    %cst_58 = arith.constant 1.000000e+00 : f32
    %291 = vector.broadcast %cst_58 : f32 to vector<32x32xf32>
    %292 = arith.addf %291, %290 : vector<32x32xf32>
    %cst_59 = arith.constant 1.000000e+00 : f32
    %293 = vector.broadcast %cst_59 : f32 to vector<32x32xf32>
    %294 = arith.divf %293, %292 : vector<32x32xf32>
    %295 = vector.extract_strided_slice %3 {offsets = [0, 16], sizes = [32, 1], strides = [1, 1]} : vector<32x32xf32> to vector<32x1xf32>
    %296 = vector.extract_strided_slice %11 {offsets = [16, 0], sizes = [1, 32], strides = [1, 1]} : vector<32x32xf32> to vector<1x32xf32>
    %297 = vector.broadcast %296 : vector<1x32xf32> to vector<32x32xf32>
    %298 = arith.mulf %294, %297 : vector<32x32xf32>
    %299 = vector.broadcast %295 : vector<32x1xf32> to vector<32x32xf32>
    %300 = arith.mulf %299, %298 : vector<32x32xf32>
    %301 = arith.addf %284, %300 : vector<32x32xf32>
    %302 = vector.extract_strided_slice %10 {offsets = [17, 0], sizes = [1, 32], strides = [1, 1]} : vector<32x32xf32> to vector<1x32xf32>
    %303 = vector.broadcast %302 : vector<1x32xf32> to vector<32x32xf32>
    %304 = arith.addf %9, %303 : vector<32x32xf32>
    %cst_60 = arith.constant 0.000000e+00 : f32
    %305 = vector.broadcast %cst_60 : f32 to vector<32x32xf32>
    %306 = arith.subf %305, %304 : vector<32x32xf32>
    %307 = math.exp %306 : vector<32x32xf32>
    %cst_61 = arith.constant 1.000000e+00 : f32
    %308 = vector.broadcast %cst_61 : f32 to vector<32x32xf32>
    %309 = arith.addf %308, %307 : vector<32x32xf32>
    %cst_62 = arith.constant 1.000000e+00 : f32
    %310 = vector.broadcast %cst_62 : f32 to vector<32x32xf32>
    %311 = arith.divf %310, %309 : vector<32x32xf32>
    %312 = vector.extract_strided_slice %3 {offsets = [0, 17], sizes = [32, 1], strides = [1, 1]} : vector<32x32xf32> to vector<32x1xf32>
    %313 = vector.extract_strided_slice %11 {offsets = [17, 0], sizes = [1, 32], strides = [1, 1]} : vector<32x32xf32> to vector<1x32xf32>
    %314 = vector.broadcast %313 : vector<1x32xf32> to vector<32x32xf32>
    %315 = arith.mulf %311, %314 : vector<32x32xf32>
    %316 = vector.broadcast %312 : vector<32x1xf32> to vector<32x32xf32>
    %317 = arith.mulf %316, %315 : vector<32x32xf32>
    %318 = arith.addf %301, %317 : vector<32x32xf32>
    %319 = vector.extract_strided_slice %10 {offsets = [18, 0], sizes = [1, 32], strides = [1, 1]} : vector<32x32xf32> to vector<1x32xf32>
    %320 = vector.broadcast %319 : vector<1x32xf32> to vector<32x32xf32>
    %321 = arith.addf %9, %320 : vector<32x32xf32>
    %cst_63 = arith.constant 0.000000e+00 : f32
    %322 = vector.broadcast %cst_63 : f32 to vector<32x32xf32>
    %323 = arith.subf %322, %321 : vector<32x32xf32>
    %324 = math.exp %323 : vector<32x32xf32>
    %cst_64 = arith.constant 1.000000e+00 : f32
    %325 = vector.broadcast %cst_64 : f32 to vector<32x32xf32>
    %326 = arith.addf %325, %324 : vector<32x32xf32>
    %cst_65 = arith.constant 1.000000e+00 : f32
    %327 = vector.broadcast %cst_65 : f32 to vector<32x32xf32>
    %328 = arith.divf %327, %326 : vector<32x32xf32>
    %329 = vector.extract_strided_slice %3 {offsets = [0, 18], sizes = [32, 1], strides = [1, 1]} : vector<32x32xf32> to vector<32x1xf32>
    %330 = vector.extract_strided_slice %11 {offsets = [18, 0], sizes = [1, 32], strides = [1, 1]} : vector<32x32xf32> to vector<1x32xf32>
    %331 = vector.broadcast %330 : vector<1x32xf32> to vector<32x32xf32>
    %332 = arith.mulf %328, %331 : vector<32x32xf32>
    %333 = vector.broadcast %329 : vector<32x1xf32> to vector<32x32xf32>
    %334 = arith.mulf %333, %332 : vector<32x32xf32>
    %335 = arith.addf %318, %334 : vector<32x32xf32>
    %336 = vector.extract_strided_slice %10 {offsets = [19, 0], sizes = [1, 32], strides = [1, 1]} : vector<32x32xf32> to vector<1x32xf32>
    %337 = vector.broadcast %336 : vector<1x32xf32> to vector<32x32xf32>
    %338 = arith.addf %9, %337 : vector<32x32xf32>
    %cst_66 = arith.constant 0.000000e+00 : f32
    %339 = vector.broadcast %cst_66 : f32 to vector<32x32xf32>
    %340 = arith.subf %339, %338 : vector<32x32xf32>
    %341 = math.exp %340 : vector<32x32xf32>
    %cst_67 = arith.constant 1.000000e+00 : f32
    %342 = vector.broadcast %cst_67 : f32 to vector<32x32xf32>
    %343 = arith.addf %342, %341 : vector<32x32xf32>
    %cst_68 = arith.constant 1.000000e+00 : f32
    %344 = vector.broadcast %cst_68 : f32 to vector<32x32xf32>
    %345 = arith.divf %344, %343 : vector<32x32xf32>
    %346 = vector.extract_strided_slice %3 {offsets = [0, 19], sizes = [32, 1], strides = [1, 1]} : vector<32x32xf32> to vector<32x1xf32>
    %347 = vector.extract_strided_slice %11 {offsets = [19, 0], sizes = [1, 32], strides = [1, 1]} : vector<32x32xf32> to vector<1x32xf32>
    %348 = vector.broadcast %347 : vector<1x32xf32> to vector<32x32xf32>
    %349 = arith.mulf %345, %348 : vector<32x32xf32>
    %350 = vector.broadcast %346 : vector<32x1xf32> to vector<32x32xf32>
    %351 = arith.mulf %350, %349 : vector<32x32xf32>
    %352 = arith.addf %335, %351 : vector<32x32xf32>
    %353 = vector.extract_strided_slice %10 {offsets = [20, 0], sizes = [1, 32], strides = [1, 1]} : vector<32x32xf32> to vector<1x32xf32>
    %354 = vector.broadcast %353 : vector<1x32xf32> to vector<32x32xf32>
    %355 = arith.addf %9, %354 : vector<32x32xf32>
    %cst_69 = arith.constant 0.000000e+00 : f32
    %356 = vector.broadcast %cst_69 : f32 to vector<32x32xf32>
    %357 = arith.subf %356, %355 : vector<32x32xf32>
    %358 = math.exp %357 : vector<32x32xf32>
    %cst_70 = arith.constant 1.000000e+00 : f32
    %359 = vector.broadcast %cst_70 : f32 to vector<32x32xf32>
    %360 = arith.addf %359, %358 : vector<32x32xf32>
    %cst_71 = arith.constant 1.000000e+00 : f32
    %361 = vector.broadcast %cst_71 : f32 to vector<32x32xf32>
    %362 = arith.divf %361, %360 : vector<32x32xf32>
    %363 = vector.extract_strided_slice %3 {offsets = [0, 20], sizes = [32, 1], strides = [1, 1]} : vector<32x32xf32> to vector<32x1xf32>
    %364 = vector.extract_strided_slice %11 {offsets = [20, 0], sizes = [1, 32], strides = [1, 1]} : vector<32x32xf32> to vector<1x32xf32>
    %365 = vector.broadcast %364 : vector<1x32xf32> to vector<32x32xf32>
    %366 = arith.mulf %362, %365 : vector<32x32xf32>
    %367 = vector.broadcast %363 : vector<32x1xf32> to vector<32x32xf32>
    %368 = arith.mulf %367, %366 : vector<32x32xf32>
    %369 = arith.addf %352, %368 : vector<32x32xf32>
    %370 = vector.extract_strided_slice %10 {offsets = [21, 0], sizes = [1, 32], strides = [1, 1]} : vector<32x32xf32> to vector<1x32xf32>
    %371 = vector.broadcast %370 : vector<1x32xf32> to vector<32x32xf32>
    %372 = arith.addf %9, %371 : vector<32x32xf32>
    %cst_72 = arith.constant 0.000000e+00 : f32
    %373 = vector.broadcast %cst_72 : f32 to vector<32x32xf32>
    %374 = arith.subf %373, %372 : vector<32x32xf32>
    %375 = math.exp %374 : vector<32x32xf32>
    %cst_73 = arith.constant 1.000000e+00 : f32
    %376 = vector.broadcast %cst_73 : f32 to vector<32x32xf32>
    %377 = arith.addf %376, %375 : vector<32x32xf32>
    %cst_74 = arith.constant 1.000000e+00 : f32
    %378 = vector.broadcast %cst_74 : f32 to vector<32x32xf32>
    %379 = arith.divf %378, %377 : vector<32x32xf32>
    %380 = vector.extract_strided_slice %3 {offsets = [0, 21], sizes = [32, 1], strides = [1, 1]} : vector<32x32xf32> to vector<32x1xf32>
    %381 = vector.extract_strided_slice %11 {offsets = [21, 0], sizes = [1, 32], strides = [1, 1]} : vector<32x32xf32> to vector<1x32xf32>
    %382 = vector.broadcast %381 : vector<1x32xf32> to vector<32x32xf32>
    %383 = arith.mulf %379, %382 : vector<32x32xf32>
    %384 = vector.broadcast %380 : vector<32x1xf32> to vector<32x32xf32>
    %385 = arith.mulf %384, %383 : vector<32x32xf32>
    %386 = arith.addf %369, %385 : vector<32x32xf32>
    %387 = vector.extract_strided_slice %10 {offsets = [22, 0], sizes = [1, 32], strides = [1, 1]} : vector<32x32xf32> to vector<1x32xf32>
    %388 = vector.broadcast %387 : vector<1x32xf32> to vector<32x32xf32>
    %389 = arith.addf %9, %388 : vector<32x32xf32>
    %cst_75 = arith.constant 0.000000e+00 : f32
    %390 = vector.broadcast %cst_75 : f32 to vector<32x32xf32>
    %391 = arith.subf %390, %389 : vector<32x32xf32>
    %392 = math.exp %391 : vector<32x32xf32>
    %cst_76 = arith.constant 1.000000e+00 : f32
    %393 = vector.broadcast %cst_76 : f32 to vector<32x32xf32>
    %394 = arith.addf %393, %392 : vector<32x32xf32>
    %cst_77 = arith.constant 1.000000e+00 : f32
    %395 = vector.broadcast %cst_77 : f32 to vector<32x32xf32>
    %396 = arith.divf %395, %394 : vector<32x32xf32>
    %397 = vector.extract_strided_slice %3 {offsets = [0, 22], sizes = [32, 1], strides = [1, 1]} : vector<32x32xf32> to vector<32x1xf32>
    %398 = vector.extract_strided_slice %11 {offsets = [22, 0], sizes = [1, 32], strides = [1, 1]} : vector<32x32xf32> to vector<1x32xf32>
    %399 = vector.broadcast %398 : vector<1x32xf32> to vector<32x32xf32>
    %400 = arith.mulf %396, %399 : vector<32x32xf32>
    %401 = vector.broadcast %397 : vector<32x1xf32> to vector<32x32xf32>
    %402 = arith.mulf %401, %400 : vector<32x32xf32>
    %403 = arith.addf %386, %402 : vector<32x32xf32>
    %404 = vector.extract_strided_slice %10 {offsets = [23, 0], sizes = [1, 32], strides = [1, 1]} : vector<32x32xf32> to vector<1x32xf32>
    %405 = vector.broadcast %404 : vector<1x32xf32> to vector<32x32xf32>
    %406 = arith.addf %9, %405 : vector<32x32xf32>
    %cst_78 = arith.constant 0.000000e+00 : f32
    %407 = vector.broadcast %cst_78 : f32 to vector<32x32xf32>
    %408 = arith.subf %407, %406 : vector<32x32xf32>
    %409 = math.exp %408 : vector<32x32xf32>
    %cst_79 = arith.constant 1.000000e+00 : f32
    %410 = vector.broadcast %cst_79 : f32 to vector<32x32xf32>
    %411 = arith.addf %410, %409 : vector<32x32xf32>
    %cst_80 = arith.constant 1.000000e+00 : f32
    %412 = vector.broadcast %cst_80 : f32 to vector<32x32xf32>
    %413 = arith.divf %412, %411 : vector<32x32xf32>
    %414 = vector.extract_strided_slice %3 {offsets = [0, 23], sizes = [32, 1], strides = [1, 1]} : vector<32x32xf32> to vector<32x1xf32>
    %415 = vector.extract_strided_slice %11 {offsets = [23, 0], sizes = [1, 32], strides = [1, 1]} : vector<32x32xf32> to vector<1x32xf32>
    %416 = vector.broadcast %415 : vector<1x32xf32> to vector<32x32xf32>
    %417 = arith.mulf %413, %416 : vector<32x32xf32>
    %418 = vector.broadcast %414 : vector<32x1xf32> to vector<32x32xf32>
    %419 = arith.mulf %418, %417 : vector<32x32xf32>
    %420 = arith.addf %403, %419 : vector<32x32xf32>
    %421 = vector.extract_strided_slice %10 {offsets = [24, 0], sizes = [1, 32], strides = [1, 1]} : vector<32x32xf32> to vector<1x32xf32>
    %422 = vector.broadcast %421 : vector<1x32xf32> to vector<32x32xf32>
    %423 = arith.addf %9, %422 : vector<32x32xf32>
    %cst_81 = arith.constant 0.000000e+00 : f32
    %424 = vector.broadcast %cst_81 : f32 to vector<32x32xf32>
    %425 = arith.subf %424, %423 : vector<32x32xf32>
    %426 = math.exp %425 : vector<32x32xf32>
    %cst_82 = arith.constant 1.000000e+00 : f32
    %427 = vector.broadcast %cst_82 : f32 to vector<32x32xf32>
    %428 = arith.addf %427, %426 : vector<32x32xf32>
    %cst_83 = arith.constant 1.000000e+00 : f32
    %429 = vector.broadcast %cst_83 : f32 to vector<32x32xf32>
    %430 = arith.divf %429, %428 : vector<32x32xf32>
    %431 = vector.extract_strided_slice %3 {offsets = [0, 24], sizes = [32, 1], strides = [1, 1]} : vector<32x32xf32> to vector<32x1xf32>
    %432 = vector.extract_strided_slice %11 {offsets = [24, 0], sizes = [1, 32], strides = [1, 1]} : vector<32x32xf32> to vector<1x32xf32>
    %433 = vector.broadcast %432 : vector<1x32xf32> to vector<32x32xf32>
    %434 = arith.mulf %430, %433 : vector<32x32xf32>
    %435 = vector.broadcast %431 : vector<32x1xf32> to vector<32x32xf32>
    %436 = arith.mulf %435, %434 : vector<32x32xf32>
    %437 = arith.addf %420, %436 : vector<32x32xf32>
    %438 = vector.extract_strided_slice %10 {offsets = [25, 0], sizes = [1, 32], strides = [1, 1]} : vector<32x32xf32> to vector<1x32xf32>
    %439 = vector.broadcast %438 : vector<1x32xf32> to vector<32x32xf32>
    %440 = arith.addf %9, %439 : vector<32x32xf32>
    %cst_84 = arith.constant 0.000000e+00 : f32
    %441 = vector.broadcast %cst_84 : f32 to vector<32x32xf32>
    %442 = arith.subf %441, %440 : vector<32x32xf32>
    %443 = math.exp %442 : vector<32x32xf32>
    %cst_85 = arith.constant 1.000000e+00 : f32
    %444 = vector.broadcast %cst_85 : f32 to vector<32x32xf32>
    %445 = arith.addf %444, %443 : vector<32x32xf32>
    %cst_86 = arith.constant 1.000000e+00 : f32
    %446 = vector.broadcast %cst_86 : f32 to vector<32x32xf32>
    %447 = arith.divf %446, %445 : vector<32x32xf32>
    %448 = vector.extract_strided_slice %3 {offsets = [0, 25], sizes = [32, 1], strides = [1, 1]} : vector<32x32xf32> to vector<32x1xf32>
    %449 = vector.extract_strided_slice %11 {offsets = [25, 0], sizes = [1, 32], strides = [1, 1]} : vector<32x32xf32> to vector<1x32xf32>
    %450 = vector.broadcast %449 : vector<1x32xf32> to vector<32x32xf32>
    %451 = arith.mulf %447, %450 : vector<32x32xf32>
    %452 = vector.broadcast %448 : vector<32x1xf32> to vector<32x32xf32>
    %453 = arith.mulf %452, %451 : vector<32x32xf32>
    %454 = arith.addf %437, %453 : vector<32x32xf32>
    %455 = vector.extract_strided_slice %10 {offsets = [26, 0], sizes = [1, 32], strides = [1, 1]} : vector<32x32xf32> to vector<1x32xf32>
    %456 = vector.broadcast %455 : vector<1x32xf32> to vector<32x32xf32>
    %457 = arith.addf %9, %456 : vector<32x32xf32>
    %cst_87 = arith.constant 0.000000e+00 : f32
    %458 = vector.broadcast %cst_87 : f32 to vector<32x32xf32>
    %459 = arith.subf %458, %457 : vector<32x32xf32>
    %460 = math.exp %459 : vector<32x32xf32>
    %cst_88 = arith.constant 1.000000e+00 : f32
    %461 = vector.broadcast %cst_88 : f32 to vector<32x32xf32>
    %462 = arith.addf %461, %460 : vector<32x32xf32>
    %cst_89 = arith.constant 1.000000e+00 : f32
    %463 = vector.broadcast %cst_89 : f32 to vector<32x32xf32>
    %464 = arith.divf %463, %462 : vector<32x32xf32>
    %465 = vector.extract_strided_slice %3 {offsets = [0, 26], sizes = [32, 1], strides = [1, 1]} : vector<32x32xf32> to vector<32x1xf32>
    %466 = vector.extract_strided_slice %11 {offsets = [26, 0], sizes = [1, 32], strides = [1, 1]} : vector<32x32xf32> to vector<1x32xf32>
    %467 = vector.broadcast %466 : vector<1x32xf32> to vector<32x32xf32>
    %468 = arith.mulf %464, %467 : vector<32x32xf32>
    %469 = vector.broadcast %465 : vector<32x1xf32> to vector<32x32xf32>
    %470 = arith.mulf %469, %468 : vector<32x32xf32>
    %471 = arith.addf %454, %470 : vector<32x32xf32>
    %472 = vector.extract_strided_slice %10 {offsets = [27, 0], sizes = [1, 32], strides = [1, 1]} : vector<32x32xf32> to vector<1x32xf32>
    %473 = vector.broadcast %472 : vector<1x32xf32> to vector<32x32xf32>
    %474 = arith.addf %9, %473 : vector<32x32xf32>
    %cst_90 = arith.constant 0.000000e+00 : f32
    %475 = vector.broadcast %cst_90 : f32 to vector<32x32xf32>
    %476 = arith.subf %475, %474 : vector<32x32xf32>
    %477 = math.exp %476 : vector<32x32xf32>
    %cst_91 = arith.constant 1.000000e+00 : f32
    %478 = vector.broadcast %cst_91 : f32 to vector<32x32xf32>
    %479 = arith.addf %478, %477 : vector<32x32xf32>
    %cst_92 = arith.constant 1.000000e+00 : f32
    %480 = vector.broadcast %cst_92 : f32 to vector<32x32xf32>
    %481 = arith.divf %480, %479 : vector<32x32xf32>
    %482 = vector.extract_strided_slice %3 {offsets = [0, 27], sizes = [32, 1], strides = [1, 1]} : vector<32x32xf32> to vector<32x1xf32>
    %483 = vector.extract_strided_slice %11 {offsets = [27, 0], sizes = [1, 32], strides = [1, 1]} : vector<32x32xf32> to vector<1x32xf32>
    %484 = vector.broadcast %483 : vector<1x32xf32> to vector<32x32xf32>
    %485 = arith.mulf %481, %484 : vector<32x32xf32>
    %486 = vector.broadcast %482 : vector<32x1xf32> to vector<32x32xf32>
    %487 = arith.mulf %486, %485 : vector<32x32xf32>
    %488 = arith.addf %471, %487 : vector<32x32xf32>
    %489 = vector.extract_strided_slice %10 {offsets = [28, 0], sizes = [1, 32], strides = [1, 1]} : vector<32x32xf32> to vector<1x32xf32>
    %490 = vector.broadcast %489 : vector<1x32xf32> to vector<32x32xf32>
    %491 = arith.addf %9, %490 : vector<32x32xf32>
    %cst_93 = arith.constant 0.000000e+00 : f32
    %492 = vector.broadcast %cst_93 : f32 to vector<32x32xf32>
    %493 = arith.subf %492, %491 : vector<32x32xf32>
    %494 = math.exp %493 : vector<32x32xf32>
    %cst_94 = arith.constant 1.000000e+00 : f32
    %495 = vector.broadcast %cst_94 : f32 to vector<32x32xf32>
    %496 = arith.addf %495, %494 : vector<32x32xf32>
    %cst_95 = arith.constant 1.000000e+00 : f32
    %497 = vector.broadcast %cst_95 : f32 to vector<32x32xf32>
    %498 = arith.divf %497, %496 : vector<32x32xf32>
    %499 = vector.extract_strided_slice %3 {offsets = [0, 28], sizes = [32, 1], strides = [1, 1]} : vector<32x32xf32> to vector<32x1xf32>
    %500 = vector.extract_strided_slice %11 {offsets = [28, 0], sizes = [1, 32], strides = [1, 1]} : vector<32x32xf32> to vector<1x32xf32>
    %501 = vector.broadcast %500 : vector<1x32xf32> to vector<32x32xf32>
    %502 = arith.mulf %498, %501 : vector<32x32xf32>
    %503 = vector.broadcast %499 : vector<32x1xf32> to vector<32x32xf32>
    %504 = arith.mulf %503, %502 : vector<32x32xf32>
    %505 = arith.addf %488, %504 : vector<32x32xf32>
    %506 = vector.extract_strided_slice %10 {offsets = [29, 0], sizes = [1, 32], strides = [1, 1]} : vector<32x32xf32> to vector<1x32xf32>
    %507 = vector.broadcast %506 : vector<1x32xf32> to vector<32x32xf32>
    %508 = arith.addf %9, %507 : vector<32x32xf32>
    %cst_96 = arith.constant 0.000000e+00 : f32
    %509 = vector.broadcast %cst_96 : f32 to vector<32x32xf32>
    %510 = arith.subf %509, %508 : vector<32x32xf32>
    %511 = math.exp %510 : vector<32x32xf32>
    %cst_97 = arith.constant 1.000000e+00 : f32
    %512 = vector.broadcast %cst_97 : f32 to vector<32x32xf32>
    %513 = arith.addf %512, %511 : vector<32x32xf32>
    %cst_98 = arith.constant 1.000000e+00 : f32
    %514 = vector.broadcast %cst_98 : f32 to vector<32x32xf32>
    %515 = arith.divf %514, %513 : vector<32x32xf32>
    %516 = vector.extract_strided_slice %3 {offsets = [0, 29], sizes = [32, 1], strides = [1, 1]} : vector<32x32xf32> to vector<32x1xf32>
    %517 = vector.extract_strided_slice %11 {offsets = [29, 0], sizes = [1, 32], strides = [1, 1]} : vector<32x32xf32> to vector<1x32xf32>
    %518 = vector.broadcast %517 : vector<1x32xf32> to vector<32x32xf32>
    %519 = arith.mulf %515, %518 : vector<32x32xf32>
    %520 = vector.broadcast %516 : vector<32x1xf32> to vector<32x32xf32>
    %521 = arith.mulf %520, %519 : vector<32x32xf32>
    %522 = arith.addf %505, %521 : vector<32x32xf32>
    %523 = vector.extract_strided_slice %10 {offsets = [30, 0], sizes = [1, 32], strides = [1, 1]} : vector<32x32xf32> to vector<1x32xf32>
    %524 = vector.broadcast %523 : vector<1x32xf32> to vector<32x32xf32>
    %525 = arith.addf %9, %524 : vector<32x32xf32>
    %cst_99 = arith.constant 0.000000e+00 : f32
    %526 = vector.broadcast %cst_99 : f32 to vector<32x32xf32>
    %527 = arith.subf %526, %525 : vector<32x32xf32>
    %528 = math.exp %527 : vector<32x32xf32>
    %cst_100 = arith.constant 1.000000e+00 : f32
    %529 = vector.broadcast %cst_100 : f32 to vector<32x32xf32>
    %530 = arith.addf %529, %528 : vector<32x32xf32>
    %cst_101 = arith.constant 1.000000e+00 : f32
    %531 = vector.broadcast %cst_101 : f32 to vector<32x32xf32>
    %532 = arith.divf %531, %530 : vector<32x32xf32>
    %533 = vector.extract_strided_slice %3 {offsets = [0, 30], sizes = [32, 1], strides = [1, 1]} : vector<32x32xf32> to vector<32x1xf32>
    %534 = vector.extract_strided_slice %11 {offsets = [30, 0], sizes = [1, 32], strides = [1, 1]} : vector<32x32xf32> to vector<1x32xf32>
    %535 = vector.broadcast %534 : vector<1x32xf32> to vector<32x32xf32>
    %536 = arith.mulf %532, %535 : vector<32x32xf32>
    %537 = vector.broadcast %533 : vector<32x1xf32> to vector<32x32xf32>
    %538 = arith.mulf %537, %536 : vector<32x32xf32>
    %539 = arith.addf %522, %538 : vector<32x32xf32>
    %540 = vector.extract_strided_slice %10 {offsets = [31, 0], sizes = [1, 32], strides = [1, 1]} : vector<32x32xf32> to vector<1x32xf32>
    %541 = vector.broadcast %540 : vector<1x32xf32> to vector<32x32xf32>
    %542 = arith.addf %9, %541 : vector<32x32xf32>
    %cst_102 = arith.constant 0.000000e+00 : f32
    %543 = vector.broadcast %cst_102 : f32 to vector<32x32xf32>
    %544 = arith.subf %543, %542 : vector<32x32xf32>
    %545 = math.exp %544 : vector<32x32xf32>
    %cst_103 = arith.constant 1.000000e+00 : f32
    %546 = vector.broadcast %cst_103 : f32 to vector<32x32xf32>
    %547 = arith.addf %546, %545 : vector<32x32xf32>
    %cst_104 = arith.constant 1.000000e+00 : f32
    %548 = vector.broadcast %cst_104 : f32 to vector<32x32xf32>
    %549 = arith.divf %548, %547 : vector<32x32xf32>
    %550 = vector.extract_strided_slice %3 {offsets = [0, 31], sizes = [32, 1], strides = [1, 1]} : vector<32x32xf32> to vector<32x1xf32>
    %551 = vector.extract_strided_slice %11 {offsets = [31, 0], sizes = [1, 32], strides = [1, 1]} : vector<32x32xf32> to vector<1x32xf32>
    %552 = vector.broadcast %551 : vector<1x32xf32> to vector<32x32xf32>
    %553 = arith.mulf %549, %552 : vector<32x32xf32>
    %554 = vector.broadcast %550 : vector<32x1xf32> to vector<32x32xf32>
    %555 = arith.mulf %554, %553 : vector<32x32xf32>
    %556 = arith.addf %539, %555 : vector<32x32xf32>
    %cst_105 = arith.constant 0.000000e+00 : f32
    %557 = vector.broadcast %cst_105 : f32 to vector<32x32xf32>
    %558 = arith.maximumf %556, %557 : vector<32x32xf32>
    %559 = arith.addf %558, %1 : vector<32x32xf32>
    %c0_106 = arith.constant 0 : index
    %c0_107 = arith.constant 0 : index
    %c0_108 = arith.constant 0 : index
    %560 = vector.load %arg5[%c0_106, %c0_107, %c0_108] : memref<1x32x32xf32, #tpu.memory_space<vmem>>, vector<1x32x32xf32>
    %561 = vector.shape_cast %560 : vector<1x32x32xf32> to vector<32x32xf32>
    %562 = vector.shape_cast %559 : vector<32x32xf32> to vector<1x32x32xf32>
    tpu.vector_store %arg5[%c0_106, %c0_107, %c0_108], %562 {strides = array<i32>} : memref<1x32x32xf32, #tpu.memory_space<vmem>>, vector<1x32x32xf32>,
    return
  }
  func.func @transform_0(%arg0: i32) -> (i32, i32, i32) {
    %c0_i32 = arith.constant 0 : i32
    %c0_i32_0 = arith.constant 0 : i32
    %c0_i32_1 = arith.constant 0 : i32
    return %arg0, %c0_i32, %c0_i32_0 : i32, i32, i32
  }
  func.func @transform_1(%arg0: i32) -> (i32, i32, i32) {
    %c0_i32 = arith.constant 0 : i32
    %c0_i32_0 = arith.constant 0 : i32
    %c0_i32_1 = arith.constant 0 : i32
    return %arg0, %c0_i32, %c0_i32_0 : i32, i32, i32
  }
  func.func @transform_2(%arg0: i32) -> (i32, i32) {
    %c0_i32 = arith.constant 0 : i32
    %c0_i32_0 = arith.constant 0 : i32
    %c0_i32_1 = arith.constant 0 : i32
    return %c0_i32, %c0_i32_0 : i32, i32
  }
  func.func @transform_3(%arg0: i32) -> (i32, i32) {
    %c0_i32 = arith.constant 0 : i32
    %c0_i32_0 = arith.constant 0 : i32
    %c0_i32_1 = arith.constant 0 : i32
    return %c0_i32, %c0_i32_0 : i32, i32
  }
  func.func @transform_4(%arg0: i32) -> (i32, i32, i32) {
    %c0_i32 = arith.constant 0 : i32
    %c0_i32_0 = arith.constant 0 : i32
    %c0_i32_1 = arith.constant 0 : i32
    return %arg0, %c0_i32, %c0_i32_0 : i32, i32, i32
  }
}

</mosaic_0001>

<llo_original>
// kernel: tpu_custom_call.1
$region0: #{tpu_custom_call.1}
  #allocation0 [shape = 'u32[]', space=smem, size = 0x4, offset = 0x4, fixed_abs, tag = 'smem constant byte address 0x4 - core index']
  #allocation1 [shape = 'u32[144,128]{1,0:T(1,128)}', space=vmem, size = 0x12000, scoped, tag = 'internal scratch']
  %s0 = inlined_call_operand.hbm [shape: f32[8,32,32], index: 0, kind: input, shape index: {}]
  %s1 = inlined_call_operand.hbm [shape: f32[8,32,32], index: 1, kind: input, shape index: {}]
  %s2 = inlined_call_operand.hbm [shape: f32[32,128], index: 2, kind: input, shape index: {}]
  %s3 = inlined_call_operand.vmem [shape: f32[1,128], index: 3, kind: input, shape index: {}]
  %s4 = inlined_call_operand.hbm [shape: f32[8,32,32], index: 4, kind: output, shape index: {}]
  %s5 = sld [smem:[#allocation0]]
  $region61: #{tpu_custom_call.1} parent=0
    _
  %s7 = ssub.s32 1, %s5
  %s8 = scalar_select 0, %s7, %s5
  $region1: #{tpu_custom_call.1} parent=0
    #allocation2 [shape = 'u8[32768]{0}', space=vmem, size = 0x8000, scoped, tag = 'input window, operand 0']
    #allocation3 [shape = 's32[2]{0}', space=sflag, size = 0x8, scoped, tag = 'scoped memory for tpu_custom_call.1']
    #allocation4 [shape = 's32[2]{0}', space=sflag, size = 0x8, scoped, tag = 'scoped memory for tpu_custom_call.1']
    #allocation5 [shape = 'u8[32768]{0}', space=vmem, size = 0x8000, scoped, tag = 'input window, operand 1']
    #allocation6 [shape = 's32[2]{0}', space=sflag, size = 0x8, scoped, tag = 'scoped memory for tpu_custom_call.1']
    #allocation7 [shape = 'u8[16384]{0}', space=vmem, size = 0x4000, scoped, tag = 'input window, operand 2, single buffered']
    #allocation8 [shape = 'u8[32768]{0}', space=vmem, size = 0x8000, scoped, tag = 'output window, operand 0']
    %9 = vsyncpa [#allocation3], 0
    %s10 = scalar_lea.sflag [#allocation3], 1
    %11 = vsyncpa %s10, 0
    %12 = vsyncpa [#allocation6], 0
    %s13 = scalar_lea.sflag [#allocation6], 1
    %14 = vsyncpa %s13, 0
    %15 = vsyncpa [#allocation4], 0
    %s16 = scalar_lea.sflag [#allocation4], 1
    %17 = vsyncpa %s16, 0
    loop: start=0, step=1, limit=10
    $region2: #{tpu_custom_call.1} parent=1 // loop_pre_header
      _
    $region3: #{tpu_custom_call.1} parent=1 // loop_header
      %s19 = sphi 0, %s23
      %p20 = scmp.ge.s32.totalorder %s19, 10
      %s29 = sphi 0, %s31
      %s32 = sphi 0, %s29
      %s33 = sphi 0, %s32
      %s49 = sphi 0, %s33
      %s55 = sphi 0, %s57
      %s58 = sphi 0, %s55
      %s59 = sphi 0, %s58
      %s75 = sphi 0, %s59
      %s79 = sphi 0, %s79
      %s81 = sphi 0, %s79
      %s82 = sphi 0, %s81
      %s96 = sphi 0, %s82
      %s100 = sphi 0, %s100
      %s102 = sphi 0, %s100
      %s103 = sphi 0, %s102
      %s117 = sphi 0, %s103
      %s123 = sphi 0, %s125
      %s126 = sphi 0, %s123
      %s127 = sphi 0, %s126
      %s143 = sphi 0, %s127
    $region4: #{tpu_custom_call.1} parent=1 // loop_header_branch
      %22 = sbr.rel (%p20) target = $region8
    $region5: #{tpu_custom_call.1} parent=1 // loop_body
      %s24 = ssub.s32 %s19, 1
      %s25 = ssub.s32 %s19, 2
      %s26 = sadd.s32 %s19, 1
      %s27 = ssub.s32 %s19, %s26
      %p28 = scmp.eq.s32.totalorder %s27, 0
      %s30 = sadd.s32 %s29, 1
      %s31 = scalar_select %p28, %s29, %s30
      %p34 = pneg %p28
      %p35 = scmp.eq.s32.totalorder %s19, 7
      %p36 = por %p34, %p35
      %p37 = scmp.ne.s32.totalorder %s29, %s32
      %p38 = scmp.eq.s32.totalorder %s19, 0
      %p39 = por %p37, %p38
      %p40 = scmp.ne.s32.totalorder %s29, %s32
      %p41 = scmp.eq.s32.totalorder %s24, 7
      %p42 = por %p40, %p41
      %p43 = scmp.ne.s32.totalorder %s32, %s33
      %p44 = scmp.eq.s32.totalorder %s24, 0
      %p45 = por %p43, %p44
      %p46 = scmp.ne.s32.totalorder %s32, %s33
      %p47 = scmp.eq.s32.totalorder %s25, 7
      %p48 = por %p46, %p47
      %p50 = scmp.ne.s32.totalorder %s33, %s49
      %p51 = scmp.eq.s32.totalorder %s25, 0
      %p52 = por %p50, %p51
      %s53 = ssub.s32 %s19, %s26
      %p54 = scmp.eq.s32.totalorder %s53, 0
      %s56 = sadd.s32 %s55, 1
      %s57 = scalar_select %p54, %s55, %s56
      %p60 = pneg %p54
      %p61 = scmp.eq.s32.totalorder %s19, 7
      %p62 = por %p60, %p61
      %p63 = scmp.ne.s32.totalorder %s55, %s58
      %p64 = scmp.eq.s32.totalorder %s19, 0
      %p65 = por %p63, %p64
      %p66 = scmp.ne.s32.totalorder %s55, %s58
      %p67 = scmp.eq.s32.totalorder %s24, 7
      %p68 = por %p66, %p67
      %p69 = scmp.ne.s32.totalorder %s58, %s59
      %p70 = scmp.eq.s32.totalorder %s24, 0
      %p71 = por %p69, %p70
      %p72 = scmp.ne.s32.totalorder %s58, %s59
      %p73 = scmp.eq.s32.totalorder %s25, 7
      %p74 = por %p72, %p73
      %p76 = scmp.ne.s32.totalorder %s59, %s75
      %p77 = scmp.eq.s32.totalorder %s25, 0
      %p78 = por %p76, %p77
      %s80 = sadd.s32 %s79, 1
      %p83 = scmp.eq.s32.totalorder %s19, 7
      %p84 = scmp.ne.s32.totalorder %s79, %s81
      %p85 = scmp.eq.s32.totalorder %s19, 0
      %p86 = por %p84, %p85
      %p87 = scmp.ne.s32.totalorder %s79, %s81
      %p88 = scmp.eq.s32.totalorder %s24, 7
      %p89 = por %p87, %p88
      %p90 = scmp.ne.s32.totalorder %s81, %s82
      %p91 = scmp.eq.s32.totalorder %s24, 0
      %p92 = por %p90, %p91
      %p93 = scmp.ne.s32.totalorder %s81, %s82
      %p94 = scmp.eq.s32.totalorder %s25, 7
      %p95 = por %p93, %p94
      %p97 = scmp.ne.s32.totalorder %s82, %s96
      %p98 = scmp.eq.s32.totalorder %s25, 0
      %p99 = por %p97, %p98
      %s101 = sadd.s32 %s100, 1
      %p104 = scmp.eq.s32.totalorder %s19, 7
      %p105 = scmp.ne.s32.totalorder %s100, %s102
      %p106 = scmp.eq.s32.totalorder %s19, 0
      %p107 = por %p105, %p106
      %p108 = scmp.ne.s32.totalorder %s100, %s102
      %p109 = scmp.eq.s32.totalorder %s24, 7
      %p110 = por %p108, %p109
      %p111 = scmp.ne.s32.totalorder %s102, %s103
      %p112 = scmp.eq.s32.totalorder %s24, 0
      %p113 = por %p111, %p112
      %p114 = scmp.ne.s32.totalorder %s102, %s103
      %p115 = scmp.eq.s32.totalorder %s25, 7
      %p116 = por %p114, %p115
      %p118 = scmp.ne.s32.totalorder %s103, %s117
      %p119 = scmp.eq.s32.totalorder %s25, 0
      %p120 = por %p118, %p119
      %s121 = ssub.s32 %s19, %s26
      %p122 = scmp.eq.s32.totalorder %s121, 0
      %s124 = sadd.s32 %s123, 1
      %s125 = scalar_select %p122, %s123, %s124
      %p128 = pneg %p122
      %p129 = scmp.eq.s32.totalorder %s19, 7
      %p130 = por %p128, %p129
      %p131 = scmp.ne.s32.totalorder %s123, %s126
      %p132 = scmp.eq.s32.totalorder %s19, 0
      %p133 = por %p131, %p132
      %p134 = scmp.ne.s32.totalorder %s123, %s126
      %p135 = scmp.eq.s32.totalorder %s24, 7
      %p136 = por %p134, %p135
      %p137 = scmp.ne.s32.totalorder %s126, %s127
      %p138 = scmp.eq.s32.totalorder %s24, 0
      %p139 = por %p137, %p138
      %p140 = scmp.ne.s32.totalorder %s126, %s127
      %p141 = scmp.eq.s32.totalorder %s25, 7
      %p142 = por %p140, %p141
      %p144 = scmp.ne.s32.totalorder %s127, %s143
      %p145 = scmp.eq.s32.totalorder %s25, 0
      %p146 = por %p144, %p145
      %p147 = scmp.le.s32.totalorder 1, %s19
      %p148 = scmp.lt.s32.totalorder %s19, 9
      %p149 = pnand %p147, %p148
      %p150 = pneg %p149
      // Predicated region
      $region9: #{tpu_custom_call.1} parent=5 // pred_check
        _
      $region10: #{tpu_custom_call.1} parent=5 // pred_check_branch
        %152 = sbr.rel (%p149) target = $region12
      $region11: #{tpu_custom_call.1} parent=5 // pred_region
        %s153 = ssub.s32 %s19, 1
        // Predicated region
        $region13: #{tpu_custom_call.1} parent=11 // pred_check
          %p154 = pneg %p92
        $region14: #{tpu_custom_call.1} parent=11 // pred_check_branch
          %156 = sbr.rel (%p154) target = $region16
        $region15: #{tpu_custom_call.1} parent=11 // pred_region
          %s158 = ssub.s32 512, 512
          %159 = vsyncadd [#allocation6], %s158
          %s160 = sshll.u32 [#allocation7], 4
          %s161 = int_to_ptr.vmem [resolvable:$true] %s160
          %166 = dma.hbm_to_vmem [thread:$0]  %s2, 512, %s161, [#allocation6], 128, 128, 8
        $region16: #{tpu_custom_call.1} parent=11 // pred_fallthru
          _
        // Predicated region
        $region17: #{tpu_custom_call.1} parent=11 // pred_check
          %p167 = pneg %p113
        $region18: #{tpu_custom_call.1} parent=11 // pred_check_branch
          %169 = sbr.rel (%p167) target = $region20
        $region19: #{tpu_custom_call.1} parent=11 // pred_region
          _
        $region20: #{tpu_custom_call.1} parent=11 // pred_fallthru
          _
      $region12: #{tpu_custom_call.1} parent=5 // pred_fallthru
        _
      %p170 = scmp.lt.s32.totalorder %s19, 8
      // Predicated region
      $region21: #{tpu_custom_call.1} parent=5 // pred_check
        %p171 = pneg %p170
      $region22: #{tpu_custom_call.1} parent=5 // pred_check_branch
        %173 = sbr.rel (%p171) target = $region24
      $region23: #{tpu_custom_call.1} parent=5 // pred_region
        // Predicated region
        $region25: #{tpu_custom_call.1} parent=23 // pred_check
          %p174 = pneg %p39
        $region26: #{tpu_custom_call.1} parent=23 // pred_check_branch
          %176 = sbr.rel (%p174) target = $region28
        $region27: #{tpu_custom_call.1} parent=23 // pred_region
          %s177 = sand.u32 %s29, 1
          %s178 = scalar_lea.sflag [#allocation3], %s177
          %s179 = sand.u32 %s29, 1
          %s180 = smul.addr %s179, 32
          %s181 = scalar_lea.vmem [#allocation2], %s180
          %s183 = ssub.s32 512, 512
          %184 = vsyncadd %s178, %s183
          %s185 = smul.addr %s19, 4
          %s186 = smul.addr %s185, 128
          %s187 = scalar_lea.hbm %s0, %s186
          %s188 = sshll.u32 %s181, 4
          %s189 = int_to_ptr.vmem [resolvable:$true] %s188
          %194 = dma.hbm_to_vmem [thread:$0]  %s187, 512, %s189, %s178, 128, 128, 8
        $region28: #{tpu_custom_call.1} parent=23 // pred_fallthru
          _
        // Predicated region
        $region29: #{tpu_custom_call.1} parent=23 // pred_check
          %p195 = pneg %p65
        $region30: #{tpu_custom_call.1} parent=23 // pred_check_branch
          %197 = sbr.rel (%p195) target = $region32
        $region31: #{tpu_custom_call.1} parent=23 // pred_region
          %s198 = sand.u32 %s19, 1
          %s199 = scalar_lea.sflag [#allocation6], %s198
          %s200 = sand.u32 %s55, 1
          %s201 = smul.addr %s200, 32
          %s202 = scalar_lea.vmem [#allocation5], %s201
          %s204 = ssub.s32 512, 512
          %205 = vsyncadd %s199, %s204
          %s206 = smul.addr %s19, 4
          %s207 = smul.addr %s206, 128
          %s208 = scalar_lea.hbm %s1, %s207
          %s209 = sshll.u32 %s202, 4
          %s210 = int_to_ptr.vmem [resolvable:$true] %s209
          %215 = dma.hbm_to_vmem [thread:$0]  %s208, 512, %s210, %s199, 128, 128, 8
        $region32: #{tpu_custom_call.1} parent=23 // pred_fallthru
          _
      $region24: #{tpu_custom_call.1} parent=5 // pred_fallthru
        _
      %p216 = scmp.le.s32.totalorder 1, %s19
      %p217 = scmp.lt.s32.totalorder %s19, 9
      %p218 = pnand %p216, %p217
      %p219 = pneg %p218
      // Predicated region
      $region33: #{tpu_custom_call.1} parent=5 // pred_check
        _
      $region34: #{tpu_custom_call.1} parent=5 // pred_check_branch
        %221 = sbr.rel (%p218) target = $region36
      $region35: #{tpu_custom_call.1} parent=5 // pred_region
        %s222 = ssub.s32 %s19, 1
        %s223 = sand.u32 %s32, 1
        %s224 = scalar_lea.sflag [#allocation3], %s223
        %s225 = sand.u32 %s32, 1
        %s226 = smul.addr %s225, 32
        %s227 = scalar_lea.vmem [#allocation2], %s226
        // Predicated region
        $region37: #{tpu_custom_call.1} parent=35 // pred_check
          %p228 = pneg %p45
        $region38: #{tpu_custom_call.1} parent=35 // pred_check_branch
          %230 = sbr.rel (%p228) target = $region40
        $region39: #{tpu_custom_call.1} parent=35 // pred_region
          %231 = dma.done %s224, 512
        $region40: #{tpu_custom_call.1} parent=35 // pred_fallthru
          _
        %s232 = sand.u32 %s24, 1
        %s233 = scalar_lea.sflag [#allocation6], %s232
        %s234 = sand.u32 %s58, 1
        %s235 = smul.addr %s234, 32
        %s236 = scalar_lea.vmem [#allocation5], %s235
        // Predicated region
        $region41: #{tpu_custom_call.1} parent=35 // pred_check
          %p237 = pneg %p71
        $region42: #{tpu_custom_call.1} parent=35 // pred_check_branch
          %239 = sbr.rel (%p237) target = $region44
        $region43: #{tpu_custom_call.1} parent=35 // pred_region
          %240 = dma.done %s233, 512
        $region44: #{tpu_custom_call.1} parent=35 // pred_fallthru
          _
        // Predicated region
        $region45: #{tpu_custom_call.1} parent=35 // pred_check
          %p241 = pneg %p92
        $region46: #{tpu_custom_call.1} parent=35 // pred_check_branch
          %243 = sbr.rel (%p241) target = $region48
        $region47: #{tpu_custom_call.1} parent=35 // pred_region
          %244 = dma.done [#allocation6], 512
        $region48: #{tpu_custom_call.1} parent=35 // pred_fallthru
          _
        %s245 = sand.u32 %s32, 1
        %s246 = scalar_lea.sflag [#allocation3], %s245
        %s247 = sand.u32 %s32, 1
        %s248 = smul.addr %s247, 32
        %s249 = scalar_lea.vmem [#allocation2], %s248
        %p250 = pneg %p45
        %p251 = pneg %p42
        %s252 = sand.u32 %s24, 1
        %s253 = scalar_lea.sflag [#allocation6], %s252
        %s254 = sand.u32 %s58, 1
        %s255 = smul.addr %s254, 32
        %s256 = scalar_lea.vmem [#allocation5], %s255
        %p257 = pneg %p71
        %p258 = pneg %p68
        %p259 = pneg %p92
        %p260 = pneg %p89
        %p261 = pneg %p113
        %p262 = pneg %p110
        %p263 = pneg %p139
        %p264 = pneg %p136
        %s265 = sand.u32 %s126, 1
        %s266 = scalar_lea.sflag [#allocation4], %s265
        %s267 = sand.u32 %s126, 1
        %s268 = smul.addr %s267, 32
        %s269 = scalar_lea.vmem [#allocation8], %s268
        %v270 = vld [vmem:[%s227] sm:$0xff]
        %v271 = vld [vmem:[%s227 + $0x8] sm:$0xff]
        %v272 = vld [vmem:[%s227 + $0x10] sm:$0xff]
        %v273 = vld [vmem:[%s227 + $0x18] sm:$0xff]
        %v274 = vld [vmem:[%s236] sm:$0xff]
        %v275 = vld [vmem:[%s236 + $0x8] sm:$0xff]
        %v276 = vld [vmem:[%s236 + $0x10] sm:$0xff]
        %v277 = vld [vmem:[%s236 + $0x18] sm:$0xff]
        %v278 = vld [vmem:[#allocation7] sm:$0xff]
        %v279 = vld [vmem:[#allocation7 + $0x8] sm:$0xff]
        %v280 = vld [vmem:[#allocation7 + $0x10] sm:$0xff]
        %v281 = vld [vmem:[#allocation7 + $0x18] sm:$0xff]
        %v282 = vld [vmem:[%s3] sm:$0x1]
        %v284 = vlaneseq
        %v285 = vshrl.u32 %v284, 7
        %v286 = vsub.s32 0, %v285
        %v287 = vrot.slane %v282, %v286
        %vm289 = vcmask 261120
        %v291 = vsel %vm289, %v270, 0
        %v294 = vsel %vm289, %v271, 0
        %v297 = vsel %vm289, %v272, 0
        %v300 = vsel %vm289, %v273, 0
        %302 = vmatprep.subr.mxu0 0.0
        %303 = vmatpush1.msra.mxu0 0.0
        %304 = vmatprep.subr.mxu0 0.0
        %305 = vmatpush1.msra.mxu0 0.0
        %306 = vmatprep.subr.mxu0 0.0
        %307 = vmatpush1.msra.mxu0 0.0
        %308 = vmatprep.subr.mxu0 0.0
        %309 = vmatpush1.msra.mxu0 0.0
        %310 = vmatprep.subr.mxu0 0.0
        %311 = vmatpush1.msra.mxu0 0.0
        %312 = vmatprep.subr.mxu0 0.0
        %313 = vmatpush1.msra.mxu0 0.0
        %314 = vmatprep.subr.mxu0 0.0
        %315 = vmatpush1.msra.mxu0 0.0
        %316 = vmatprep.subr.mxu0 0.0
        %317 = vmatpush1.msra.mxu0 0.0
        %318 = vmatprep.subr.mxu0 0.0
        %319 = vmatpush1.msra.mxu0 0.0
        %320 = vmatprep.subr.mxu0 0.0
        %321 = vmatpush1.msra.mxu0 0.0
        %322 = vmatprep.subr.mxu0 0.0
        %323 = vmatpush1.msra.mxu0 0.0
        %324 = vmatprep.subr.mxu0 0.0
        %325 = vmatpush1.msra.mxu0 0.0
        %326 = vmatprep.subr.mxu0 0.0
        %327 = vmatpush1.msra.mxu0 %v281
        %328 = vmatprep.subr.mxu0 0.0
        %329 = vmatpush1.msra.mxu0 %v280
        %330 = vmatprep.subr.mxu0 0.0
        %331 = vmatpush1.msra.mxu0 %v279
        %332 = vmatprep.subr.mxu0 0.0
        %333 = vmatpush1.msra.mxu0 %v278
        %334 = vmatprep.subr.mxu0 0.0
        %335 = vmatpush2.msra.mxu0 0.0
        %336 = vmatprep.subr.mxu0 0.0
        %337 = vmatpush2.msra.mxu0 0.0
        %338 = vmatprep.subr.mxu0 0.0
        %339 = vmatpush2.msra.mxu0 0.0
        %340 = vmatprep.subr.mxu0 0.0
        %341 = vmatpush2.msra.mxu0 0.0
        %342 = vmatprep.subr.mxu0 0.0
        %343 = vmatpush2.msra.mxu0 0.0
        %344 = vmatprep.subr.mxu0 0.0
        %345 = vmatpush2.msra.mxu0 0.0
        %346 = vmatprep.subr.mxu0 0.0
        %347 = vmatpush2.msra.mxu0 0.0
        %348 = vmatprep.subr.mxu0 0.0
        %349 = vmatpush2.msra.mxu0 0.0
        %350 = vmatprep.subr.mxu0 0.0
        %351 = vmatpush2.msra.mxu0 0.0
        %352 = vmatprep.subr.mxu0 0.0
        %353 = vmatpush2.msra.mxu0 0.0
        %354 = vmatprep.subr.mxu0 0.0
        %355 = vmatpush2.msra.mxu0 0.0
        %356 = vmatprep.subr.mxu0 0.0
        %357 = vmatpush2.msra.mxu0 0.0
        %358 = vmatprep.subr.mxu0 0.0
        %359 = vmatpush2.msra.mxu0 0.0
        %360 = vmatprep.subr.mxu0 0.0
        %361 = vmatpush2.msra.mxu0 0.0
        %362 = vmatprep.subr.mxu0 0.0
        %363 = vmatpush2.msra.mxu0 0.0
        %364 = vmatprep.subr.mxu0 0.0
        %365 = vmatpush2.msra.mxu0 0.0
        %366 = vmatprep.mubr.f32.mxu0 0.0
        %367 = vmatmul.mubr.f32.gmra.mxu0 %v291
        %v368 = vpop.f32.mrf.mxu0
        %v369 = vadd.f32 %v287, %v368
        %v370 = vpop.f32.mrf.mxu0
        %371 = vmatprep.mubr.f32.mxu0 0.0
        %372 = vmatmul.mubr.f32.gmra.mxu0 %v294
        %v373 = vpop.f32.mrf.mxu0
        %v374 = vadd.f32 %v287, %v373
        %v375 = vpop.f32.mrf.mxu0
        %376 = vmatprep.mubr.f32.mxu0 0.0
        %377 = vmatmul.mubr.f32.gmra.mxu0 %v297
        %v378 = vpop.f32.mrf.mxu0
        %v379 = vadd.f32 %v287, %v378
        %v380 = vpop.f32.mrf.mxu0
        %381 = vmatprep.mubr.f32.mxu0 0.0
        %382 = vmatmul.mubr.f32.gmra.mxu0 %v300
        %v383 = vpop.f32.mrf.mxu0
        %v384 = vadd.f32 %v287, %v383
        %v385 = vpop.f32.mrf.mxu0
        %386 = vdwg.mxu0
        %v387 = vlaneseq
        %v388 = vshrl.u32 %v387, 7
        %v389 = vsub.s32 0, %v388
        %v390 = vrot.slane %v369, %v389
        %392 = vrot.lane.b32.xlu0 %v390, 96
        %v393 = vpop.permute.xlu0 %392
        %v395 = vadd.f32 %v369, %v393
        %v396 = vadd.f32 %v374, %v393
        %v397 = vadd.f32 %v379, %v393
        %v398 = vadd.f32 %v384, %v393
        %v399 = vsub.f32 0.0, %v395
        %v400 = vsub.f32 0.0, %v396
        %v401 = vsub.f32 0.0, %v397
        %v402 = vsub.f32 0.0, %v398
        %v403 = vmul.f32 %v399, 1.442695
        %v404 = vpow.pop %v403
        %v405 = vmul.f32 %v400, 1.442695
        %v406 = vpow.pop %v405
        %v407 = vmul.f32 %v401, 1.442695
        %v408 = vpow.pop %v407
        %v409 = vmul.f32 %v402, 1.442695
        %v410 = vpow.pop %v409
        %v411 = vadd.f32 %v404, 1.0
        %v412 = vadd.f32 %v406, 1.0
        %v413 = vadd.f32 %v408, 1.0
        %v414 = vadd.f32 %v410, 1.0
        %v415 = vrcp.pop %v411
        %v416 = vmul.f32 1.0, %v415
        %v417 = vrcp.pop %v412
        %v418 = vmul.f32 1.0, %v417
        %v419 = vrcp.pop %v413
        %v420 = vmul.f32 1.0, %v419
        %v421 = vrcp.pop %v414
        %v422 = vmul.f32 1.0, %v421
        %423 = vrot.lane.b32.xlu0 %v390, 64
        %v424 = vpop.permute.xlu0 %423
        %v426 = vmul.f32 %v416, %v424
        %v427 = vmul.f32 %v418, %v424
        %v428 = vmul.f32 %v420, %v424
        %v429 = vmul.f32 %v422, %v424
        %431 = vset.pattern.permute.xlu0 0
        %432 = vperm.xlu0 %431, %v274
        %v433 = vpop.permute.xlu0 %432
        %436 = vset.pattern.permute.xlu0 0
        %437 = vperm.xlu0 %436, %v275
        %v438 = vpop.permute.xlu0 %437
        %441 = vset.pattern.permute.xlu0 0
        %442 = vperm.xlu0 %441, %v276
        %v443 = vpop.permute.xlu0 %442
        %446 = vset.pattern.permute.xlu0 0
        %447 = vperm.xlu0 %446, %v277
        %v448 = vpop.permute.xlu0 %447
        %v450 = vmul.f32 %v433, %v426
        %v451 = vmul.f32 %v438, %v427
        %v452 = vmul.f32 %v443, %v428
        %v453 = vmul.f32 %v448, %v429
        %458 = vrot.lane.b32.xlu0 %v450, 96
        %v459 = vpop.permute.xlu0 %458
        %460 = vrot.lane.b32.xlu0 %v451, 96
        %v461 = vpop.permute.xlu0 %460
        %462 = vrot.lane.b32.xlu0 %v452, 96
        %v463 = vpop.permute.xlu0 %462
        %464 = vrot.lane.b32.xlu0 %v453, 96
        %v465 = vpop.permute.xlu0 %464
        %v470 = vadd.f32 %v369, %v459
        %v471 = vadd.f32 %v374, %v461
        %v472 = vadd.f32 %v379, %v463
        %v473 = vadd.f32 %v384, %v465
        %v474 = vlaneseq
        %v475 = vshrl.u32 %v474, 7
        %v476 = vsub.s32 1, %v475
        %v477 = vrot.slane %v369, %v476
        %479 = vrot.lane.b32.xlu0 %v477, 96
        %v480 = vpop.permute.xlu0 %479
        %v482 = vadd.f32 %v369, %v480
        %v483 = vadd.f32 %v374, %v480
        %v484 = vadd.f32 %v379, %v480
        %v485 = vadd.f32 %v384, %v480
        %v486 = vsub.f32 0.0, %v482
        %v487 = vsub.f32 0.0, %v483
        %v488 = vsub.f32 0.0, %v484
        %v489 = vsub.f32 0.0, %v485
        %v490 = vmul.f32 %v486, 1.442695
        %v491 = vpow.pop %v490
        %v492 = vmul.f32 %v487, 1.442695
        %v493 = vpow.pop %v492
        %v494 = vmul.f32 %v488, 1.442695
        %v495 = vpow.pop %v494
        %v496 = vmul.f32 %v489, 1.442695
        %v497 = vpow.pop %v496
        %v498 = vadd.f32 %v491, 1.0
        %v499 = vadd.f32 %v493, 1.0
        %v500 = vadd.f32 %v495, 1.0
        %v501 = vadd.f32 %v497, 1.0
        %v502 = vrcp.pop %v498
        %v503 = vmul.f32 1.0, %v502
        %v504 = vrcp.pop %v499
        %v505 = vmul.f32 1.0, %v504
        %v506 = vrcp.pop %v500
        %v507 = vmul.f32 1.0, %v506
        %v508 = vrcp.pop %v501
        %v509 = vmul.f32 1.0, %v508
        %510 = vrot.lane.b32.xlu0 %v477, 64
        %v511 = vpop.permute.xlu0 %510
        %v513 = vmul.f32 %v503, %v511
        %v514 = vmul.f32 %v505, %v511
        %v515 = vmul.f32 %v507, %v511
        %v516 = vmul.f32 %v509, %v511
        %517 = vset.pattern.permute.xlu0 1
        %518 = vperm.xlu0 %517, %v274
        %v519 = vpop.permute.xlu0 %518
        %521 = vset.pattern.permute.xlu0 1
        %522 = vperm.xlu0 %521, %v275
        %v523 = vpop.permute.xlu0 %522
        %525 = vset.pattern.permute.xlu0 1
        %526 = vperm.xlu0 %525, %v276
        %v527 = vpop.permute.xlu0 %526
        %529 = vset.pattern.permute.xlu0 1
        %530 = vperm.xlu0 %529, %v277
        %v531 = vpop.permute.xlu0 %530
        %v533 = vmul.f32 %v519, %v513
        %v534 = vmul.f32 %v523, %v514
        %v535 = vmul.f32 %v527, %v515
        %v536 = vmul.f32 %v531, %v516
        %541 = vrot.lane.b32.xlu0 %v533, 96
        %v542 = vpop.permute.xlu0 %541
        %543 = vrot.lane.b32.xlu0 %v534, 96
        %v544 = vpop.permute.xlu0 %543
        %545 = vrot.lane.b32.xlu0 %v535, 96
        %v546 = vpop.permute.xlu0 %545
        %547 = vrot.lane.b32.xlu0 %v536, 96
        %v548 = vpop.permute.xlu0 %547
        %v553 = vadd.f32 %v470, %v542
        %v554 = vadd.f32 %v471, %v544
        %v555 = vadd.f32 %v472, %v546
        %v556 = vadd.f32 %v473, %v548
        %v557 = vlaneseq
        %v558 = vshrl.u32 %v557, 7
        %v559 = vsub.s32 2, %v558
        %v560 = vrot.slane %v369, %v559
        %562 = vrot.lane.b32.xlu0 %v560, 96
        %v563 = vpop.permute.xlu0 %562
        %v565 = vadd.f32 %v369, %v563
        %v566 = vadd.f32 %v374, %v563
        %v567 = vadd.f32 %v379, %v563
        %v568 = vadd.f32 %v384, %v563
        %v569 = vsub.f32 0.0, %v565
        %v570 = vsub.f32 0.0, %v566
        %v571 = vsub.f32 0.0, %v567
        %v572 = vsub.f32 0.0, %v568
        %v573 = vmul.f32 %v569, 1.442695
        %v574 = vpow.pop %v573
        %v575 = vmul.f32 %v570, 1.442695
        %v576 = vpow.pop %v575
        %v577 = vmul.f32 %v571, 1.442695
        %v578 = vpow.pop %v577
        %v579 = vmul.f32 %v572, 1.442695
        %v580 = vpow.pop %v579
        %v581 = vadd.f32 %v574, 1.0
        %v582 = vadd.f32 %v576, 1.0
        %v583 = vadd.f32 %v578, 1.0
        %v584 = vadd.f32 %v580, 1.0
        %v585 = vrcp.pop %v581
        %v586 = vmul.f32 1.0, %v585
        %v587 = vrcp.pop %v582
        %v588 = vmul.f32 1.0, %v587
        %v589 = vrcp.pop %v583
        %v590 = vmul.f32 1.0, %v589
        %v591 = vrcp.pop %v584
        %v592 = vmul.f32 1.0, %v591
        %593 = vrot.lane.b32.xlu0 %v560, 64
        %v594 = vpop.permute.xlu0 %593
        %v596 = vmul.f32 %v586, %v594
        %v597 = vmul.f32 %v588, %v594
        %v598 = vmul.f32 %v590, %v594
        %v599 = vmul.f32 %v592, %v594
        %600 = vset.pattern.permute.xlu0 2
        %601 = vperm.xlu0 %600, %v274
        %v602 = vpop.permute.xlu0 %601
        %604 = vset.pattern.permute.xlu0 2
        %605 = vperm.xlu0 %604, %v275
        %v606 = vpop.permute.xlu0 %605
        %608 = vset.pattern.permute.xlu0 2
        %609 = vperm.xlu0 %608, %v276
        %v610 = vpop.permute.xlu0 %609
        %612 = vset.pattern.permute.xlu0 2
        %613 = vperm.xlu0 %612, %v277
        %v614 = vpop.permute.xlu0 %613
        %v616 = vmul.f32 %v602, %v596
        %v617 = vmul.f32 %v606, %v597
        %v618 = vmul.f32 %v610, %v598
        %v619 = vmul.f32 %v614, %v599
        %624 = vrot.lane.b32.xlu0 %v616, 96
        %v625 = vpop.permute.xlu0 %624
        %626 = vrot.lane.b32.xlu0 %v617, 96
        %v627 = vpop.permute.xlu0 %626
        %628 = vrot.lane.b32.xlu0 %v618, 96
        %v629 = vpop.permute.xlu0 %628
        %630 = vrot.lane.b32.xlu0 %v619, 96
        %v631 = vpop.permute.xlu0 %630
        %v636 = vadd.f32 %v553, %v625
        %v637 = vadd.f32 %v554, %v627
        %v638 = vadd.f32 %v555, %v629
        %v639 = vadd.f32 %v556, %v631
        %v640 = vlaneseq
        %v641 = vshrl.u32 %v640, 7
        %v642 = vsub.s32 3, %v641
        %v643 = vrot.slane %v369, %v642
        %645 = vrot.lane.b32.xlu0 %v643, 96
        %v646 = vpop.permute.xlu0 %645
        %v648 = vadd.f32 %v369, %v646
        %v649 = vadd.f32 %v374, %v646
        %v650 = vadd.f32 %v379, %v646
        %v651 = vadd.f32 %v384, %v646
        %v652 = vsub.f32 0.0, %v648
        %v653 = vsub.f32 0.0, %v649
        %v654 = vsub.f32 0.0, %v650
        %v655 = vsub.f32 0.0, %v651
        %v656 = vmul.f32 %v652, 1.442695
        %v657 = vpow.pop %v656
        %v658 = vmul.f32 %v653, 1.442695
        %v659 = vpow.pop %v658
        %v660 = vmul.f32 %v654, 1.442695
        %v661 = vpow.pop %v660
        %v662 = vmul.f32 %v655, 1.442695
        %v663 = vpow.pop %v662
        %v664 = vadd.f32 %v657, 1.0
        %v665 = vadd.f32 %v659, 1.0
        %v666 = vadd.f32 %v661, 1.0
        %v667 = vadd.f32 %v663, 1.0
        %v668 = vrcp.pop %v664
        %v669 = vmul.f32 1.0, %v668
        %v670 = vrcp.pop %v665
        %v671 = vmul.f32 1.0, %v670
        %v672 = vrcp.pop %v666
        %v673 = vmul.f32 1.0, %v672
        %v674 = vrcp.pop %v667
        %v675 = vmul.f32 1.0, %v674
        %676 = vrot.lane.b32.xlu0 %v643, 64
        %v677 = vpop.permute.xlu0 %676
        %v679 = vmul.f32 %v669, %v677
        %v680 = vmul.f32 %v671, %v677
        %v681 = vmul.f32 %v673, %v677
        %v682 = vmul.f32 %v675, %v677
        %683 = vset.pattern.permute.xlu0 3
        %684 = vperm.xlu0 %683, %v274
        %v685 = vpop.permute.xlu0 %684
        %687 = vset.pattern.permute.xlu0 3
        %688 = vperm.xlu0 %687, %v275
        %v689 = vpop.permute.xlu0 %688
        %691 = vset.pattern.permute.xlu0 3
        %692 = vperm.xlu0 %691, %v276
        %v693 = vpop.permute.xlu0 %692
        %695 = vset.pattern.permute.xlu0 3
        %696 = vperm.xlu0 %695, %v277
        %v697 = vpop.permute.xlu0 %696
        %v699 = vmul.f32 %v685, %v679
        %v700 = vmul.f32 %v689, %v680
        %v701 = vmul.f32 %v693, %v681
        %v702 = vmul.f32 %v697, %v682
        %707 = vrot.lane.b32.xlu0 %v699, 96
        %v708 = vpop.permute.xlu0 %707
        %709 = vrot.lane.b32.xlu0 %v700, 96
        %v710 = vpop.permute.xlu0 %709
        %711 = vrot.lane.b32.xlu0 %v701, 96
        %v712 = vpop.permute.xlu0 %711
        %713 = vrot.lane.b32.xlu0 %v702, 96
        %v714 = vpop.permute.xlu0 %713
        %v719 = vadd.f32 %v636, %v708
        %v720 = vadd.f32 %v637, %v710
        %v721 = vadd.f32 %v638, %v712
        %v722 = vadd.f32 %v639, %v714
        %v723 = vlaneseq
        %v724 = vshrl.u32 %v723, 7
        %v725 = vsub.s32 4, %v724
        %v726 = vrot.slane %v369, %v725
        %728 = vrot.lane.b32.xlu0 %v726, 96
        %v729 = vpop.permute.xlu0 %728
        %v731 = vadd.f32 %v369, %v729
        %v732 = vadd.f32 %v374, %v729
        %v733 = vadd.f32 %v379, %v729
        %v734 = vadd.f32 %v384, %v729
        %v735 = vsub.f32 0.0, %v731
        %v736 = vsub.f32 0.0, %v732
        %v737 = vsub.f32 0.0, %v733
        %v738 = vsub.f32 0.0, %v734
        %v739 = vmul.f32 %v735, 1.442695
        %v740 = vpow.pop %v739
        %v741 = vmul.f32 %v736, 1.442695
        %v742 = vpow.pop %v741
        %v743 = vmul.f32 %v737, 1.442695
        %v744 = vpow.pop %v743
        %v745 = vmul.f32 %v738, 1.442695
        %v746 = vpow.pop %v745
        %v747 = vadd.f32 %v740, 1.0
        %v748 = vadd.f32 %v742, 1.0
        %v749 = vadd.f32 %v744, 1.0
        %v750 = vadd.f32 %v746, 1.0
        %v751 = vrcp.pop %v747
        %v752 = vmul.f32 1.0, %v751
        %v753 = vrcp.pop %v748
        %v754 = vmul.f32 1.0, %v753
        %v755 = vrcp.pop %v749
        %v756 = vmul.f32 1.0, %v755
        %v757 = vrcp.pop %v750
        %v758 = vmul.f32 1.0, %v757
        %759 = vrot.lane.b32.xlu0 %v726, 64
        %v760 = vpop.permute.xlu0 %759
        %v762 = vmul.f32 %v752, %v760
        %v763 = vmul.f32 %v754, %v760
        %v764 = vmul.f32 %v756, %v760
        %v765 = vmul.f32 %v758, %v760
        %766 = vset.pattern.permute.xlu0 4
        %767 = vperm.xlu0 %766, %v274
        %v768 = vpop.permute.xlu0 %767
        %770 = vset.pattern.permute.xlu0 4
        %771 = vperm.xlu0 %770, %v275
        %v772 = vpop.permute.xlu0 %771
        %774 = vset.pattern.permute.xlu0 4
        %775 = vperm.xlu0 %774, %v276
        %v776 = vpop.permute.xlu0 %775
        %778 = vset.pattern.permute.xlu0 4
        %779 = vperm.xlu0 %778, %v277
        %v780 = vpop.permute.xlu0 %779
        %v782 = vmul.f32 %v768, %v762
        %v783 = vmul.f32 %v772, %v763
        %v784 = vmul.f32 %v776, %v764
        %v785 = vmul.f32 %v780, %v765
        %790 = vrot.lane.b32.xlu0 %v782, 96
        %v791 = vpop.permute.xlu0 %790
        %792 = vrot.lane.b32.xlu0 %v783, 96
        %v793 = vpop.permute.xlu0 %792
        %794 = vrot.lane.b32.xlu0 %v784, 96
        %v795 = vpop.permute.xlu0 %794
        %796 = vrot.lane.b32.xlu0 %v785, 96
        %v797 = vpop.permute.xlu0 %796
        %v802 = vadd.f32 %v719, %v791
        %v803 = vadd.f32 %v720, %v793
        %v804 = vadd.f32 %v721, %v795
        %v805 = vadd.f32 %v722, %v797
        %v806 = vlaneseq
        %v807 = vshrl.u32 %v806, 7
        %v808 = vsub.s32 5, %v807
        %v809 = vrot.slane %v369, %v808
        %811 = vrot.lane.b32.xlu0 %v809, 96
        %v812 = vpop.permute.xlu0 %811
        %v814 = vadd.f32 %v369, %v812
        %v815 = vadd.f32 %v374, %v812
        %v816 = vadd.f32 %v379, %v812
        %v817 = vadd.f32 %v384, %v812
        %v818 = vsub.f32 0.0, %v814
        %v819 = vsub.f32 0.0, %v815
        %v820 = vsub.f32 0.0, %v816
        %v821 = vsub.f32 0.0, %v817
        %v822 = vmul.f32 %v818, 1.442695
        %v823 = vpow.pop %v822
        %v824 = vmul.f32 %v819, 1.442695
        %v825 = vpow.pop %v824
        %v826 = vmul.f32 %v820, 1.442695
        %v827 = vpow.pop %v826
        %v828 = vmul.f32 %v821, 1.442695
        %v829 = vpow.pop %v828
        %v830 = vadd.f32 %v823, 1.0
        %v831 = vadd.f32 %v825, 1.0
        %v832 = vadd.f32 %v827, 1.0
        %v833 = vadd.f32 %v829, 1.0
        %v834 = vrcp.pop %v830
        %v835 = vmul.f32 1.0, %v834
        %v836 = vrcp.pop %v831
        %v837 = vmul.f32 1.0, %v836
        %v838 = vrcp.pop %v832
        %v839 = vmul.f32 1.0, %v838
        %v840 = vrcp.pop %v833
        %v841 = vmul.f32 1.0, %v840
        %842 = vrot.lane.b32.xlu0 %v809, 64
        %v843 = vpop.permute.xlu0 %842
        %v845 = vmul.f32 %v835, %v843
        %v846 = vmul.f32 %v837, %v843
        %v847 = vmul.f32 %v839, %v843
        %v848 = vmul.f32 %v841, %v843
        %849 = vset.pattern.permute.xlu0 5
        %850 = vperm.xlu0 %849, %v274
        %v851 = vpop.permute.xlu0 %850
        %853 = vset.pattern.permute.xlu0 5
        %854 = vperm.xlu0 %853, %v275
        %v855 = vpop.permute.xlu0 %854
        %857 = vset.pattern.permute.xlu0 5
        %858 = vperm.xlu0 %857, %v276
        %v859 = vpop.permute.xlu0 %858
        %861 = vset.pattern.permute.xlu0 5
        %862 = vperm.xlu0 %861, %v277
        %v863 = vpop.permute.xlu0 %862
        %v865 = vmul.f32 %v851, %v845
        %v866 = vmul.f32 %v855, %v846
        %v867 = vmul.f32 %v859, %v847
        %v868 = vmul.f32 %v863, %v848
        %873 = vrot.lane.b32.xlu0 %v865, 96
        %v874 = vpop.permute.xlu0 %873
        %875 = vrot.lane.b32.xlu0 %v866, 96
        %v876 = vpop.permute.xlu0 %875
        %877 = vrot.lane.b32.xlu0 %v867, 96
        %v878 = vpop.permute.xlu0 %877
        %879 = vrot.lane.b32.xlu0 %v868, 96
        %v880 = vpop.permute.xlu0 %879
        %v885 = vadd.f32 %v802, %v874
        %v886 = vadd.f32 %v803, %v876
        %v887 = vadd.f32 %v804, %v878
        %v888 = vadd.f32 %v805, %v880
        %v889 = vlaneseq
        %v890 = vshrl.u32 %v889, 7
        %v891 = vsub.s32 6, %v890
        %v892 = vrot.slane %v369, %v891
        %894 = vrot.lane.b32.xlu0 %v892, 96
        %v895 = vpop.permute.xlu0 %894
        %v897 = vadd.f32 %v369, %v895
        %v898 = vadd.f32 %v374, %v895
        %v899 = vadd.f32 %v379, %v895
        %v900 = vadd.f32 %v384, %v895
        %v901 = vsub.f32 0.0, %v897
        %v902 = vsub.f32 0.0, %v898
        %v903 = vsub.f32 0.0, %v899
        %v904 = vsub.f32 0.0, %v900
        %v905 = vmul.f32 %v901, 1.442695
        %v906 = vpow.pop %v905
        %v907 = vmul.f32 %v902, 1.442695
        %v908 = vpow.pop %v907
        %v909 = vmul.f32 %v903, 1.442695
        %v910 = vpow.pop %v909
        %v911 = vmul.f32 %v904, 1.442695
        %v912 = vpow.pop %v911
        %v913 = vadd.f32 %v906, 1.0
        %v914 = vadd.f32 %v908, 1.0
        %v915 = vadd.f32 %v910, 1.0
        %v916 = vadd.f32 %v912, 1.0
        %v917 = vrcp.pop %v913
        %v918 = vmul.f32 1.0, %v917
        %v919 = vrcp.pop %v914
        %v920 = vmul.f32 1.0, %v919
        %v921 = vrcp.pop %v915
        %v922 = vmul.f32 1.0, %v921
        %v923 = vrcp.pop %v916
        %v924 = vmul.f32 1.0, %v923
        %925 = vrot.lane.b32.xlu0 %v892, 64
        %v926 = vpop.permute.xlu0 %925
        %v928 = vmul.f32 %v918, %v926
        %v929 = vmul.f32 %v920, %v926
        %v930 = vmul.f32 %v922, %v926
        %v931 = vmul.f32 %v924, %v926
        %932 = vset.pattern.permute.xlu0 6
        %933 = vperm.xlu0 %932, %v274
        %v934 = vpop.permute.xlu0 %933
        %936 = vset.pattern.permute.xlu0 6
        %937 = vperm.xlu0 %936, %v275
        %v938 = vpop.permute.xlu0 %937
        %940 = vset.pattern.permute.xlu0 6
        %941 = vperm.xlu0 %940, %v276
        %v942 = vpop.permute.xlu0 %941
        %944 = vset.pattern.permute.xlu0 6
        %945 = vperm.xlu0 %944, %v277
        %v946 = vpop.permute.xlu0 %945
        %v948 = vmul.f32 %v934, %v928
        %v949 = vmul.f32 %v938, %v929
        %v950 = vmul.f32 %v942, %v930
        %v951 = vmul.f32 %v946, %v931
        %956 = vrot.lane.b32.xlu0 %v948, 96
        %v957 = vpop.permute.xlu0 %956
        %958 = vrot.lane.b32.xlu0 %v949, 96
        %v959 = vpop.permute.xlu0 %958
        %960 = vrot.lane.b32.xlu0 %v950, 96
        %v961 = vpop.permute.xlu0 %960
        %962 = vrot.lane.b32.xlu0 %v951, 96
        %v963 = vpop.permute.xlu0 %962
        %v968 = vadd.f32 %v885, %v957
        %v969 = vadd.f32 %v886, %v959
        %v970 = vadd.f32 %v887, %v961
        %v971 = vadd.f32 %v888, %v963
        %v972 = vlaneseq
        %v973 = vshrl.u32 %v972, 7
        %v974 = vsub.s32 7, %v973
        %v975 = vrot.slane %v369, %v974
        %977 = vrot.lane.b32.xlu0 %v975, 96
        %v978 = vpop.permute.xlu0 %977
        %v980 = vadd.f32 %v369, %v978
        %v981 = vadd.f32 %v374, %v978
        %v982 = vadd.f32 %v379, %v978
        %v983 = vadd.f32 %v384, %v978
        %v984 = vsub.f32 0.0, %v980
        %v985 = vsub.f32 0.0, %v981
        %v986 = vsub.f32 0.0, %v982
        %v987 = vsub.f32 0.0, %v983
        %v988 = vmul.f32 %v984, 1.442695
        %v989 = vpow.pop %v988
        %v990 = vmul.f32 %v985, 1.442695
        %v991 = vpow.pop %v990
        %v992 = vmul.f32 %v986, 1.442695
        %v993 = vpow.pop %v992
        %v994 = vmul.f32 %v987, 1.442695
        %v995 = vpow.pop %v994
        %v996 = vadd.f32 %v989, 1.0
        %v997 = vadd.f32 %v991, 1.0
        %v998 = vadd.f32 %v993, 1.0
        %v999 = vadd.f32 %v995, 1.0
        %v1000 = vrcp.pop %v996
        %v1001 = vmul.f32 1.0, %v1000
        %v1002 = vrcp.pop %v997
        %v1003 = vmul.f32 1.0, %v1002
        %v1004 = vrcp.pop %v998
        %v1005 = vmul.f32 1.0, %v1004
        %v1006 = vrcp.pop %v999
        %v1007 = vmul.f32 1.0, %v1006
        %1008 = vrot.lane.b32.xlu0 %v975, 64
        %v1009 = vpop.permute.xlu0 %1008
        %v1011 = vmul.f32 %v1001, %v1009
        %v1012 = vmul.f32 %v1003, %v1009
        %v1013 = vmul.f32 %v1005, %v1009
        %v1014 = vmul.f32 %v1007, %v1009
        %1015 = vset.pattern.permute.xlu0 7
        %1016 = vperm.xlu0 %1015, %v274
        %v1017 = vpop.permute.xlu0 %1016
        %1019 = vset.pattern.permute.xlu0 7
        %1020 = vperm.xlu0 %1019, %v275
        %v1021 = vpop.permute.xlu0 %1020
        %1023 = vset.pattern.permute.xlu0 7
        %1024 = vperm.xlu0 %1023, %v276
        %v1025 = vpop.permute.xlu0 %1024
        %1027 = vset.pattern.permute.xlu0 7
        %1028 = vperm.xlu0 %1027, %v277
        %v1029 = vpop.permute.xlu0 %1028
        %v1031 = vmul.f32 %v1017, %v1011
        %v1032 = vmul.f32 %v1021, %v1012
        %v1033 = vmul.f32 %v1025, %v1013
        %v1034 = vmul.f32 %v1029, %v1014
        %1039 = vrot.lane.b32.xlu0 %v1031, 96
        %v1040 = vpop.permute.xlu0 %1039
        %1041 = vrot.lane.b32.xlu0 %v1032, 96
        %v1042 = vpop.permute.xlu0 %1041
        %1043 = vrot.lane.b32.xlu0 %v1033, 96
        %v1044 = vpop.permute.xlu0 %1043
        %1045 = vrot.lane.b32.xlu0 %v1034, 96
        %v1046 = vpop.permute.xlu0 %1045
        %v1051 = vadd.f32 %v968, %v1040
        %v1052 = vadd.f32 %v969, %v1042
        %v1053 = vadd.f32 %v970, %v1044
        %v1054 = vadd.f32 %v971, %v1046
        %v1055 = vlaneseq
        %v1056 = vshrl.u32 %v1055, 7
        %v1057 = vsub.s32 0, %v1056
        %v1058 = vrot.slane %v374, %v1057
        %1060 = vrot.lane.b32.xlu0 %v1058, 96
        %v1061 = vpop.permute.xlu0 %1060
        %v1063 = vadd.f32 %v369, %v1061
        %v1064 = vadd.f32 %v374, %v1061
        %v1065 = vadd.f32 %v379, %v1061
        %v1066 = vadd.f32 %v384, %v1061
        %v1067 = vsub.f32 0.0, %v1063
        %v1068 = vsub.f32 0.0, %v1064
        %v1069 = vsub.f32 0.0, %v1065
        %v1070 = vsub.f32 0.0, %v1066
        %v1071 = vmul.f32 %v1067, 1.442695
        %v1072 = vpow.pop %v1071
        %v1073 = vmul.f32 %v1068, 1.442695
        %v1074 = vpow.pop %v1073
        %v1075 = vmul.f32 %v1069, 1.442695
        %v1076 = vpow.pop %v1075
        %v1077 = vmul.f32 %v1070, 1.442695
        %v1078 = vpow.pop %v1077
        %v1079 = vadd.f32 %v1072, 1.0
        %v1080 = vadd.f32 %v1074, 1.0
        %v1081 = vadd.f32 %v1076, 1.0
        %v1082 = vadd.f32 %v1078, 1.0
        %v1083 = vrcp.pop %v1079
        %v1084 = vmul.f32 1.0, %v1083
        %v1085 = vrcp.pop %v1080
        %v1086 = vmul.f32 1.0, %v1085
        %v1087 = vrcp.pop %v1081
        %v1088 = vmul.f32 1.0, %v1087
        %v1089 = vrcp.pop %v1082
        %v1090 = vmul.f32 1.0, %v1089
        %1091 = vrot.lane.b32.xlu0 %v1058, 64
        %v1092 = vpop.permute.xlu0 %1091
        %v1094 = vmul.f32 %v1084, %v1092
        %v1095 = vmul.f32 %v1086, %v1092
        %v1096 = vmul.f32 %v1088, %v1092
        %v1097 = vmul.f32 %v1090, %v1092
        %1098 = vset.pattern.permute.xlu0 8
        %1099 = vperm.xlu0 %1098, %v274
        %v1100 = vpop.permute.xlu0 %1099
        %1102 = vset.pattern.permute.xlu0 8
        %1103 = vperm.xlu0 %1102, %v275
        %v1104 = vpop.permute.xlu0 %1103
        %1106 = vset.pattern.permute.xlu0 8
        %1107 = vperm.xlu0 %1106, %v276
        %v1108 = vpop.permute.xlu0 %1107
        %1110 = vset.pattern.permute.xlu0 8
        %1111 = vperm.xlu0 %1110, %v277
        %v1112 = vpop.permute.xlu0 %1111
        %v1114 = vmul.f32 %v1100, %v1094
        %v1115 = vmul.f32 %v1104, %v1095
        %v1116 = vmul.f32 %v1108, %v1096
        %v1117 = vmul.f32 %v1112, %v1097
        %1122 = vrot.lane.b32.xlu0 %v1114, 96
        %v1123 = vpop.permute.xlu0 %1122
        %1124 = vrot.lane.b32.xlu0 %v1115, 96
        %v1125 = vpop.permute.xlu0 %1124
        %1126 = vrot.lane.b32.xlu0 %v1116, 96
        %v1127 = vpop.permute.xlu0 %1126
        %1128 = vrot.lane.b32.xlu0 %v1117, 96
        %v1129 = vpop.permute.xlu0 %1128
        %v1134 = vadd.f32 %v1051, %v1123
        %v1135 = vadd.f32 %v1052, %v1125
        %v1136 = vadd.f32 %v1053, %v1127
        %v1137 = vadd.f32 %v1054, %v1129
        %v1138 = vlaneseq
        %v1139 = vshrl.u32 %v1138, 7
        %v1140 = vsub.s32 1, %v1139
        %v1141 = vrot.slane %v374, %v1140
        %1143 = vrot.lane.b32.xlu0 %v1141, 96
        %v1144 = vpop.permute.xlu0 %1143
        %v1146 = vadd.f32 %v369, %v1144
        %v1147 = vadd.f32 %v374, %v1144
        %v1148 = vadd.f32 %v379, %v1144
        %v1149 = vadd.f32 %v384, %v1144
        %v1150 = vsub.f32 0.0, %v1146
        %v1151 = vsub.f32 0.0, %v1147
        %v1152 = vsub.f32 0.0, %v1148
        %v1153 = vsub.f32 0.0, %v1149
        %v1154 = vmul.f32 %v1150, 1.442695
        %v1155 = vpow.pop %v1154
        %v1156 = vmul.f32 %v1151, 1.442695
        %v1157 = vpow.pop %v1156
        %v1158 = vmul.f32 %v1152, 1.442695
        %v1159 = vpow.pop %v1158
        %v1160 = vmul.f32 %v1153, 1.442695
        %v1161 = vpow.pop %v1160
        %v1162 = vadd.f32 %v1155, 1.0
        %v1163 = vadd.f32 %v1157, 1.0
        %v1164 = vadd.f32 %v1159, 1.0
        %v1165 = vadd.f32 %v1161, 1.0
        %v1166 = vrcp.pop %v1162
        %v1167 = vmul.f32 1.0, %v1166
        %v1168 = vrcp.pop %v1163
        %v1169 = vmul.f32 1.0, %v1168
        %v1170 = vrcp.pop %v1164
        %v1171 = vmul.f32 1.0, %v1170
        %v1172 = vrcp.pop %v1165
        %v1173 = vmul.f32 1.0, %v1172
        %1174 = vrot.lane.b32.xlu0 %v1141, 64
        %v1175 = vpop.permute.xlu0 %1174
        %v1177 = vmul.f32 %v1167, %v1175
        %v1178 = vmul.f32 %v1169, %v1175
        %v1179 = vmul.f32 %v1171, %v1175
        %v1180 = vmul.f32 %v1173, %v1175
        %1181 = vset.pattern.permute.xlu0 9
        %1182 = vperm.xlu0 %1181, %v274
        %v1183 = vpop.permute.xlu0 %1182
        %1185 = vset.pattern.permute.xlu0 9
        %1186 = vperm.xlu0 %1185, %v275
        %v1187 = vpop.permute.xlu0 %1186
        %1189 = vset.pattern.permute.xlu0 9
        %1190 = vperm.xlu0 %1189, %v276
        %v1191 = vpop.permute.xlu0 %1190
        %1193 = vset.pattern.permute.xlu0 9
        %1194 = vperm.xlu0 %1193, %v277
        %v1195 = vpop.permute.xlu0 %1194
        %v1197 = vmul.f32 %v1183, %v1177
        %v1198 = vmul.f32 %v1187, %v1178
        %v1199 = vmul.f32 %v1191, %v1179
        %v1200 = vmul.f32 %v1195, %v1180
        %1205 = vrot.lane.b32.xlu0 %v1197, 96
        %v1206 = vpop.permute.xlu0 %1205
        %1207 = vrot.lane.b32.xlu0 %v1198, 96
        %v1208 = vpop.permute.xlu0 %1207
        %1209 = vrot.lane.b32.xlu0 %v1199, 96
        %v1210 = vpop.permute.xlu0 %1209
        %1211 = vrot.lane.b32.xlu0 %v1200, 96
        %v1212 = vpop.permute.xlu0 %1211
        %v1217 = vadd.f32 %v1134, %v1206
        %v1218 = vadd.f32 %v1135, %v1208
        %v1219 = vadd.f32 %v1136, %v1210
        %v1220 = vadd.f32 %v1137, %v1212
        %v1221 = vlaneseq
        %v1222 = vshrl.u32 %v1221, 7
        %v1223 = vsub.s32 2, %v1222
        %v1224 = vrot.slane %v374, %v1223
        %1226 = vrot.lane.b32.xlu0 %v1224, 96
        %v1227 = vpop.permute.xlu0 %1226
        %v1229 = vadd.f32 %v369, %v1227
        %v1230 = vadd.f32 %v374, %v1227
        %v1231 = vadd.f32 %v379, %v1227
        %v1232 = vadd.f32 %v384, %v1227
        %v1233 = vsub.f32 0.0, %v1229
        %v1234 = vsub.f32 0.0, %v1230
        %v1235 = vsub.f32 0.0, %v1231
        %v1236 = vsub.f32 0.0, %v1232
        %v1237 = vmul.f32 %v1233, 1.442695
        %v1238 = vpow.pop %v1237
        %v1239 = vmul.f32 %v1234, 1.442695
        %v1240 = vpow.pop %v1239
        %v1241 = vmul.f32 %v1235, 1.442695
        %v1242 = vpow.pop %v1241
        %v1243 = vmul.f32 %v1236, 1.442695
        %v1244 = vpow.pop %v1243
        %v1245 = vadd.f32 %v1238, 1.0
        %v1246 = vadd.f32 %v1240, 1.0
        %v1247 = vadd.f32 %v1242, 1.0
        %v1248 = vadd.f32 %v1244, 1.0
        %v1249 = vrcp.pop %v1245
        %v1250 = vmul.f32 1.0, %v1249
        %v1251 = vrcp.pop %v1246
        %v1252 = vmul.f32 1.0, %v1251
        %v1253 = vrcp.pop %v1247
        %v1254 = vmul.f32 1.0, %v1253
        %v1255 = vrcp.pop %v1248
        %v1256 = vmul.f32 1.0, %v1255
        %1257 = vrot.lane.b32.xlu0 %v1224, 64
        %v1258 = vpop.permute.xlu0 %1257
        %v1260 = vmul.f32 %v1250, %v1258
        %v1261 = vmul.f32 %v1252, %v1258
        %v1262 = vmul.f32 %v1254, %v1258
        %v1263 = vmul.f32 %v1256, %v1258
        %1264 = vset.pattern.permute.xlu0 10
        %1265 = vperm.xlu0 %1264, %v274
        %v1266 = vpop.permute.xlu0 %1265
        %1268 = vset.pattern.permute.xlu0 10
        %1269 = vperm.xlu0 %1268, %v275
        %v1270 = vpop.permute.xlu0 %1269
        %1272 = vset.pattern.permute.xlu0 10
        %1273 = vperm.xlu0 %1272, %v276
        %v1274 = vpop.permute.xlu0 %1273
        %1276 = vset.pattern.permute.xlu0 10
        %1277 = vperm.xlu0 %1276, %v277
        %v1278 = vpop.permute.xlu0 %1277
        %v1280 = vmul.f32 %v1266, %v1260
        %v1281 = vmul.f32 %v1270, %v1261
        %v1282 = vmul.f32 %v1274, %v1262
        %v1283 = vmul.f32 %v1278, %v1263
        %1288 = vrot.lane.b32.xlu0 %v1280, 96
        %v1289 = vpop.permute.xlu0 %1288
        %1290 = vrot.lane.b32.xlu0 %v1281, 96
        %v1291 = vpop.permute.xlu0 %1290
        %1292 = vrot.lane.b32.xlu0 %v1282, 96
        %v1293 = vpop.permute.xlu0 %1292
        %1294 = vrot.lane.b32.xlu0 %v1283, 96
        %v1295 = vpop.permute.xlu0 %1294
        %v1300 = vadd.f32 %v1217, %v1289
        %v1301 = vadd.f32 %v1218, %v1291
        %v1302 = vadd.f32 %v1219, %v1293
        %v1303 = vadd.f32 %v1220, %v1295
        %v1304 = vlaneseq
        %v1305 = vshrl.u32 %v1304, 7
        %v1306 = vsub.s32 3, %v1305
        %v1307 = vrot.slane %v374, %v1306
        %1309 = vrot.lane.b32.xlu0 %v1307, 96
        %v1310 = vpop.permute.xlu0 %1309
        %v1312 = vadd.f32 %v369, %v1310
        %v1313 = vadd.f32 %v374, %v1310
        %v1314 = vadd.f32 %v379, %v1310
        %v1315 = vadd.f32 %v384, %v1310
        %v1316 = vsub.f32 0.0, %v1312
        %v1317 = vsub.f32 0.0, %v1313
        %v1318 = vsub.f32 0.0, %v1314
        %v1319 = vsub.f32 0.0, %v1315
        %v1320 = vmul.f32 %v1316, 1.442695
        %v1321 = vpow.pop %v1320
        %v1322 = vmul.f32 %v1317, 1.442695
        %v1323 = vpow.pop %v1322
        %v1324 = vmul.f32 %v1318, 1.442695
        %v1325 = vpow.pop %v1324
        %v1326 = vmul.f32 %v1319, 1.442695
        %v1327 = vpow.pop %v1326
        %v1328 = vadd.f32 %v1321, 1.0
        %v1329 = vadd.f32 %v1323, 1.0
        %v1330 = vadd.f32 %v1325, 1.0
        %v1331 = vadd.f32 %v1327, 1.0
        %v1332 = vrcp.pop %v1328
        %v1333 = vmul.f32 1.0, %v1332
        %v1334 = vrcp.pop %v1329
        %v1335 = vmul.f32 1.0, %v1334
        %v1336 = vrcp.pop %v1330
        %v1337 = vmul.f32 1.0, %v1336
        %v1338 = vrcp.pop %v1331
        %v1339 = vmul.f32 1.0, %v1338
        %1340 = vrot.lane.b32.xlu0 %v1307, 64
        %v1341 = vpop.permute.xlu0 %1340
        %v1343 = vmul.f32 %v1333, %v1341
        %v1344 = vmul.f32 %v1335, %v1341
        %v1345 = vmul.f32 %v1337, %v1341
        %v1346 = vmul.f32 %v1339, %v1341
        %1347 = vset.pattern.permute.xlu0 11
        %1348 = vperm.xlu0 %1347, %v274
        %v1349 = vpop.permute.xlu0 %1348
        %1351 = vset.pattern.permute.xlu0 11
        %1352 = vperm.xlu0 %1351, %v275
        %v1353 = vpop.permute.xlu0 %1352
        %1355 = vset.pattern.permute.xlu0 11
        %1356 = vperm.xlu0 %1355, %v276
        %v1357 = vpop.permute.xlu0 %1356
        %1359 = vset.pattern.permute.xlu0 11
        %1360 = vperm.xlu0 %1359, %v277
        %v1361 = vpop.permute.xlu0 %1360
        %v1363 = vmul.f32 %v1349, %v1343
        %v1364 = vmul.f32 %v1353, %v1344
        %v1365 = vmul.f32 %v1357, %v1345
        %v1366 = vmul.f32 %v1361, %v1346
        %1371 = vrot.lane.b32.xlu0 %v1363, 96
        %v1372 = vpop.permute.xlu0 %1371
        %1373 = vrot.lane.b32.xlu0 %v1364, 96
        %v1374 = vpop.permute.xlu0 %1373
        %1375 = vrot.lane.b32.xlu0 %v1365, 96
        %v1376 = vpop.permute.xlu0 %1375
        %1377 = vrot.lane.b32.xlu0 %v1366, 96
        %v1378 = vpop.permute.xlu0 %1377
        %v1383 = vadd.f32 %v1300, %v1372
        %v1384 = vadd.f32 %v1301, %v1374
        %v1385 = vadd.f32 %v1302, %v1376
        %v1386 = vadd.f32 %v1303, %v1378
        %v1387 = vlaneseq
        %v1388 = vshrl.u32 %v1387, 7
        %v1389 = vsub.s32 4, %v1388
        %v1390 = vrot.slane %v374, %v1389
        %1392 = vrot.lane.b32.xlu0 %v1390, 96
        %v1393 = vpop.permute.xlu0 %1392
        %v1395 = vadd.f32 %v369, %v1393
        %v1396 = vadd.f32 %v374, %v1393
        %v1397 = vadd.f32 %v379, %v1393
        %v1398 = vadd.f32 %v384, %v1393
        %v1399 = vsub.f32 0.0, %v1395
        %v1400 = vsub.f32 0.0, %v1396
        %v1401 = vsub.f32 0.0, %v1397
        %v1402 = vsub.f32 0.0, %v1398
        %v1403 = vmul.f32 %v1399, 1.442695
        %v1404 = vpow.pop %v1403
        %v1405 = vmul.f32 %v1400, 1.442695
        %v1406 = vpow.pop %v1405
        %v1407 = vmul.f32 %v1401, 1.442695
        %v1408 = vpow.pop %v1407
        %v1409 = vmul.f32 %v1402, 1.442695
        %v1410 = vpow.pop %v1409
        %v1411 = vadd.f32 %v1404, 1.0
        %v1412 = vadd.f32 %v1406, 1.0
        %v1413 = vadd.f32 %v1408, 1.0
        %v1414 = vadd.f32 %v1410, 1.0
        %v1415 = vrcp.pop %v1411
        %v1416 = vmul.f32 1.0, %v1415
        %v1417 = vrcp.pop %v1412
        %v1418 = vmul.f32 1.0, %v1417
        %v1419 = vrcp.pop %v1413
        %v1420 = vmul.f32 1.0, %v1419
        %v1421 = vrcp.pop %v1414
        %v1422 = vmul.f32 1.0, %v1421
        %1423 = vrot.lane.b32.xlu0 %v1390, 64
        %v1424 = vpop.permute.xlu0 %1423
        %v1426 = vmul.f32 %v1416, %v1424
        %v1427 = vmul.f32 %v1418, %v1424
        %v1428 = vmul.f32 %v1420, %v1424
        %v1429 = vmul.f32 %v1422, %v1424
        %1430 = vset.pattern.permute.xlu0 12
        %1431 = vperm.xlu0 %1430, %v274
        %v1432 = vpop.permute.xlu0 %1431
        %1434 = vset.pattern.permute.xlu0 12
        %1435 = vperm.xlu0 %1434, %v275
        %v1436 = vpop.permute.xlu0 %1435
        %1438 = vset.pattern.permute.xlu0 12
        %1439 = vperm.xlu0 %1438, %v276
        %v1440 = vpop.permute.xlu0 %1439
        %1442 = vset.pattern.permute.xlu0 12
        %1443 = vperm.xlu0 %1442, %v277
        %v1444 = vpop.permute.xlu0 %1443
        %v1446 = vmul.f32 %v1432, %v1426
        %v1447 = vmul.f32 %v1436, %v1427
        %v1448 = vmul.f32 %v1440, %v1428
        %v1449 = vmul.f32 %v1444, %v1429
        %1454 = vrot.lane.b32.xlu0 %v1446, 96
        %v1455 = vpop.permute.xlu0 %1454
        %1456 = vrot.lane.b32.xlu0 %v1447, 96
        %v1457 = vpop.permute.xlu0 %1456
        %1458 = vrot.lane.b32.xlu0 %v1448, 96
        %v1459 = vpop.permute.xlu0 %1458
        %1460 = vrot.lane.b32.xlu0 %v1449, 96
        %v1461 = vpop.permute.xlu0 %1460
        %v1466 = vadd.f32 %v1383, %v1455
        %v1467 = vadd.f32 %v1384, %v1457
        %v1468 = vadd.f32 %v1385, %v1459
        %v1469 = vadd.f32 %v1386, %v1461
        %v1470 = vlaneseq
        %v1471 = vshrl.u32 %v1470, 7
        %v1472 = vsub.s32 5, %v1471
        %v1473 = vrot.slane %v374, %v1472
        %1475 = vrot.lane.b32.xlu0 %v1473, 96
        %v1476 = vpop.permute.xlu0 %1475
        %v1478 = vadd.f32 %v369, %v1476
        %v1479 = vadd.f32 %v374, %v1476
        %v1480 = vadd.f32 %v379, %v1476
        %v1481 = vadd.f32 %v384, %v1476
        %v1482 = vsub.f32 0.0, %v1478
        %v1483 = vsub.f32 0.0, %v1479
        %v1484 = vsub.f32 0.0, %v1480
        %v1485 = vsub.f32 0.0, %v1481
        %v1486 = vmul.f32 %v1482, 1.442695
        %v1487 = vpow.pop %v1486
        %v1488 = vmul.f32 %v1483, 1.442695
        %v1489 = vpow.pop %v1488
        %v1490 = vmul.f32 %v1484, 1.442695
        %v1491 = vpow.pop %v1490
        %v1492 = vmul.f32 %v1485, 1.442695
        %v1493 = vpow.pop %v1492
        %v1494 = vadd.f32 %v1487, 1.0
        %v1495 = vadd.f32 %v1489, 1.0
        %v1496 = vadd.f32 %v1491, 1.0
        %v1497 = vadd.f32 %v1493, 1.0
        %v1498 = vrcp.pop %v1494
        %v1499 = vmul.f32 1.0, %v1498
        %v1500 = vrcp.pop %v1495
        %v1501 = vmul.f32 1.0, %v1500
        %v1502 = vrcp.pop %v1496
        %v1503 = vmul.f32 1.0, %v1502
        %v1504 = vrcp.pop %v1497
        %v1505 = vmul.f32 1.0, %v1504
        %1506 = vrot.lane.b32.xlu0 %v1473, 64
        %v1507 = vpop.permute.xlu0 %1506
        %v1509 = vmul.f32 %v1499, %v1507
        %v1510 = vmul.f32 %v1501, %v1507
        %v1511 = vmul.f32 %v1503, %v1507
        %v1512 = vmul.f32 %v1505, %v1507
        %1513 = vset.pattern.permute.xlu0 13
        %1514 = vperm.xlu0 %1513, %v274
        %v1515 = vpop.permute.xlu0 %1514
        %1517 = vset.pattern.permute.xlu0 13
        %1518 = vperm.xlu0 %1517, %v275
        %v1519 = vpop.permute.xlu0 %1518
        %1521 = vset.pattern.permute.xlu0 13
        %1522 = vperm.xlu0 %1521, %v276
        %v1523 = vpop.permute.xlu0 %1522
        %1525 = vset.pattern.permute.xlu0 13
        %1526 = vperm.xlu0 %1525, %v277
        %v1527 = vpop.permute.xlu0 %1526
        %v1529 = vmul.f32 %v1515, %v1509
        %v1530 = vmul.f32 %v1519, %v1510
        %v1531 = vmul.f32 %v1523, %v1511
        %v1532 = vmul.f32 %v1527, %v1512
        %1537 = vrot.lane.b32.xlu0 %v1529, 96
        %v1538 = vpop.permute.xlu0 %1537
        %1539 = vrot.lane.b32.xlu0 %v1530, 96
        %v1540 = vpop.permute.xlu0 %1539
        %1541 = vrot.lane.b32.xlu0 %v1531, 96
        %v1542 = vpop.permute.xlu0 %1541
        %1543 = vrot.lane.b32.xlu0 %v1532, 96
        %v1544 = vpop.permute.xlu0 %1543
        %v1549 = vadd.f32 %v1466, %v1538
        %v1550 = vadd.f32 %v1467, %v1540
        %v1551 = vadd.f32 %v1468, %v1542
        %v1552 = vadd.f32 %v1469, %v1544
        %v1553 = vlaneseq
        %v1554 = vshrl.u32 %v1553, 7
        %v1555 = vsub.s32 6, %v1554
        %v1556 = vrot.slane %v374, %v1555
        %1558 = vrot.lane.b32.xlu0 %v1556, 96
        %v1559 = vpop.permute.xlu0 %1558
        %v1561 = vadd.f32 %v369, %v1559
        %v1562 = vadd.f32 %v374, %v1559
        %v1563 = vadd.f32 %v379, %v1559
        %v1564 = vadd.f32 %v384, %v1559
        %v1565 = vsub.f32 0.0, %v1561
        %v1566 = vsub.f32 0.0, %v1562
        %v1567 = vsub.f32 0.0, %v1563
        %v1568 = vsub.f32 0.0, %v1564
        %v1569 = vmul.f32 %v1565, 1.442695
        %v1570 = vpow.pop %v1569
        %v1571 = vmul.f32 %v1566, 1.442695
        %v1572 = vpow.pop %v1571
        %v1573 = vmul.f32 %v1567, 1.442695
        %v1574 = vpow.pop %v1573
        %v1575 = vmul.f32 %v1568, 1.442695
        %v1576 = vpow.pop %v1575
        %v1577 = vadd.f32 %v1570, 1.0
        %v1578 = vadd.f32 %v1572, 1.0
        %v1579 = vadd.f32 %v1574, 1.0
        %v1580 = vadd.f32 %v1576, 1.0
        %v1581 = vrcp.pop %v1577
        %v1582 = vmul.f32 1.0, %v1581
        %v1583 = vrcp.pop %v1578
        %v1584 = vmul.f32 1.0, %v1583
        %v1585 = vrcp.pop %v1579
        %v1586 = vmul.f32 1.0, %v1585
        %v1587 = vrcp.pop %v1580
        %v1588 = vmul.f32 1.0, %v1587
        %1589 = vrot.lane.b32.xlu0 %v1556, 64
        %v1590 = vpop.permute.xlu0 %1589
        %v1592 = vmul.f32 %v1582, %v1590
        %v1593 = vmul.f32 %v1584, %v1590
        %v1594 = vmul.f32 %v1586, %v1590
        %v1595 = vmul.f32 %v1588, %v1590
        %1596 = vset.pattern.permute.xlu0 14
        %1597 = vperm.xlu0 %1596, %v274
        %v1598 = vpop.permute.xlu0 %1597
        %1600 = vset.pattern.permute.xlu0 14
        %1601 = vperm.xlu0 %1600, %v275
        %v1602 = vpop.permute.xlu0 %1601
        %1604 = vset.pattern.permute.xlu0 14
        %1605 = vperm.xlu0 %1604, %v276
        %v1606 = vpop.permute.xlu0 %1605
        %1608 = vset.pattern.permute.xlu0 14
        %1609 = vperm.xlu0 %1608, %v277
        %v1610 = vpop.permute.xlu0 %1609
        %v1612 = vmul.f32 %v1598, %v1592
        %v1613 = vmul.f32 %v1602, %v1593
        %v1614 = vmul.f32 %v1606, %v1594
        %v1615 = vmul.f32 %v1610, %v1595
        %1620 = vrot.lane.b32.xlu0 %v1612, 96
        %v1621 = vpop.permute.xlu0 %1620
        %1622 = vrot.lane.b32.xlu0 %v1613, 96
        %v1623 = vpop.permute.xlu0 %1622
        %1624 = vrot.lane.b32.xlu0 %v1614, 96
        %v1625 = vpop.permute.xlu0 %1624
        %1626 = vrot.lane.b32.xlu0 %v1615, 96
        %v1627 = vpop.permute.xlu0 %1626
        %v1632 = vadd.f32 %v1549, %v1621
        %v1633 = vadd.f32 %v1550, %v1623
        %v1634 = vadd.f32 %v1551, %v1625
        %v1635 = vadd.f32 %v1552, %v1627
        %v1636 = vlaneseq
        %v1637 = vshrl.u32 %v1636, 7
        %v1638 = vsub.s32 7, %v1637
        %v1639 = vrot.slane %v374, %v1638
        %1641 = vrot.lane.b32.xlu0 %v1639, 96
        %v1642 = vpop.permute.xlu0 %1641
        %v1644 = vadd.f32 %v369, %v1642
        %v1645 = vadd.f32 %v374, %v1642
        %v1646 = vadd.f32 %v379, %v1642
        %v1647 = vadd.f32 %v384, %v1642
        %v1648 = vsub.f32 0.0, %v1644
        %v1649 = vsub.f32 0.0, %v1645
        %v1650 = vsub.f32 0.0, %v1646
        %v1651 = vsub.f32 0.0, %v1647
        %v1652 = vmul.f32 %v1648, 1.442695
        %v1653 = vpow.pop %v1652
        %v1654 = vmul.f32 %v1649, 1.442695
        %v1655 = vpow.pop %v1654
        %v1656 = vmul.f32 %v1650, 1.442695
        %v1657 = vpow.pop %v1656
        %v1658 = vmul.f32 %v1651, 1.442695
        %v1659 = vpow.pop %v1658
        %v1660 = vadd.f32 %v1653, 1.0
        %v1661 = vadd.f32 %v1655, 1.0
        %v1662 = vadd.f32 %v1657, 1.0
        %v1663 = vadd.f32 %v1659, 1.0
        %v1664 = vrcp.pop %v1660
        %v1665 = vmul.f32 1.0, %v1664
        %v1666 = vrcp.pop %v1661
        %v1667 = vmul.f32 1.0, %v1666
        %v1668 = vrcp.pop %v1662
        %v1669 = vmul.f32 1.0, %v1668
        %v1670 = vrcp.pop %v1663
        %v1671 = vmul.f32 1.0, %v1670
        %1672 = vrot.lane.b32.xlu0 %v1639, 64
        %v1673 = vpop.permute.xlu0 %1672
        %v1675 = vmul.f32 %v1665, %v1673
        %v1676 = vmul.f32 %v1667, %v1673
        %v1677 = vmul.f32 %v1669, %v1673
        %v1678 = vmul.f32 %v1671, %v1673
        %1679 = vset.pattern.permute.xlu0 15
        %1680 = vperm.xlu0 %1679, %v274
        %v1681 = vpop.permute.xlu0 %1680
        %1683 = vset.pattern.permute.xlu0 15
        %1684 = vperm.xlu0 %1683, %v275
        %v1685 = vpop.permute.xlu0 %1684
        %1687 = vset.pattern.permute.xlu0 15
        %1688 = vperm.xlu0 %1687, %v276
        %v1689 = vpop.permute.xlu0 %1688
        %1691 = vset.pattern.permute.xlu0 15
        %1692 = vperm.xlu0 %1691, %v277
        %v1693 = vpop.permute.xlu0 %1692
        %v1695 = vmul.f32 %v1681, %v1675
        %v1696 = vmul.f32 %v1685, %v1676
        %v1697 = vmul.f32 %v1689, %v1677
        %v1698 = vmul.f32 %v1693, %v1678
        %1703 = vrot.lane.b32.xlu0 %v1695, 96
        %v1704 = vpop.permute.xlu0 %1703
        %1705 = vrot.lane.b32.xlu0 %v1696, 96
        %v1706 = vpop.permute.xlu0 %1705
        %1707 = vrot.lane.b32.xlu0 %v1697, 96
        %v1708 = vpop.permute.xlu0 %1707
        %1709 = vrot.lane.b32.xlu0 %v1698, 96
        %v1710 = vpop.permute.xlu0 %1709
        %v1715 = vadd.f32 %v1632, %v1704
        %v1716 = vadd.f32 %v1633, %v1706
        %v1717 = vadd.f32 %v1634, %v1708
        %v1718 = vadd.f32 %v1635, %v1710
        %v1719 = vlaneseq
        %v1720 = vshrl.u32 %v1719, 7
        %v1721 = vsub.s32 0, %v1720
        %v1722 = vrot.slane %v379, %v1721
        %1724 = vrot.lane.b32.xlu0 %v1722, 96
        %v1725 = vpop.permute.xlu0 %1724
        %v1727 = vadd.f32 %v369, %v1725
        %v1728 = vadd.f32 %v374, %v1725
        %v1729 = vadd.f32 %v379, %v1725
        %v1730 = vadd.f32 %v384, %v1725
        %v1731 = vsub.f32 0.0, %v1727
        %v1732 = vsub.f32 0.0, %v1728
        %v1733 = vsub.f32 0.0, %v1729
        %v1734 = vsub.f32 0.0, %v1730
        %v1735 = vmul.f32 %v1731, 1.442695
        %v1736 = vpow.pop %v1735
        %v1737 = vmul.f32 %v1732, 1.442695
        %v1738 = vpow.pop %v1737
        %v1739 = vmul.f32 %v1733, 1.442695
        %v1740 = vpow.pop %v1739
        %v1741 = vmul.f32 %v1734, 1.442695
        %v1742 = vpow.pop %v1741
        %v1743 = vadd.f32 %v1736, 1.0
        %v1744 = vadd.f32 %v1738, 1.0
        %v1745 = vadd.f32 %v1740, 1.0
        %v1746 = vadd.f32 %v1742, 1.0
        %v1747 = vrcp.pop %v1743
        %v1748 = vmul.f32 1.0, %v1747
        %v1749 = vrcp.pop %v1744
        %v1750 = vmul.f32 1.0, %v1749
        %v1751 = vrcp.pop %v1745
        %v1752 = vmul.f32 1.0, %v1751
        %v1753 = vrcp.pop %v1746
        %v1754 = vmul.f32 1.0, %v1753
        %1755 = vrot.lane.b32.xlu0 %v1722, 64
        %v1756 = vpop.permute.xlu0 %1755
        %v1758 = vmul.f32 %v1748, %v1756
        %v1759 = vmul.f32 %v1750, %v1756
        %v1760 = vmul.f32 %v1752, %v1756
        %v1761 = vmul.f32 %v1754, %v1756
        %1762 = vset.pattern.permute.xlu0 16
        %1763 = vperm.xlu0 %1762, %v274
        %v1764 = vpop.permute.xlu0 %1763
        %1766 = vset.pattern.permute.xlu0 16
        %1767 = vperm.xlu0 %1766, %v275
        %v1768 = vpop.permute.xlu0 %1767
        %1770 = vset.pattern.permute.xlu0 16
        %1771 = vperm.xlu0 %1770, %v276
        %v1772 = vpop.permute.xlu0 %1771
        %1774 = vset.pattern.permute.xlu0 16
        %1775 = vperm.xlu0 %1774, %v277
        %v1776 = vpop.permute.xlu0 %1775
        %v1778 = vmul.f32 %v1764, %v1758
        %v1779 = vmul.f32 %v1768, %v1759
        %v1780 = vmul.f32 %v1772, %v1760
        %v1781 = vmul.f32 %v1776, %v1761
        %1786 = vrot.lane.b32.xlu0 %v1778, 96
        %v1787 = vpop.permute.xlu0 %1786
        %1788 = vrot.lane.b32.xlu0 %v1779, 96
        %v1789 = vpop.permute.xlu0 %1788
        %1790 = vrot.lane.b32.xlu0 %v1780, 96
        %v1791 = vpop.permute.xlu0 %1790
        %1792 = vrot.lane.b32.xlu0 %v1781, 96
        %v1793 = vpop.permute.xlu0 %1792
        %v1798 = vadd.f32 %v1715, %v1787
        %v1799 = vadd.f32 %v1716, %v1789
        %v1800 = vadd.f32 %v1717, %v1791
        %v1801 = vadd.f32 %v1718, %v1793
        %v1802 = vlaneseq
        %v1803 = vshrl.u32 %v1802, 7
        %v1804 = vsub.s32 1, %v1803
        %v1805 = vrot.slane %v379, %v1804
        %1807 = vrot.lane.b32.xlu0 %v1805, 96
        %v1808 = vpop.permute.xlu0 %1807
        %v1810 = vadd.f32 %v369, %v1808
        %v1811 = vadd.f32 %v374, %v1808
        %v1812 = vadd.f32 %v379, %v1808
        %v1813 = vadd.f32 %v384, %v1808
        %v1814 = vsub.f32 0.0, %v1810
        %v1815 = vsub.f32 0.0, %v1811
        %v1816 = vsub.f32 0.0, %v1812
        %v1817 = vsub.f32 0.0, %v1813
        %v1818 = vmul.f32 %v1814, 1.442695
        %v1819 = vpow.pop %v1818
        %v1820 = vmul.f32 %v1815, 1.442695
        %v1821 = vpow.pop %v1820
        %v1822 = vmul.f32 %v1816, 1.442695
        %v1823 = vpow.pop %v1822
        %v1824 = vmul.f32 %v1817, 1.442695
        %v1825 = vpow.pop %v1824
        %v1826 = vadd.f32 %v1819, 1.0
        %v1827 = vadd.f32 %v1821, 1.0
        %v1828 = vadd.f32 %v1823, 1.0
        %v1829 = vadd.f32 %v1825, 1.0
        %v1830 = vrcp.pop %v1826
        %v1831 = vmul.f32 1.0, %v1830
        %v1832 = vrcp.pop %v1827
        %v1833 = vmul.f32 1.0, %v1832
        %v1834 = vrcp.pop %v1828
        %v1835 = vmul.f32 1.0, %v1834
        %v1836 = vrcp.pop %v1829
        %v1837 = vmul.f32 1.0, %v1836
        %1838 = vrot.lane.b32.xlu0 %v1805, 64
        %v1839 = vpop.permute.xlu0 %1838
        %v1841 = vmul.f32 %v1831, %v1839
        %v1842 = vmul.f32 %v1833, %v1839
        %v1843 = vmul.f32 %v1835, %v1839
        %v1844 = vmul.f32 %v1837, %v1839
        %1845 = vset.pattern.permute.xlu0 17
        %1846 = vperm.xlu0 %1845, %v274
        %v1847 = vpop.permute.xlu0 %1846
        %1849 = vset.pattern.permute.xlu0 17
        %1850 = vperm.xlu0 %1849, %v275
        %v1851 = vpop.permute.xlu0 %1850
        %1853 = vset.pattern.permute.xlu0 17
        %1854 = vperm.xlu0 %1853, %v276
        %v1855 = vpop.permute.xlu0 %1854
        %1857 = vset.pattern.permute.xlu0 17
        %1858 = vperm.xlu0 %1857, %v277
        %v1859 = vpop.permute.xlu0 %1858
        %v1861 = vmul.f32 %v1847, %v1841
        %v1862 = vmul.f32 %v1851, %v1842
        %v1863 = vmul.f32 %v1855, %v1843
        %v1864 = vmul.f32 %v1859, %v1844
        %1869 = vrot.lane.b32.xlu0 %v1861, 96
        %v1870 = vpop.permute.xlu0 %1869
        %1871 = vrot.lane.b32.xlu0 %v1862, 96
        %v1872 = vpop.permute.xlu0 %1871
        %1873 = vrot.lane.b32.xlu0 %v1863, 96
        %v1874 = vpop.permute.xlu0 %1873
        %1875 = vrot.lane.b32.xlu0 %v1864, 96
        %v1876 = vpop.permute.xlu0 %1875
        %v1881 = vadd.f32 %v1798, %v1870
        %v1882 = vadd.f32 %v1799, %v1872
        %v1883 = vadd.f32 %v1800, %v1874
        %v1884 = vadd.f32 %v1801, %v1876
        %v1885 = vlaneseq
        %v1886 = vshrl.u32 %v1885, 7
        %v1887 = vsub.s32 2, %v1886
        %v1888 = vrot.slane %v379, %v1887
        %1890 = vrot.lane.b32.xlu0 %v1888, 96
        %v1891 = vpop.permute.xlu0 %1890
        %v1893 = vadd.f32 %v369, %v1891
        %v1894 = vadd.f32 %v374, %v1891
        %v1895 = vadd.f32 %v379, %v1891
        %v1896 = vadd.f32 %v384, %v1891
        %v1897 = vsub.f32 0.0, %v1893
        %v1898 = vsub.f32 0.0, %v1894
        %v1899 = vsub.f32 0.0, %v1895
        %v1900 = vsub.f32 0.0, %v1896
        %v1901 = vmul.f32 %v1897, 1.442695
        %v1902 = vpow.pop %v1901
        %v1903 = vmul.f32 %v1898, 1.442695
        %v1904 = vpow.pop %v1903
        %v1905 = vmul.f32 %v1899, 1.442695
        %v1906 = vpow.pop %v1905
        %v1907 = vmul.f32 %v1900, 1.442695
        %v1908 = vpow.pop %v1907
        %v1909 = vadd.f32 %v1902, 1.0
        %v1910 = vadd.f32 %v1904, 1.0
        %v1911 = vadd.f32 %v1906, 1.0
        %v1912 = vadd.f32 %v1908, 1.0
        %v1913 = vrcp.pop %v1909
        %v1914 = vmul.f32 1.0, %v1913
        %v1915 = vrcp.pop %v1910
        %v1916 = vmul.f32 1.0, %v1915
        %v1917 = vrcp.pop %v1911
        %v1918 = vmul.f32 1.0, %v1917
        %v1919 = vrcp.pop %v1912
        %v1920 = vmul.f32 1.0, %v1919
        %1921 = vrot.lane.b32.xlu0 %v1888, 64
        %v1922 = vpop.permute.xlu0 %1921
        %v1924 = vmul.f32 %v1914, %v1922
        %v1925 = vmul.f32 %v1916, %v1922
        %v1926 = vmul.f32 %v1918, %v1922
        %v1927 = vmul.f32 %v1920, %v1922
        %1928 = vset.pattern.permute.xlu0 18
        %1929 = vperm.xlu0 %1928, %v274
        %v1930 = vpop.permute.xlu0 %1929
        %1932 = vset.pattern.permute.xlu0 18
        %1933 = vperm.xlu0 %1932, %v275
        %v1934 = vpop.permute.xlu0 %1933
        %1936 = vset.pattern.permute.xlu0 18
        %1937 = vperm.xlu0 %1936, %v276
        %v1938 = vpop.permute.xlu0 %1937
        %1940 = vset.pattern.permute.xlu0 18
        %1941 = vperm.xlu0 %1940, %v277
        %v1942 = vpop.permute.xlu0 %1941
        %v1944 = vmul.f32 %v1930, %v1924
        %v1945 = vmul.f32 %v1934, %v1925
        %v1946 = vmul.f32 %v1938, %v1926
        %v1947 = vmul.f32 %v1942, %v1927
        %1952 = vrot.lane.b32.xlu0 %v1944, 96
        %v1953 = vpop.permute.xlu0 %1952
        %1954 = vrot.lane.b32.xlu0 %v1945, 96
        %v1955 = vpop.permute.xlu0 %1954
        %1956 = vrot.lane.b32.xlu0 %v1946, 96
        %v1957 = vpop.permute.xlu0 %1956
        %1958 = vrot.lane.b32.xlu0 %v1947, 96
        %v1959 = vpop.permute.xlu0 %1958
        %v1964 = vadd.f32 %v1881, %v1953
        %v1965 = vadd.f32 %v1882, %v1955
        %v1966 = vadd.f32 %v1883, %v1957
        %v1967 = vadd.f32 %v1884, %v1959
        %v1968 = vlaneseq
        %v1969 = vshrl.u32 %v1968, 7
        %v1970 = vsub.s32 3, %v1969
        %v1971 = vrot.slane %v379, %v1970
        %1973 = vrot.lane.b32.xlu0 %v1971, 96
        %v1974 = vpop.permute.xlu0 %1973
        %v1976 = vadd.f32 %v369, %v1974
        %v1977 = vadd.f32 %v374, %v1974
        %v1978 = vadd.f32 %v379, %v1974
        %v1979 = vadd.f32 %v384, %v1974
        %v1980 = vsub.f32 0.0, %v1976
        %v1981 = vsub.f32 0.0, %v1977
        %v1982 = vsub.f32 0.0, %v1978
        %v1983 = vsub.f32 0.0, %v1979
        %v1984 = vmul.f32 %v1980, 1.442695
        %v1985 = vpow.pop %v1984
        %v1986 = vmul.f32 %v1981, 1.442695
        %v1987 = vpow.pop %v1986
        %v1988 = vmul.f32 %v1982, 1.442695
        %v1989 = vpow.pop %v1988
        %v1990 = vmul.f32 %v1983, 1.442695
        %v1991 = vpow.pop %v1990
        %v1992 = vadd.f32 %v1985, 1.0
        %v1993 = vadd.f32 %v1987, 1.0
        %v1994 = vadd.f32 %v1989, 1.0
        %v1995 = vadd.f32 %v1991, 1.0
        %v1996 = vrcp.pop %v1992
        %v1997 = vmul.f32 1.0, %v1996
        %v1998 = vrcp.pop %v1993
        %v1999 = vmul.f32 1.0, %v1998
        %v2000 = vrcp.pop %v1994
        %v2001 = vmul.f32 1.0, %v2000
        %v2002 = vrcp.pop %v1995
        %v2003 = vmul.f32 1.0, %v2002
        %2004 = vrot.lane.b32.xlu0 %v1971, 64
        %v2005 = vpop.permute.xlu0 %2004
        %v2007 = vmul.f32 %v1997, %v2005
        %v2008 = vmul.f32 %v1999, %v2005
        %v2009 = vmul.f32 %v2001, %v2005
        %v2010 = vmul.f32 %v2003, %v2005
        %2011 = vset.pattern.permute.xlu0 19
        %2012 = vperm.xlu0 %2011, %v274
        %v2013 = vpop.permute.xlu0 %2012
        %2015 = vset.pattern.permute.xlu0 19
        %2016 = vperm.xlu0 %2015, %v275
        %v2017 = vpop.permute.xlu0 %2016
        %2019 = vset.pattern.permute.xlu0 19
        %2020 = vperm.xlu0 %2019, %v276
        %v2021 = vpop.permute.xlu0 %2020
        %2023 = vset.pattern.permute.xlu0 19
        %2024 = vperm.xlu0 %2023, %v277
        %v2025 = vpop.permute.xlu0 %2024
        %v2027 = vmul.f32 %v2013, %v2007
        %v2028 = vmul.f32 %v2017, %v2008
        %v2029 = vmul.f32 %v2021, %v2009
        %v2030 = vmul.f32 %v2025, %v2010
        %2035 = vrot.lane.b32.xlu0 %v2027, 96
        %v2036 = vpop.permute.xlu0 %2035
        %2037 = vrot.lane.b32.xlu0 %v2028, 96
        %v2038 = vpop.permute.xlu0 %2037
        %2039 = vrot.lane.b32.xlu0 %v2029, 96
        %v2040 = vpop.permute.xlu0 %2039
        %2041 = vrot.lane.b32.xlu0 %v2030, 96
        %v2042 = vpop.permute.xlu0 %2041
        %v2047 = vadd.f32 %v1964, %v2036
        %v2048 = vadd.f32 %v1965, %v2038
        %v2049 = vadd.f32 %v1966, %v2040
        %v2050 = vadd.f32 %v1967, %v2042
        %v2051 = vlaneseq
        %v2052 = vshrl.u32 %v2051, 7
        %v2053 = vsub.s32 4, %v2052
        %v2054 = vrot.slane %v379, %v2053
        %2056 = vrot.lane.b32.xlu0 %v2054, 96
        %v2057 = vpop.permute.xlu0 %2056
        %v2059 = vadd.f32 %v369, %v2057
        %v2060 = vadd.f32 %v374, %v2057
        %v2061 = vadd.f32 %v379, %v2057
        %v2062 = vadd.f32 %v384, %v2057
        %v2063 = vsub.f32 0.0, %v2059
        %v2064 = vsub.f32 0.0, %v2060
        %v2065 = vsub.f32 0.0, %v2061
        %v2066 = vsub.f32 0.0, %v2062
        %v2067 = vmul.f32 %v2063, 1.442695
        %v2068 = vpow.pop %v2067
        %v2069 = vmul.f32 %v2064, 1.442695
        %v2070 = vpow.pop %v2069
        %v2071 = vmul.f32 %v2065, 1.442695
        %v2072 = vpow.pop %v2071
        %v2073 = vmul.f32 %v2066, 1.442695
        %v2074 = vpow.pop %v2073
        %v2075 = vadd.f32 %v2068, 1.0
        %v2076 = vadd.f32 %v2070, 1.0
        %v2077 = vadd.f32 %v2072, 1.0
        %v2078 = vadd.f32 %v2074, 1.0
        %v2079 = vrcp.pop %v2075
        %v2080 = vmul.f32 1.0, %v2079
        %v2081 = vrcp.pop %v2076
        %v2082 = vmul.f32 1.0, %v2081
        %v2083 = vrcp.pop %v2077
        %v2084 = vmul.f32 1.0, %v2083
        %v2085 = vrcp.pop %v2078
        %v2086 = vmul.f32 1.0, %v2085
        %2087 = vrot.lane.b32.xlu0 %v2054, 64
        %v2088 = vpop.permute.xlu0 %2087
        %v2090 = vmul.f32 %v2080, %v2088
        %v2091 = vmul.f32 %v2082, %v2088
        %v2092 = vmul.f32 %v2084, %v2088
        %v2093 = vmul.f32 %v2086, %v2088
        %2094 = vset.pattern.permute.xlu0 20
        %2095 = vperm.xlu0 %2094, %v274
        %v2096 = vpop.permute.xlu0 %2095
        %2098 = vset.pattern.permute.xlu0 20
        %2099 = vperm.xlu0 %2098, %v275
        %v2100 = vpop.permute.xlu0 %2099
        %2102 = vset.pattern.permute.xlu0 20
        %2103 = vperm.xlu0 %2102, %v276
        %v2104 = vpop.permute.xlu0 %2103
        %2106 = vset.pattern.permute.xlu0 20
        %2107 = vperm.xlu0 %2106, %v277
        %v2108 = vpop.permute.xlu0 %2107
        %v2110 = vmul.f32 %v2096, %v2090
        %v2111 = vmul.f32 %v2100, %v2091
        %v2112 = vmul.f32 %v2104, %v2092
        %v2113 = vmul.f32 %v2108, %v2093
        %2118 = vrot.lane.b32.xlu0 %v2110, 96
        %v2119 = vpop.permute.xlu0 %2118
        %2120 = vrot.lane.b32.xlu0 %v2111, 96
        %v2121 = vpop.permute.xlu0 %2120
        %2122 = vrot.lane.b32.xlu0 %v2112, 96
        %v2123 = vpop.permute.xlu0 %2122
        %2124 = vrot.lane.b32.xlu0 %v2113, 96
        %v2125 = vpop.permute.xlu0 %2124
        %v2130 = vadd.f32 %v2047, %v2119
        %v2131 = vadd.f32 %v2048, %v2121
        %v2132 = vadd.f32 %v2049, %v2123
        %v2133 = vadd.f32 %v2050, %v2125
        %v2134 = vlaneseq
        %v2135 = vshrl.u32 %v2134, 7
        %v2136 = vsub.s32 5, %v2135
        %v2137 = vrot.slane %v379, %v2136
        %2139 = vrot.lane.b32.xlu0 %v2137, 96
        %v2140 = vpop.permute.xlu0 %2139
        %v2142 = vadd.f32 %v369, %v2140
        %v2143 = vadd.f32 %v374, %v2140
        %v2144 = vadd.f32 %v379, %v2140
        %v2145 = vadd.f32 %v384, %v2140
        %v2146 = vsub.f32 0.0, %v2142
        %v2147 = vsub.f32 0.0, %v2143
        %v2148 = vsub.f32 0.0, %v2144
        %v2149 = vsub.f32 0.0, %v2145
        %v2150 = vmul.f32 %v2146, 1.442695
        %v2151 = vpow.pop %v2150
        %v2152 = vmul.f32 %v2147, 1.442695
        %v2153 = vpow.pop %v2152
        %v2154 = vmul.f32 %v2148, 1.442695
        %v2155 = vpow.pop %v2154
        %v2156 = vmul.f32 %v2149, 1.442695
        %v2157 = vpow.pop %v2156
        %v2158 = vadd.f32 %v2151, 1.0
        %v2159 = vadd.f32 %v2153, 1.0
        %v2160 = vadd.f32 %v2155, 1.0
        %v2161 = vadd.f32 %v2157, 1.0
        %v2162 = vrcp.pop %v2158
        %v2163 = vmul.f32 1.0, %v2162
        %v2164 = vrcp.pop %v2159
        %v2165 = vmul.f32 1.0, %v2164
        %v2166 = vrcp.pop %v2160
        %v2167 = vmul.f32 1.0, %v2166
        %v2168 = vrcp.pop %v2161
        %v2169 = vmul.f32 1.0, %v2168
        %2170 = vrot.lane.b32.xlu0 %v2137, 64
        %v2171 = vpop.permute.xlu0 %2170
        %v2173 = vmul.f32 %v2163, %v2171
        %v2174 = vmul.f32 %v2165, %v2171
        %v2175 = vmul.f32 %v2167, %v2171
        %v2176 = vmul.f32 %v2169, %v2171
        %2177 = vset.pattern.permute.xlu0 21
        %2178 = vperm.xlu0 %2177, %v274
        %v2179 = vpop.permute.xlu0 %2178
        %2181 = vset.pattern.permute.xlu0 21
        %2182 = vperm.xlu0 %2181, %v275
        %v2183 = vpop.permute.xlu0 %2182
        %2185 = vset.pattern.permute.xlu0 21
        %2186 = vperm.xlu0 %2185, %v276
        %v2187 = vpop.permute.xlu0 %2186
        %2189 = vset.pattern.permute.xlu0 21
        %2190 = vperm.xlu0 %2189, %v277
        %v2191 = vpop.permute.xlu0 %2190
        %v2193 = vmul.f32 %v2179, %v2173
        %v2194 = vmul.f32 %v2183, %v2174
        %v2195 = vmul.f32 %v2187, %v2175
        %v2196 = vmul.f32 %v2191, %v2176
        %2201 = vrot.lane.b32.xlu0 %v2193, 96
        %v2202 = vpop.permute.xlu0 %2201
        %2203 = vrot.lane.b32.xlu0 %v2194, 96
        %v2204 = vpop.permute.xlu0 %2203
        %2205 = vrot.lane.b32.xlu0 %v2195, 96
        %v2206 = vpop.permute.xlu0 %2205
        %2207 = vrot.lane.b32.xlu0 %v2196, 96
        %v2208 = vpop.permute.xlu0 %2207
        %v2213 = vadd.f32 %v2130, %v2202
        %v2214 = vadd.f32 %v2131, %v2204
        %v2215 = vadd.f32 %v2132, %v2206
        %v2216 = vadd.f32 %v2133, %v2208
        %v2217 = vlaneseq
        %v2218 = vshrl.u32 %v2217, 7
        %v2219 = vsub.s32 6, %v2218
        %v2220 = vrot.slane %v379, %v2219
        %2222 = vrot.lane.b32.xlu0 %v2220, 96
        %v2223 = vpop.permute.xlu0 %2222
        %v2225 = vadd.f32 %v369, %v2223
        %v2226 = vadd.f32 %v374, %v2223
        %v2227 = vadd.f32 %v379, %v2223
        %v2228 = vadd.f32 %v384, %v2223
        %v2229 = vsub.f32 0.0, %v2225
        %v2230 = vsub.f32 0.0, %v2226
        %v2231 = vsub.f32 0.0, %v2227
        %v2232 = vsub.f32 0.0, %v2228
        %v2233 = vmul.f32 %v2229, 1.442695
        %v2234 = vpow.pop %v2233
        %v2235 = vmul.f32 %v2230, 1.442695
        %v2236 = vpow.pop %v2235
        %v2237 = vmul.f32 %v2231, 1.442695
        %v2238 = vpow.pop %v2237
        %v2239 = vmul.f32 %v2232, 1.442695
        %v2240 = vpow.pop %v2239
        %v2241 = vadd.f32 %v2234, 1.0
        %v2242 = vadd.f32 %v2236, 1.0
        %v2243 = vadd.f32 %v2238, 1.0
        %v2244 = vadd.f32 %v2240, 1.0
        %v2245 = vrcp.pop %v2241
        %v2246 = vmul.f32 1.0, %v2245
        %v2247 = vrcp.pop %v2242
        %v2248 = vmul.f32 1.0, %v2247
        %v2249 = vrcp.pop %v2243
        %v2250 = vmul.f32 1.0, %v2249
        %v2251 = vrcp.pop %v2244
        %v2252 = vmul.f32 1.0, %v2251
        %2253 = vrot.lane.b32.xlu0 %v2220, 64
        %v2254 = vpop.permute.xlu0 %2253
        %v2256 = vmul.f32 %v2246, %v2254
        %v2257 = vmul.f32 %v2248, %v2254
        %v2258 = vmul.f32 %v2250, %v2254
        %v2259 = vmul.f32 %v2252, %v2254
        %2260 = vset.pattern.permute.xlu0 22
        %2261 = vperm.xlu0 %2260, %v274
        %v2262 = vpop.permute.xlu0 %2261
        %2264 = vset.pattern.permute.xlu0 22
        %2265 = vperm.xlu0 %2264, %v275
        %v2266 = vpop.permute.xlu0 %2265
        %2268 = vset.pattern.permute.xlu0 22
        %2269 = vperm.xlu0 %2268, %v276
        %v2270 = vpop.permute.xlu0 %2269
        %2272 = vset.pattern.permute.xlu0 22
        %2273 = vperm.xlu0 %2272, %v277
        %v2274 = vpop.permute.xlu0 %2273
        %v2276 = vmul.f32 %v2262, %v2256
        %v2277 = vmul.f32 %v2266, %v2257
        %v2278 = vmul.f32 %v2270, %v2258
        %v2279 = vmul.f32 %v2274, %v2259
        %2284 = vrot.lane.b32.xlu0 %v2276, 96
        %v2285 = vpop.permute.xlu0 %2284
        %2286 = vrot.lane.b32.xlu0 %v2277, 96
        %v2287 = vpop.permute.xlu0 %2286
        %2288 = vrot.lane.b32.xlu0 %v2278, 96
        %v2289 = vpop.permute.xlu0 %2288
        %2290 = vrot.lane.b32.xlu0 %v2279, 96
        %v2291 = vpop.permute.xlu0 %2290
        %v2296 = vadd.f32 %v2213, %v2285
        %v2297 = vadd.f32 %v2214, %v2287
        %v2298 = vadd.f32 %v2215, %v2289
        %v2299 = vadd.f32 %v2216, %v2291
        %v2300 = vlaneseq
        %v2301 = vshrl.u32 %v2300, 7
        %v2302 = vsub.s32 7, %v2301
        %v2303 = vrot.slane %v379, %v2302
        %2305 = vrot.lane.b32.xlu0 %v2303, 96
        %v2306 = vpop.permute.xlu0 %2305
        %v2308 = vadd.f32 %v369, %v2306
        %v2309 = vadd.f32 %v374, %v2306
        %v2310 = vadd.f32 %v379, %v2306
        %v2311 = vadd.f32 %v384, %v2306
        %v2312 = vsub.f32 0.0, %v2308
        %v2313 = vsub.f32 0.0, %v2309
        %v2314 = vsub.f32 0.0, %v2310
        %v2315 = vsub.f32 0.0, %v2311
        %v2316 = vmul.f32 %v2312, 1.442695
        %v2317 = vpow.pop %v2316
        %v2318 = vmul.f32 %v2313, 1.442695
        %v2319 = vpow.pop %v2318
        %v2320 = vmul.f32 %v2314, 1.442695
        %v2321 = vpow.pop %v2320
        %v2322 = vmul.f32 %v2315, 1.442695
        %v2323 = vpow.pop %v2322
        %v2324 = vadd.f32 %v2317, 1.0
        %v2325 = vadd.f32 %v2319, 1.0
        %v2326 = vadd.f32 %v2321, 1.0
        %v2327 = vadd.f32 %v2323, 1.0
        %v2328 = vrcp.pop %v2324
        %v2329 = vmul.f32 1.0, %v2328
        %v2330 = vrcp.pop %v2325
        %v2331 = vmul.f32 1.0, %v2330
        %v2332 = vrcp.pop %v2326
        %v2333 = vmul.f32 1.0, %v2332
        %v2334 = vrcp.pop %v2327
        %v2335 = vmul.f32 1.0, %v2334
        %2336 = vrot.lane.b32.xlu0 %v2303, 64
        %v2337 = vpop.permute.xlu0 %2336
        %v2339 = vmul.f32 %v2329, %v2337
        %v2340 = vmul.f32 %v2331, %v2337
        %v2341 = vmul.f32 %v2333, %v2337
        %v2342 = vmul.f32 %v2335, %v2337
        %2343 = vset.pattern.permute.xlu0 23
        %2344 = vperm.xlu0 %2343, %v274
        %v2345 = vpop.permute.xlu0 %2344
        %2347 = vset.pattern.permute.xlu0 23
        %2348 = vperm.xlu0 %2347, %v275
        %v2349 = vpop.permute.xlu0 %2348
        %2351 = vset.pattern.permute.xlu0 23
        %2352 = vperm.xlu0 %2351, %v276
        %v2353 = vpop.permute.xlu0 %2352
        %2355 = vset.pattern.permute.xlu0 23
        %2356 = vperm.xlu0 %2355, %v277
        %v2357 = vpop.permute.xlu0 %2356
        %v2359 = vmul.f32 %v2345, %v2339
        %v2360 = vmul.f32 %v2349, %v2340
        %v2361 = vmul.f32 %v2353, %v2341
        %v2362 = vmul.f32 %v2357, %v2342
        %2367 = vrot.lane.b32.xlu0 %v2359, 96
        %v2368 = vpop.permute.xlu0 %2367
        %2369 = vrot.lane.b32.xlu0 %v2360, 96
        %v2370 = vpop.permute.xlu0 %2369
        %2371 = vrot.lane.b32.xlu0 %v2361, 96
        %v2372 = vpop.permute.xlu0 %2371
        %2373 = vrot.lane.b32.xlu0 %v2362, 96
        %v2374 = vpop.permute.xlu0 %2373
        %v2379 = vadd.f32 %v2296, %v2368
        %v2380 = vadd.f32 %v2297, %v2370
        %v2381 = vadd.f32 %v2298, %v2372
        %v2382 = vadd.f32 %v2299, %v2374
        %v2383 = vlaneseq
        %v2384 = vshrl.u32 %v2383, 7
        %v2385 = vsub.s32 0, %v2384
        %v2386 = vrot.slane %v384, %v2385
        %2388 = vrot.lane.b32.xlu0 %v2386, 96
        %v2389 = vpop.permute.xlu0 %2388
        %v2391 = vadd.f32 %v369, %v2389
        %v2392 = vadd.f32 %v374, %v2389
        %v2393 = vadd.f32 %v379, %v2389
        %v2394 = vadd.f32 %v384, %v2389
        %v2395 = vsub.f32 0.0, %v2391
        %v2396 = vsub.f32 0.0, %v2392
        %v2397 = vsub.f32 0.0, %v2393
        %v2398 = vsub.f32 0.0, %v2394
        %v2399 = vmul.f32 %v2395, 1.442695
        %v2400 = vpow.pop %v2399
        %v2401 = vmul.f32 %v2396, 1.442695
        %v2402 = vpow.pop %v2401
        %v2403 = vmul.f32 %v2397, 1.442695
        %v2404 = vpow.pop %v2403
        %v2405 = vmul.f32 %v2398, 1.442695
        %v2406 = vpow.pop %v2405
        %v2407 = vadd.f32 %v2400, 1.0
        %v2408 = vadd.f32 %v2402, 1.0
        %v2409 = vadd.f32 %v2404, 1.0
        %v2410 = vadd.f32 %v2406, 1.0
        %v2411 = vrcp.pop %v2407
        %v2412 = vmul.f32 1.0, %v2411
        %v2413 = vrcp.pop %v2408
        %v2414 = vmul.f32 1.0, %v2413
        %v2415 = vrcp.pop %v2409
        %v2416 = vmul.f32 1.0, %v2415
        %v2417 = vrcp.pop %v2410
        %v2418 = vmul.f32 1.0, %v2417
        %2419 = vrot.lane.b32.xlu0 %v2386, 64
        %v2420 = vpop.permute.xlu0 %2419
        %v2422 = vmul.f32 %v2412, %v2420
        %v2423 = vmul.f32 %v2414, %v2420
        %v2424 = vmul.f32 %v2416, %v2420
        %v2425 = vmul.f32 %v2418, %v2420
        %2426 = vset.pattern.permute.xlu0 24
        %2427 = vperm.xlu0 %2426, %v274
        %v2428 = vpop.permute.xlu0 %2427
        %2430 = vset.pattern.permute.xlu0 24
        %2431 = vperm.xlu0 %2430, %v275
        %v2432 = vpop.permute.xlu0 %2431
        %2434 = vset.pattern.permute.xlu0 24
        %2435 = vperm.xlu0 %2434, %v276
        %v2436 = vpop.permute.xlu0 %2435
        %2438 = vset.pattern.permute.xlu0 24
        %2439 = vperm.xlu0 %2438, %v277
        %v2440 = vpop.permute.xlu0 %2439
        %v2442 = vmul.f32 %v2428, %v2422
        %v2443 = vmul.f32 %v2432, %v2423
        %v2444 = vmul.f32 %v2436, %v2424
        %v2445 = vmul.f32 %v2440, %v2425
        %2450 = vrot.lane.b32.xlu0 %v2442, 96
        %v2451 = vpop.permute.xlu0 %2450
        %2452 = vrot.lane.b32.xlu0 %v2443, 96
        %v2453 = vpop.permute.xlu0 %2452
        %2454 = vrot.lane.b32.xlu0 %v2444, 96
        %v2455 = vpop.permute.xlu0 %2454
        %2456 = vrot.lane.b32.xlu0 %v2445, 96
        %v2457 = vpop.permute.xlu0 %2456
        %v2462 = vadd.f32 %v2379, %v2451
        %v2463 = vadd.f32 %v2380, %v2453
        %v2464 = vadd.f32 %v2381, %v2455
        %v2465 = vadd.f32 %v2382, %v2457
        %v2466 = vlaneseq
        %v2467 = vshrl.u32 %v2466, 7
        %v2468 = vsub.s32 1, %v2467
        %v2469 = vrot.slane %v384, %v2468
        %2471 = vrot.lane.b32.xlu0 %v2469, 96
        %v2472 = vpop.permute.xlu0 %2471
        %v2474 = vadd.f32 %v369, %v2472
        %v2475 = vadd.f32 %v374, %v2472
        %v2476 = vadd.f32 %v379, %v2472
        %v2477 = vadd.f32 %v384, %v2472
        %v2478 = vsub.f32 0.0, %v2474
        %v2479 = vsub.f32 0.0, %v2475
        %v2480 = vsub.f32 0.0, %v2476
        %v2481 = vsub.f32 0.0, %v2477
        %v2482 = vmul.f32 %v2478, 1.442695
        %v2483 = vpow.pop %v2482
        %v2484 = vmul.f32 %v2479, 1.442695
        %v2485 = vpow.pop %v2484
        %v2486 = vmul.f32 %v2480, 1.442695
        %v2487 = vpow.pop %v2486
        %v2488 = vmul.f32 %v2481, 1.442695
        %v2489 = vpow.pop %v2488
        %v2490 = vadd.f32 %v2483, 1.0
        %v2491 = vadd.f32 %v2485, 1.0
        %v2492 = vadd.f32 %v2487, 1.0
        %v2493 = vadd.f32 %v2489, 1.0
        %v2494 = vrcp.pop %v2490
        %v2495 = vmul.f32 1.0, %v2494
        %v2496 = vrcp.pop %v2491
        %v2497 = vmul.f32 1.0, %v2496
        %v2498 = vrcp.pop %v2492
        %v2499 = vmul.f32 1.0, %v2498
        %v2500 = vrcp.pop %v2493
        %v2501 = vmul.f32 1.0, %v2500
        %2502 = vrot.lane.b32.xlu0 %v2469, 64
        %v2503 = vpop.permute.xlu0 %2502
        %v2505 = vmul.f32 %v2495, %v2503
        %v2506 = vmul.f32 %v2497, %v2503
        %v2507 = vmul.f32 %v2499, %v2503
        %v2508 = vmul.f32 %v2501, %v2503
        %2509 = vset.pattern.permute.xlu0 25
        %2510 = vperm.xlu0 %2509, %v274
        %v2511 = vpop.permute.xlu0 %2510
        %2513 = vset.pattern.permute.xlu0 25
        %2514 = vperm.xlu0 %2513, %v275
        %v2515 = vpop.permute.xlu0 %2514
        %2517 = vset.pattern.permute.xlu0 25
        %2518 = vperm.xlu0 %2517, %v276
        %v2519 = vpop.permute.xlu0 %2518
        %2521 = vset.pattern.permute.xlu0 25
        %2522 = vperm.xlu0 %2521, %v277
        %v2523 = vpop.permute.xlu0 %2522
        %v2525 = vmul.f32 %v2511, %v2505
        %v2526 = vmul.f32 %v2515, %v2506
        %v2527 = vmul.f32 %v2519, %v2507
        %v2528 = vmul.f32 %v2523, %v2508
        %2533 = vrot.lane.b32.xlu0 %v2525, 96
        %v2534 = vpop.permute.xlu0 %2533
        %2535 = vrot.lane.b32.xlu0 %v2526, 96
        %v2536 = vpop.permute.xlu0 %2535
        %2537 = vrot.lane.b32.xlu0 %v2527, 96
        %v2538 = vpop.permute.xlu0 %2537
        %2539 = vrot.lane.b32.xlu0 %v2528, 96
        %v2540 = vpop.permute.xlu0 %2539
        %v2545 = vadd.f32 %v2462, %v2534
        %v2546 = vadd.f32 %v2463, %v2536
        %v2547 = vadd.f32 %v2464, %v2538
        %v2548 = vadd.f32 %v2465, %v2540
        %v2549 = vlaneseq
        %v2550 = vshrl.u32 %v2549, 7
        %v2551 = vsub.s32 2, %v2550
        %v2552 = vrot.slane %v384, %v2551
        %2554 = vrot.lane.b32.xlu0 %v2552, 96
        %v2555 = vpop.permute.xlu0 %2554
        %v2557 = vadd.f32 %v369, %v2555
        %v2558 = vadd.f32 %v374, %v2555
        %v2559 = vadd.f32 %v379, %v2555
        %v2560 = vadd.f32 %v384, %v2555
        %v2561 = vsub.f32 0.0, %v2557
        %v2562 = vsub.f32 0.0, %v2558
        %v2563 = vsub.f32 0.0, %v2559
        %v2564 = vsub.f32 0.0, %v2560
        %v2565 = vmul.f32 %v2561, 1.442695
        %v2566 = vpow.pop %v2565
        %v2567 = vmul.f32 %v2562, 1.442695
        %v2568 = vpow.pop %v2567
        %v2569 = vmul.f32 %v2563, 1.442695
        %v2570 = vpow.pop %v2569
        %v2571 = vmul.f32 %v2564, 1.442695
        %v2572 = vpow.pop %v2571
        %v2573 = vadd.f32 %v2566, 1.0
        %v2574 = vadd.f32 %v2568, 1.0
        %v2575 = vadd.f32 %v2570, 1.0
        %v2576 = vadd.f32 %v2572, 1.0
        %v2577 = vrcp.pop %v2573
        %v2578 = vmul.f32 1.0, %v2577
        %v2579 = vrcp.pop %v2574
        %v2580 = vmul.f32 1.0, %v2579
        %v2581 = vrcp.pop %v2575
        %v2582 = vmul.f32 1.0, %v2581
        %v2583 = vrcp.pop %v2576
        %v2584 = vmul.f32 1.0, %v2583
        %2585 = vrot.lane.b32.xlu0 %v2552, 64
        %v2586 = vpop.permute.xlu0 %2585
        %v2588 = vmul.f32 %v2578, %v2586
        %v2589 = vmul.f32 %v2580, %v2586
        %v2590 = vmul.f32 %v2582, %v2586
        %v2591 = vmul.f32 %v2584, %v2586
        %2592 = vset.pattern.permute.xlu0 26
        %2593 = vperm.xlu0 %2592, %v274
        %v2594 = vpop.permute.xlu0 %2593
        %2596 = vset.pattern.permute.xlu0 26
        %2597 = vperm.xlu0 %2596, %v275
        %v2598 = vpop.permute.xlu0 %2597
        %2600 = vset.pattern.permute.xlu0 26
        %2601 = vperm.xlu0 %2600, %v276
        %v2602 = vpop.permute.xlu0 %2601
        %2604 = vset.pattern.permute.xlu0 26
        %2605 = vperm.xlu0 %2604, %v277
        %v2606 = vpop.permute.xlu0 %2605
        %v2608 = vmul.f32 %v2594, %v2588
        %v2609 = vmul.f32 %v2598, %v2589
        %v2610 = vmul.f32 %v2602, %v2590
        %v2611 = vmul.f32 %v2606, %v2591
        %2616 = vrot.lane.b32.xlu0 %v2608, 96
        %v2617 = vpop.permute.xlu0 %2616
        %2618 = vrot.lane.b32.xlu0 %v2609, 96
        %v2619 = vpop.permute.xlu0 %2618
        %2620 = vrot.lane.b32.xlu0 %v2610, 96
        %v2621 = vpop.permute.xlu0 %2620
        %2622 = vrot.lane.b32.xlu0 %v2611, 96
        %v2623 = vpop.permute.xlu0 %2622
        %v2628 = vadd.f32 %v2545, %v2617
        %v2629 = vadd.f32 %v2546, %v2619
        %v2630 = vadd.f32 %v2547, %v2621
        %v2631 = vadd.f32 %v2548, %v2623
        %v2632 = vlaneseq
        %v2633 = vshrl.u32 %v2632, 7
        %v2634 = vsub.s32 3, %v2633
        %v2635 = vrot.slane %v384, %v2634
        %2637 = vrot.lane.b32.xlu0 %v2635, 96
        %v2638 = vpop.permute.xlu0 %2637
        %v2640 = vadd.f32 %v369, %v2638
        %v2641 = vadd.f32 %v374, %v2638
        %v2642 = vadd.f32 %v379, %v2638
        %v2643 = vadd.f32 %v384, %v2638
        %v2644 = vsub.f32 0.0, %v2640
        %v2645 = vsub.f32 0.0, %v2641
        %v2646 = vsub.f32 0.0, %v2642
        %v2647 = vsub.f32 0.0, %v2643
        %v2648 = vmul.f32 %v2644, 1.442695
        %v2649 = vpow.pop %v2648
        %v2650 = vmul.f32 %v2645, 1.442695
        %v2651 = vpow.pop %v2650
        %v2652 = vmul.f32 %v2646, 1.442695
        %v2653 = vpow.pop %v2652
        %v2654 = vmul.f32 %v2647, 1.442695
        %v2655 = vpow.pop %v2654
        %v2656 = vadd.f32 %v2649, 1.0
        %v2657 = vadd.f32 %v2651, 1.0
        %v2658 = vadd.f32 %v2653, 1.0
        %v2659 = vadd.f32 %v2655, 1.0
        %v2660 = vrcp.pop %v2656
        %v2661 = vmul.f32 1.0, %v2660
        %v2662 = vrcp.pop %v2657
        %v2663 = vmul.f32 1.0, %v2662
        %v2664 = vrcp.pop %v2658
        %v2665 = vmul.f32 1.0, %v2664
        %v2666 = vrcp.pop %v2659
        %v2667 = vmul.f32 1.0, %v2666
        %2668 = vrot.lane.b32.xlu0 %v2635, 64
        %v2669 = vpop.permute.xlu0 %2668
        %v2671 = vmul.f32 %v2661, %v2669
        %v2672 = vmul.f32 %v2663, %v2669
        %v2673 = vmul.f32 %v2665, %v2669
        %v2674 = vmul.f32 %v2667, %v2669
        %2675 = vset.pattern.permute.xlu0 27
        %2676 = vperm.xlu0 %2675, %v274
        %v2677 = vpop.permute.xlu0 %2676
        %2679 = vset.pattern.permute.xlu0 27
        %2680 = vperm.xlu0 %2679, %v275
        %v2681 = vpop.permute.xlu0 %2680
        %2683 = vset.pattern.permute.xlu0 27
        %2684 = vperm.xlu0 %2683, %v276
        %v2685 = vpop.permute.xlu0 %2684
        %2687 = vset.pattern.permute.xlu0 27
        %2688 = vperm.xlu0 %2687, %v277
        %v2689 = vpop.permute.xlu0 %2688
        %v2691 = vmul.f32 %v2677, %v2671
        %v2692 = vmul.f32 %v2681, %v2672
        %v2693 = vmul.f32 %v2685, %v2673
        %v2694 = vmul.f32 %v2689, %v2674
        %2699 = vrot.lane.b32.xlu0 %v2691, 96
        %v2700 = vpop.permute.xlu0 %2699
        %2701 = vrot.lane.b32.xlu0 %v2692, 96
        %v2702 = vpop.permute.xlu0 %2701
        %2703 = vrot.lane.b32.xlu0 %v2693, 96
        %v2704 = vpop.permute.xlu0 %2703
        %2705 = vrot.lane.b32.xlu0 %v2694, 96
        %v2706 = vpop.permute.xlu0 %2705
        %v2711 = vadd.f32 %v2628, %v2700
        %v2712 = vadd.f32 %v2629, %v2702
        %v2713 = vadd.f32 %v2630, %v2704
        %v2714 = vadd.f32 %v2631, %v2706
        %v2715 = vlaneseq
        %v2716 = vshrl.u32 %v2715, 7
        %v2717 = vsub.s32 4, %v2716
        %v2718 = vrot.slane %v384, %v2717
        %2720 = vrot.lane.b32.xlu0 %v2718, 96
        %v2721 = vpop.permute.xlu0 %2720
        %v2723 = vadd.f32 %v369, %v2721
        %v2724 = vadd.f32 %v374, %v2721
        %v2725 = vadd.f32 %v379, %v2721
        %v2726 = vadd.f32 %v384, %v2721
        %v2727 = vsub.f32 0.0, %v2723
        %v2728 = vsub.f32 0.0, %v2724
        %v2729 = vsub.f32 0.0, %v2725
        %v2730 = vsub.f32 0.0, %v2726
        %v2731 = vmul.f32 %v2727, 1.442695
        %v2732 = vpow.pop %v2731
        %v2733 = vmul.f32 %v2728, 1.442695
        %v2734 = vpow.pop %v2733
        %v2735 = vmul.f32 %v2729, 1.442695
        %v2736 = vpow.pop %v2735
        %v2737 = vmul.f32 %v2730, 1.442695
        %v2738 = vpow.pop %v2737
        %v2739 = vadd.f32 %v2732, 1.0
        %v2740 = vadd.f32 %v2734, 1.0
        %v2741 = vadd.f32 %v2736, 1.0
        %v2742 = vadd.f32 %v2738, 1.0
        %v2743 = vrcp.pop %v2739
        %v2744 = vmul.f32 1.0, %v2743
        %v2745 = vrcp.pop %v2740
        %v2746 = vmul.f32 1.0, %v2745
        %v2747 = vrcp.pop %v2741
        %v2748 = vmul.f32 1.0, %v2747
        %v2749 = vrcp.pop %v2742
        %v2750 = vmul.f32 1.0, %v2749
        %2751 = vrot.lane.b32.xlu0 %v2718, 64
        %v2752 = vpop.permute.xlu0 %2751
        %v2754 = vmul.f32 %v2744, %v2752
        %v2755 = vmul.f32 %v2746, %v2752
        %v2756 = vmul.f32 %v2748, %v2752
        %v2757 = vmul.f32 %v2750, %v2752
        %2758 = vset.pattern.permute.xlu0 28
        %2759 = vperm.xlu0 %2758, %v274
        %v2760 = vpop.permute.xlu0 %2759
        %2762 = vset.pattern.permute.xlu0 28
        %2763 = vperm.xlu0 %2762, %v275
        %v2764 = vpop.permute.xlu0 %2763
        %2766 = vset.pattern.permute.xlu0 28
        %2767 = vperm.xlu0 %2766, %v276
        %v2768 = vpop.permute.xlu0 %2767
        %2770 = vset.pattern.permute.xlu0 28
        %2771 = vperm.xlu0 %2770, %v277
        %v2772 = vpop.permute.xlu0 %2771
        %v2774 = vmul.f32 %v2760, %v2754
        %v2775 = vmul.f32 %v2764, %v2755
        %v2776 = vmul.f32 %v2768, %v2756
        %v2777 = vmul.f32 %v2772, %v2757
        %2782 = vrot.lane.b32.xlu0 %v2774, 96
        %v2783 = vpop.permute.xlu0 %2782
        %2784 = vrot.lane.b32.xlu0 %v2775, 96
        %v2785 = vpop.permute.xlu0 %2784
        %2786 = vrot.lane.b32.xlu0 %v2776, 96
        %v2787 = vpop.permute.xlu0 %2786
        %2788 = vrot.lane.b32.xlu0 %v2777, 96
        %v2789 = vpop.permute.xlu0 %2788
        %v2794 = vadd.f32 %v2711, %v2783
        %v2795 = vadd.f32 %v2712, %v2785
        %v2796 = vadd.f32 %v2713, %v2787
        %v2797 = vadd.f32 %v2714, %v2789
        %v2798 = vlaneseq
        %v2799 = vshrl.u32 %v2798, 7
        %v2800 = vsub.s32 5, %v2799
        %v2801 = vrot.slane %v384, %v2800
        %2803 = vrot.lane.b32.xlu0 %v2801, 96
        %v2804 = vpop.permute.xlu0 %2803
        %v2806 = vadd.f32 %v369, %v2804
        %v2807 = vadd.f32 %v374, %v2804
        %v2808 = vadd.f32 %v379, %v2804
        %v2809 = vadd.f32 %v384, %v2804
        %v2810 = vsub.f32 0.0, %v2806
        %v2811 = vsub.f32 0.0, %v2807
        %v2812 = vsub.f32 0.0, %v2808
        %v2813 = vsub.f32 0.0, %v2809
        %v2814 = vmul.f32 %v2810, 1.442695
        %v2815 = vpow.pop %v2814
        %v2816 = vmul.f32 %v2811, 1.442695
        %v2817 = vpow.pop %v2816
        %v2818 = vmul.f32 %v2812, 1.442695
        %v2819 = vpow.pop %v2818
        %v2820 = vmul.f32 %v2813, 1.442695
        %v2821 = vpow.pop %v2820
        %v2822 = vadd.f32 %v2815, 1.0
        %v2823 = vadd.f32 %v2817, 1.0
        %v2824 = vadd.f32 %v2819, 1.0
        %v2825 = vadd.f32 %v2821, 1.0
        %v2826 = vrcp.pop %v2822
        %v2827 = vmul.f32 1.0, %v2826
        %v2828 = vrcp.pop %v2823
        %v2829 = vmul.f32 1.0, %v2828
        %v2830 = vrcp.pop %v2824
        %v2831 = vmul.f32 1.0, %v2830
        %v2832 = vrcp.pop %v2825
        %v2833 = vmul.f32 1.0, %v2832
        %2834 = vrot.lane.b32.xlu0 %v2801, 64
        %v2835 = vpop.permute.xlu0 %2834
        %v2837 = vmul.f32 %v2827, %v2835
        %v2838 = vmul.f32 %v2829, %v2835
        %v2839 = vmul.f32 %v2831, %v2835
        %v2840 = vmul.f32 %v2833, %v2835
        %2841 = vset.pattern.permute.xlu0 29
        %2842 = vperm.xlu0 %2841, %v274
        %v2843 = vpop.permute.xlu0 %2842
        %2845 = vset.pattern.permute.xlu0 29
        %2846 = vperm.xlu0 %2845, %v275
        %v2847 = vpop.permute.xlu0 %2846
        %2849 = vset.pattern.permute.xlu0 29
        %2850 = vperm.xlu0 %2849, %v276
        %v2851 = vpop.permute.xlu0 %2850
        %2853 = vset.pattern.permute.xlu0 29
        %2854 = vperm.xlu0 %2853, %v277
        %v2855 = vpop.permute.xlu0 %2854
        %v2857 = vmul.f32 %v2843, %v2837
        %v2858 = vmul.f32 %v2847, %v2838
        %v2859 = vmul.f32 %v2851, %v2839
        %v2860 = vmul.f32 %v2855, %v2840
        %2865 = vrot.lane.b32.xlu0 %v2857, 96
        %v2866 = vpop.permute.xlu0 %2865
        %2867 = vrot.lane.b32.xlu0 %v2858, 96
        %v2868 = vpop.permute.xlu0 %2867
        %2869 = vrot.lane.b32.xlu0 %v2859, 96
        %v2870 = vpop.permute.xlu0 %2869
        %2871 = vrot.lane.b32.xlu0 %v2860, 96
        %v2872 = vpop.permute.xlu0 %2871
        %v2877 = vadd.f32 %v2794, %v2866
        %v2878 = vadd.f32 %v2795, %v2868
        %v2879 = vadd.f32 %v2796, %v2870
        %v2880 = vadd.f32 %v2797, %v2872
        %v2881 = vlaneseq
        %v2882 = vshrl.u32 %v2881, 7
        %v2883 = vsub.s32 6, %v2882
        %v2884 = vrot.slane %v384, %v2883
        %2886 = vrot.lane.b32.xlu0 %v2884, 96
        %v2887 = vpop.permute.xlu0 %2886
        %v2889 = vadd.f32 %v369, %v2887
        %v2890 = vadd.f32 %v374, %v2887
        %v2891 = vadd.f32 %v379, %v2887
        %v2892 = vadd.f32 %v384, %v2887
        %v2893 = vsub.f32 0.0, %v2889
        %v2894 = vsub.f32 0.0, %v2890
        %v2895 = vsub.f32 0.0, %v2891
        %v2896 = vsub.f32 0.0, %v2892
        %v2897 = vmul.f32 %v2893, 1.442695
        %v2898 = vpow.pop %v2897
        %v2899 = vmul.f32 %v2894, 1.442695
        %v2900 = vpow.pop %v2899
        %v2901 = vmul.f32 %v2895, 1.442695
        %v2902 = vpow.pop %v2901
        %v2903 = vmul.f32 %v2896, 1.442695
        %v2904 = vpow.pop %v2903
        %v2905 = vadd.f32 %v2898, 1.0
        %v2906 = vadd.f32 %v2900, 1.0
        %v2907 = vadd.f32 %v2902, 1.0
        %v2908 = vadd.f32 %v2904, 1.0
        %v2909 = vrcp.pop %v2905
        %v2910 = vmul.f32 1.0, %v2909
        %v2911 = vrcp.pop %v2906
        %v2912 = vmul.f32 1.0, %v2911
        %v2913 = vrcp.pop %v2907
        %v2914 = vmul.f32 1.0, %v2913
        %v2915 = vrcp.pop %v2908
        %v2916 = vmul.f32 1.0, %v2915
        %2917 = vrot.lane.b32.xlu0 %v2884, 64
        %v2918 = vpop.permute.xlu0 %2917
        %v2920 = vmul.f32 %v2910, %v2918
        %v2921 = vmul.f32 %v2912, %v2918
        %v2922 = vmul.f32 %v2914, %v2918
        %v2923 = vmul.f32 %v2916, %v2918
        %2924 = vset.pattern.permute.xlu0 30
        %2925 = vperm.xlu0 %2924, %v274
        %v2926 = vpop.permute.xlu0 %2925
        %2928 = vset.pattern.permute.xlu0 30
        %2929 = vperm.xlu0 %2928, %v275
        %v2930 = vpop.permute.xlu0 %2929
        %2932 = vset.pattern.permute.xlu0 30
        %2933 = vperm.xlu0 %2932, %v276
        %v2934 = vpop.permute.xlu0 %2933
        %2936 = vset.pattern.permute.xlu0 30
        %2937 = vperm.xlu0 %2936, %v277
        %v2938 = vpop.permute.xlu0 %2937
        %v2940 = vmul.f32 %v2926, %v2920
        %v2941 = vmul.f32 %v2930, %v2921
        %v2942 = vmul.f32 %v2934, %v2922
        %v2943 = vmul.f32 %v2938, %v2923
        %2948 = vrot.lane.b32.xlu0 %v2940, 96
        %v2949 = vpop.permute.xlu0 %2948
        %2950 = vrot.lane.b32.xlu0 %v2941, 96
        %v2951 = vpop.permute.xlu0 %2950
        %2952 = vrot.lane.b32.xlu0 %v2942, 96
        %v2953 = vpop.permute.xlu0 %2952
        %2954 = vrot.lane.b32.xlu0 %v2943, 96
        %v2955 = vpop.permute.xlu0 %2954
        %v2960 = vadd.f32 %v2877, %v2949
        %v2961 = vadd.f32 %v2878, %v2951
        %v2962 = vadd.f32 %v2879, %v2953
        %v2963 = vadd.f32 %v2880, %v2955
        %v2964 = vlaneseq
        %v2965 = vshrl.u32 %v2964, 7
        %v2966 = vsub.s32 7, %v2965
        %v2967 = vrot.slane %v384, %v2966
        %2969 = vrot.lane.b32.xlu0 %v2967, 96
        %v2970 = vpop.permute.xlu0 %2969
        %v2972 = vadd.f32 %v369, %v2970
        %v2973 = vadd.f32 %v374, %v2970
        %v2974 = vadd.f32 %v379, %v2970
        %v2975 = vadd.f32 %v384, %v2970
        %v2976 = vsub.f32 0.0, %v2972
        %v2977 = vsub.f32 0.0, %v2973
        %v2978 = vsub.f32 0.0, %v2974
        %v2979 = vsub.f32 0.0, %v2975
        %v2980 = vmul.f32 %v2976, 1.442695
        %v2981 = vpow.pop %v2980
        %v2982 = vmul.f32 %v2977, 1.442695
        %v2983 = vpow.pop %v2982
        %v2984 = vmul.f32 %v2978, 1.442695
        %v2985 = vpow.pop %v2984
        %v2986 = vmul.f32 %v2979, 1.442695
        %v2987 = vpow.pop %v2986
        %v2988 = vadd.f32 %v2981, 1.0
        %v2989 = vadd.f32 %v2983, 1.0
        %v2990 = vadd.f32 %v2985, 1.0
        %v2991 = vadd.f32 %v2987, 1.0
        %v2992 = vrcp.pop %v2988
        %v2993 = vmul.f32 1.0, %v2992
        %v2994 = vrcp.pop %v2989
        %v2995 = vmul.f32 1.0, %v2994
        %v2996 = vrcp.pop %v2990
        %v2997 = vmul.f32 1.0, %v2996
        %v2998 = vrcp.pop %v2991
        %v2999 = vmul.f32 1.0, %v2998
        %3000 = vrot.lane.b32.xlu0 %v2967, 64
        %v3001 = vpop.permute.xlu0 %3000
        %v3003 = vmul.f32 %v2993, %v3001
        %v3004 = vmul.f32 %v2995, %v3001
        %v3005 = vmul.f32 %v2997, %v3001
        %v3006 = vmul.f32 %v2999, %v3001
        %3007 = vset.pattern.permute.xlu0 31
        %3008 = vperm.xlu0 %3007, %v274
        %v3009 = vpop.permute.xlu0 %3008
        %3011 = vset.pattern.permute.xlu0 31
        %3012 = vperm.xlu0 %3011, %v275
        %v3013 = vpop.permute.xlu0 %3012
        %3015 = vset.pattern.permute.xlu0 31
        %3016 = vperm.xlu0 %3015, %v276
        %v3017 = vpop.permute.xlu0 %3016
        %3019 = vset.pattern.permute.xlu0 31
        %3020 = vperm.xlu0 %3019, %v277
        %v3021 = vpop.permute.xlu0 %3020
        %v3023 = vmul.f32 %v3009, %v3003
        %v3024 = vmul.f32 %v3013, %v3004
        %v3025 = vmul.f32 %v3017, %v3005
        %v3026 = vmul.f32 %v3021, %v3006
        %3031 = vrot.lane.b32.xlu0 %v3023, 96
        %v3032 = vpop.permute.xlu0 %3031
        %3033 = vrot.lane.b32.xlu0 %v3024, 96
        %v3034 = vpop.permute.xlu0 %3033
        %3035 = vrot.lane.b32.xlu0 %v3025, 96
        %v3036 = vpop.permute.xlu0 %3035
        %3037 = vrot.lane.b32.xlu0 %v3026, 96
        %v3038 = vpop.permute.xlu0 %3037
        %v3043 = vadd.f32 %v2960, %v3032
        %v3044 = vadd.f32 %v2961, %v3034
        %v3045 = vadd.f32 %v2962, %v3036
        %v3046 = vadd.f32 %v2963, %v3038
        %v3047 = vmax.f32 %v3043, 0.0
        %v3048 = vmax.f32 %v3044, 0.0
        %v3049 = vmax.f32 %v3045, 0.0
        %v3050 = vmax.f32 %v3046, 0.0
        %3051 = vrot.lane.b32.xlu0 %v270, 96
        %v3052 = vpop.permute.xlu0 %3051
        %3053 = vrot.lane.b32.xlu0 %v271, 96
        %v3054 = vpop.permute.xlu0 %3053
        %3055 = vrot.lane.b32.xlu0 %v272, 96
        %v3056 = vpop.permute.xlu0 %3055
        %3057 = vrot.lane.b32.xlu0 %v273, 96
        %v3058 = vpop.permute.xlu0 %3057
        %v3063 = vadd.f32 %v3047, %v3052
        %v3064 = vadd.f32 %v3048, %v3054
        %v3065 = vadd.f32 %v3049, %v3056
        %v3066 = vadd.f32 %v3050, %v3058
        %3071 = vrot.lane.b32.xlu0 %v3063, 32
        %v3072 = vpop.permute.xlu0 %3071
        %3073 = vrot.lane.b32.xlu0 %v3064, 32
        %v3074 = vpop.permute.xlu0 %3073
        %3075 = vrot.lane.b32.xlu0 %v3065, 32
        %v3076 = vpop.permute.xlu0 %3075
        %3077 = vrot.lane.b32.xlu0 %v3066, 32
        %v3078 = vpop.permute.xlu0 %3077
        %3083 = vst.msk [vmem:[%s269] sm:$0xff] %vm289, %v3072
        %3084 = vst.msk [vmem:[%s269 + $0x8] sm:$0xff] %vm289, %v3074
        %3085 = vst.msk [vmem:[%s269 + $0x10] sm:$0xff] %vm289, %v3076
        %3086 = vst.msk [vmem:[%s269 + $0x18] sm:$0xff] %vm289, %v3078
        %s3087 = sand.u32 %s126, 1
        %s3088 = scalar_lea.sflag [#allocation4], %s3087
        %s3089 = sand.u32 %s126, 1
        %s3090 = smul.addr %s3089, 32
        %s3091 = scalar_lea.vmem [#allocation8], %s3090
        // Predicated region
        $region49: #{tpu_custom_call.1} parent=35 // pred_check
          %p3092 = pneg %p136
        $region50: #{tpu_custom_call.1} parent=35 // pred_check_branch
          %3094 = sbr.rel (%p3092) target = $region52
        $region51: #{tpu_custom_call.1} parent=35 // pred_region
          %s3096 = ssub.s32 512, 512
          %3097 = vsyncadd %s3088, %s3096
          %s3098 = smul.addr %s24, 4
          %s3099 = smul.addr %s3098, 128
          %s3100 = scalar_lea.hbm %s4, %s3099
          %s3101 = sshll.u32 %s3091, 4
          %s3102 = int_to_ptr.vmem [resolvable:$true] %s3101
          %3107 = dma.vmem_to_hbm [thread:$0]  %s3102, 512, %s3100, %s3088, 128, 128, 8
        $region52: #{tpu_custom_call.1} parent=35 // pred_fallthru
          _
      $region36: #{tpu_custom_call.1} parent=5 // pred_fallthru
        _
      %p3108 = scmp.le.s32.totalorder 2, %s19
      // Predicated region
      $region53: #{tpu_custom_call.1} parent=5 // pred_check
        %p3109 = pneg %p3108
      $region54: #{tpu_custom_call.1} parent=5 // pred_check_branch
        %3111 = sbr.rel (%p3109) target = $region56
      $region55: #{tpu_custom_call.1} parent=5 // pred_region
        %s3112 = ssub.s32 %s19, 2
        // Predicated region
        $region57: #{tpu_custom_call.1} parent=55 // pred_check
          %p3113 = pneg %p142
        $region58: #{tpu_custom_call.1} parent=55 // pred_check_branch
          %3115 = sbr.rel (%p3113) target = $region60
        $region59: #{tpu_custom_call.1} parent=55 // pred_region
          %s3116 = sand.u32 %s127, 1
          %s3117 = scalar_lea.sflag [#allocation4], %s3116
          %s3118 = sand.u32 %s127, 1
          %s3119 = smul.addr %s3118, 32
          %s3120 = scalar_lea.vmem [#allocation8], %s3119
          %3121 = dma.done %s3117, 512
        $region60: #{tpu_custom_call.1} parent=55 // pred_fallthru
          _
      $region56: #{tpu_custom_call.1} parent=5 // pred_fallthru
        _
    $region6: #{tpu_custom_call.1} parent=1 // loop_footer
      %s23 = sadd.s32 1, %s19
    $region7: #{tpu_custom_call.1} parent=1 // loop_footer_branch
      %18 = sbr.rel target = $region3
    $region8: #{tpu_custom_call.1} parent=1 // loop_exit
      _
    %3122 = vsyncpa [#allocation3], 1
    %s3123 = scalar_lea.sflag [#allocation3], 1
    %3124 = vsyncpa %s3123, 1
    %3125 = vsyncpa [#allocation6], 1
    %s3126 = scalar_lea.sflag [#allocation6], 1
    %3127 = vsyncpa %s3126, 1
    %3128 = vsyncpa [#allocation4], 1
    %s3129 = scalar_lea.sflag [#allocation4], 1
    %3130 = vsyncpa %s3129, 1

</llo_original>
